<compile_context>
chip_gen: v7x
topology: tpu7x:2x2x1
jax: 0.10.0
libtpu: 0.0.40
codegen_flags: <defaults>
</compile_context>

<pallas_src>
import functools

import jax
import jax.numpy as jnp
from jax.experimental import pallas as pl
from jax.experimental.pallas import tpu as pltpu


def _round_up(x, m):
    return ((x + m - 1) // m) * m


def _actor_kernel(x_ref, wih_ref, whh_ref, b_ref, wfc_ref, bfc_ref,
                  h0_ref, c0_ref,
                  act_ref, hN_ref, cN_ref,
                  xw_scr, hh_scr, h_scr, c_scr,
                  *, seq_len, time_chunk, batch_tile, hidden_pad,
                  action_limit, unroll):
    Tc, Bt, Hp = time_chunk, batch_tile, hidden_pad
    tc = pl.program_id(1)

    # Load the initial carry into the persistent VMEM carry at the first chunk.
    @pl.when(tc == 0)
    def _():
        h_scr[...] = h0_ref[...]
        c_scr[...] = c0_ref[...]

    # Hoisted input projection for this chunk: one MXU matmul + bias for Tc*Bt rows.
    xw_scr[...] = (jnp.dot(x_ref[0], wih_ref[...],
                           preferred_element_type=jnp.float32) + b_ref[...])

    t_base = tc * Tc

    def step(t, carry):
        h_prev, c_prev = carry
        row = pl.multiple_of(t * Bt, 8)                 # aligned sublane slice
        # Recurrent projection straight from VMEM (w_hh may exceed the vreg file).
        gates = xw_scr[pl.ds(row, Bt), :] + jnp.dot(
            h_prev, whh_ref[...], preferred_element_type=jnp.float32)  # (Bt, 4Hp)

        # Gate layout (i, f, o, g); i/f/o columns were pre-scaled by 0.5, so one tanh
        # covers all four gates: sigmoid(z) = 0.5*(tanh(z/2)+1).
        tg = jnp.tanh(gates)
        i_g = 0.5 * (tg[:, 0 * Hp:1 * Hp] + 1.0)
        f_g = 0.5 * (tg[:, 1 * Hp:2 * Hp] + 1.0)
        o_g = 0.5 * (tg[:, 2 * Hp:3 * Hp] + 1.0)
        g_g = tg[:, 3 * Hp:4 * Hp]

        c_new = f_g * c_prev + i_g * g_g
        h_new = o_g * jnp.tanh(c_new)

        if seq_len % Tc != 0:                           # compile-time guard:
            live = (t_base + t) < seq_len               # mask padded trailing steps
            h_new = jnp.where(live, h_new, h_prev)
            c_new = jnp.where(live, c_new, c_prev)

        hh_scr[pl.ds(row, Bt), :] = h_new               # stash h_t for the FC head
        return (h_new, c_new)

    h_fin, c_fin = jax.lax.fori_loop(0, Tc, step,
                                     (h_scr[...], c_scr[...]), unroll=unroll)
    h_scr[...] = h_fin
    c_scr[...] = c_fin

    @pl.when(tc == pl.num_programs(1) - 1)
    def _():
        hN_ref[...] = h_fin
        cN_ref[...] = c_fin

    # Batched, lane-dense FC head for the whole chunk (padded to 128 output lanes).
    act_ref[0] = (jnp.tanh(
        jnp.dot(hh_scr[...], wfc_ref[...], preferred_element_type=jnp.float32)
        + bfc_ref[...]) * action_limit).astype(act_ref.dtype)


def _prep_kernel_params(params, H, Hp, A, Ap):
    """Reorder gates to (i,f,o,g), pre-halve sigmoid-gate columns, lane-pad blocks."""
    def gate_cols(w):                       # w: (K, 4H) in PyTorch order (i, f, g, o)
        w = w.astype(jnp.float32)
        i, f, g, o = (w[:, k * H:(k + 1) * H] for k in range(4))
        blocks = [0.5 * i, 0.5 * f, 0.5 * o, g]          # -> (i, f, o, g), halved sig.
        blocks = [jnp.pad(b, ((0, 0), (0, Hp - H))) for b in blocks]
        return jnp.concatenate(blocks, axis=1)           # (K, 4Hp)

    w_ih = gate_cols(params["w_ih"])                                  # (S, 4Hp)
    w_hh = jnp.pad(gate_cols(params["w_hh"]), ((0, Hp - H), (0, 0)))  # (Hp, 4Hp)
    bias = gate_cols(params["bias"])                                  # (1, 4Hp)
    w_fc = jnp.pad(params["w_fc"].astype(jnp.float32),
                   ((0, Hp - H), (0, Ap - A)))                        # (Hp, Ap)
    b_fc = jnp.pad(params["b_fc"].astype(jnp.float32),
                   ((0, 0), (0, Ap - A)))                             # (1, Ap)
    return w_ih, w_hh, bias, w_fc, b_fc


def actor_forward(states, params, action_limit, hidden=None, *,
                  time_chunk=None, batch_tile=None):
    """states: (B, T, state_dim) float32, batch-first like PyTorch.

    Returns (actions (B, T, action_dim), (h_n (1,B,H), c_n (1,B,H)))."""
    B, T, S = states.shape
    H = params["w_hh"].shape[0]
    A = params["w_fc"].shape[1]

    Hp = _round_up(H, 128)                 # lane-pad each gate / hidden block
    Ap = _round_up(A, 128)                 # lane-dense action writeback
    Bp = _round_up(B, 8)                   # full f32 sublane tile
    Bt = Bp if batch_tile is None else batch_tile   # set 8*k to split batch on v7x
    assert Bt % 8 == 0 and Bp % Bt == 0
    n_bt = Bp // Bt
    Tc = min(T, 16) if time_chunk is None else max(1, min(time_chunk, T))
    T_pad = _round_up(T, Tc)
    n_tc = T_pad // Tc
    unroll = max(1, min(Tc, 8))            # capped unroll: scheduler visibility w/o spills

    w_ih, w_hh, bias, w_fc, b_fc = _prep_kernel_params(params, H, Hp, A, Ap)

    # Layout x so block (bt, tc) is a contiguous (Tc*Bt, S) slab; row = t_local*Bt + r.
    x = jnp.transpose(states, (1, 0, 2)).astype(jnp.float32)          # (T, B, S)
    x = jnp.pad(x, ((0, T_pad - T), (0, Bp - B), (0, 0)))             # (T_pad, Bp, S)
    x = x.reshape(T_pad, n_bt, Bt, S)
    x3d = jnp.transpose(x, (1, 0, 2, 3)).reshape(n_bt, T_pad * Bt, S)

    h0 = jnp.zeros((Bp, Hp), jnp.float32)
    c0 = jnp.zeros((Bp, Hp), jnp.float32)
    if hidden is not None:
        h0 = h0.at[:B, :H].set(hidden[0].reshape(B, H).astype(jnp.float32))
        c0 = c0.at[:B, :H].set(hidden[1].reshape(B, H).astype(jnp.float32))

    kernel = functools.partial(
        _actor_kernel, seq_len=T, time_chunk=Tc, batch_tile=Bt, hidden_pad=Hp,
        action_limit=float(action_limit), unroll=unroll)

    full2d = lambda bt, tc: (0, 0)
    grid_spec = pltpu.PrefetchScalarGridSpec(
        num_scalar_prefetch=0,
        grid=(n_bt, n_tc),                 # (batch tiles, time chunks)
        in_specs=[
            pl.BlockSpec((1, Tc * Bt, S), lambda bt, tc: (bt, tc, 0)),   # x chunk
            pl.BlockSpec((S, 4 * Hp), full2d),                           # W_ih
            pl.BlockSpec((Hp, 4 * Hp), full2d),                          # W_hh
            pl.BlockSpec((1, 4 * Hp), full2d),                           # bias
            pl.BlockSpec((Hp, Ap), full2d),                              # W_fc
            pl.BlockSpec((1, Ap), full2d),                               # b_fc
            pl.BlockSpec((Bt, Hp), lambda bt, tc: (bt, 0)),              # h0 tile
            pl.BlockSpec((Bt, Hp), lambda bt, tc: (bt, 0)),              # c0 tile
        ],
        out_specs=[
            pl.BlockSpec((1, Tc * Bt, Ap), lambda bt, tc: (bt, tc, 0)),  # actions chunk
            pl.BlockSpec((Bt, Hp), lambda bt, tc: (bt, 0)),              # h_n tile
            pl.BlockSpec((Bt, Hp), lambda bt, tc: (bt, 0)),              # c_n tile
        ],
        scratch_shapes=[
            pltpu.VMEM((Tc * Bt, 4 * Hp), jnp.float32),   # chunk input projections
            pltpu.VMEM((Tc * Bt, Hp), jnp.float32),       # chunk hidden states
            pltpu.VMEM((Bt, Hp), jnp.float32),            # h carry across chunks
            pltpu.VMEM((Bt, Hp), jnp.float32),            # c carry across chunks
        ],
    )

    # Explicit VMEM budget (per-chunk footprint, double-buffered blocks) + headroom.
    f32 = 4
    vmem_est = f32 * (
        2 * (Tc * Bt * S + Tc * Bt * Ap)                      # x / act blocks
        + 2 * (S * 4 * Hp + Hp * 4 * Hp + 4 * Hp + Hp * Ap + Ap + 4 * Bt * Hp)
        + (Tc * Bt * 4 * Hp + Tc * Bt * Hp + 2 * Bt * Hp))    # scratch
    vmem_limit = int(min(32 * 1024 * 1024, max(4 * 1024 * 1024, 2 * vmem_est)))

    act3d, h_n, c_n = pl.pallas_call(
        kernel,
        grid_spec=grid_spec,
        out_shape=(
            jax.ShapeDtypeStruct((n_bt, T_pad * Bt, Ap), jnp.float32),
            jax.ShapeDtypeStruct((Bp, Hp), jnp.float32),
            jax.ShapeDtypeStruct((Bp, Hp), jnp.float32),
        ),
        compiler_params=pltpu.CompilerParams(
            dimension_semantics=("parallel", "arbitrary"),
            vmem_limit_bytes=vmem_limit),
    )(x3d, w_ih, w_hh, bias, w_fc, b_fc, h0, c0)

    act = act3d.reshape(n_bt, T_pad, Bt, Ap)
    act = jnp.transpose(act, (1, 0, 2, 3)).reshape(T_pad, Bp, Ap)
    actions = jnp.transpose(act[:T, :B, :A], (1, 0, 2))          # (B, T, A)
    return actions, (h_n[None, :B, :H], c_n[None, :B, :H])


def init_params(key, state_dim, action_dim, hidden_dim):
    """Deterministic init mirroring PyTorch shapes (weights pre-transposed, gate
    order (i, f, g, o) like torch.nn.LSTM)."""
    k = 1.0 / jnp.sqrt(jnp.float32(hidden_dim))
    keys = jax.random.split(key, 6)
    u = lambda kk, shape: jax.random.uniform(kk, shape, jnp.float32, -k, k)
    # PyTorch: weight_ih (4H, S), weight_hh (4H, H), bias_ih + bias_hh (4H,)
    w_ih = u(keys[0], (4 * hidden_dim, state_dim)).T            # (S, 4H)
    w_hh = u(keys[1], (4 * hidden_dim, hidden_dim)).T           # (H, 4H)
    bias = (u(keys[2], (4 * hidden_dim,)) + u(keys[3], (4 * hidden_dim,)))[None, :]
    w_fc = u(keys[4], (action_dim, hidden_dim)).T               # (H, A)
    b_fc = u(keys[5], (action_dim,))[None, :]                   # (1, A)
    return {"w_ih": w_ih, "w_hh": w_hh, "bias": bias,
            "w_fc": w_fc, "b_fc": b_fc}


def _reference_forward(states, params, action_limit, hidden=None):
    """Pure-JAX reference (lax.scan) for correctness checking."""
    B, T, S = states.shape
    H = params["w_hh"].shape[0]
    if hidden is None:
        h0 = jnp.zeros((B, H), jnp.float32)
        c0 = jnp.zeros((B, H), jnp.float32)
    else:
        h0 = hidden[0].reshape(B, H).astype(jnp.float32)
        c0 = hidden[1].reshape(B, H).astype(jnp.float32)

    def step(carry, x_t):
        h, c = carry
        gates = x_t @ params["w_ih"] + h @ params["w_hh"] + params["bias"][0]
        i = jax.nn.sigmoid(gates[:, 0 * H:1 * H])
        f = jax.nn.sigmoid(gates[:, 1 * H:2 * H])
        g = jnp.tanh(gates[:, 2 * H:3 * H])
        o = jax.nn.sigmoid(gates[:, 3 * H:4 * H])
        c = f * c + i * g
        h = o * jnp.tanh(c)
        return (h, c), h

    (h_n, c_n), hs = jax.lax.scan(step, (h0, c0), jnp.transpose(states, (1, 0, 2)))
    lstm_out = jnp.transpose(hs, (1, 0, 2))
    actions = jnp.tanh(lstm_out @ params["w_fc"] + params["b_fc"][0]) * action_limit
    return actions, (h_n[None], c_n[None])


if __name__ == "__main__":
    state_dim, action_dim, hidden_dim = 4, 3, 32
    action_limit = 2.0
    B, T = 2, 8

    key = jax.random.PRNGKey(0)
    kp, kx, kh, kc = jax.random.split(key, 4)
    params = init_params(kp, state_dim, action_dim, hidden_dim)
    states = jax.random.normal(kx, (B, T, state_dim), jnp.float32)

    # Zero initial hidden state (hidden=None), like the PyTorch default.
    actions, (h_n, c_n) = actor_forward(states, params, action_limit)
    jax.block_until_ready((actions, h_n, c_n))

    ref_act, (ref_h, ref_c) = _reference_forward(states, params, action_limit)
    assert actions.shape == (B, T, action_dim)
    assert h_n.shape == (1, B, hidden_dim) and c_n.shape == (1, B, hidden_dim)
    assert jnp.allclose(actions, ref_act, atol=1e-5)
    assert jnp.allclose(h_n, ref_h, atol=1e-5)
    assert jnp.allclose(c_n, ref_c, atol=1e-5)

    # Caller-supplied initial hidden state.
    h_init = 0.1 * jax.random.normal(kh, (1, B, hidden_dim), jnp.float32)
    c_init = 0.1 * jax.random.normal(kc, (1, B, hidden_dim), jnp.float32)
    actions2, (h_n2, c_n2) = actor_forward(states, params, action_limit,
                                           (h_init, c_init))
    jax.block_until_ready((actions2, h_n2, c_n2))
    ref_act2, (ref_h2, ref_c2) = _reference_forward(states, params, action_limit,
                                                    (h_init, c_init))
    assert jnp.allclose(actions2, ref_act2, atol=1e-5)
    assert jnp.allclose(h_n2, ref_h2, atol=1e-5)
    assert jnp.allclose(c_n2, ref_c2, atol=1e-5)

    print("KERNEL_OK")
</pallas_src>

<mosaic_0001>
module attributes {stable_mosaic.version = 11 : i64} {
  func.func @_actor_kernel(%arg0: i32, %arg1: i32, %arg2: memref<1x64x4xf32, #tpu.memory_space<vmem>>, %arg3: memref<4x512xf32, #tpu.memory_space<vmem>>, %arg4: memref<128x512xf32, #tpu.memory_space<vmem>>, %arg5: memref<1x512xf32, #tpu.memory_space<vmem>>, %arg6: memref<128x128xf32, #tpu.memory_space<vmem>>, %arg7: memref<1x128xf32, #tpu.memory_space<vmem>>, %arg8: memref<8x128xf32, #tpu.memory_space<vmem>>, %arg9: memref<8x128xf32, #tpu.memory_space<vmem>>, %arg10: memref<1x64x128xf32, #tpu.memory_space<vmem>>, %arg11: memref<8x128xf32, #tpu.memory_space<vmem>>, %arg12: memref<8x128xf32, #tpu.memory_space<vmem>>, %arg13: memref<64x512xf32, #tpu.memory_space<vmem>>, %arg14: memref<64x128xf32, #tpu.memory_space<vmem>>, %arg15: memref<8x128xf32, #tpu.memory_space<vmem>>, %arg16: memref<8x128xf32, #tpu.memory_space<vmem>>) attributes {dimension_semantics = [#tpu.dimension_semantics<parallel>, #tpu.dimension_semantics<arbitrary>], iteration_bounds = array<i64: 1, 1>, scalar_prefetch = 0 : i64, scratch_operands = 4 : i64, tpu.core_type = #tpu.core_type<tc>, window_params = [{transform_indices = @transform_0, window_bounds = array<i64: 1, 64, 4>}, {pipeline_mode = #tpu.pipeline_mode<synchronous>, transform_indices = @transform_1, window_bounds = array<i64: 4, 512>}, {pipeline_mode = #tpu.pipeline_mode<synchronous>, transform_indices = @transform_2, window_bounds = array<i64: 128, 512>}, {pipeline_mode = #tpu.pipeline_mode<synchronous>, transform_indices = @transform_3, window_bounds = array<i64: 1, 512>}, {pipeline_mode = #tpu.pipeline_mode<synchronous>, transform_indices = @transform_4, window_bounds = array<i64: 128, 128>}, {pipeline_mode = #tpu.pipeline_mode<synchronous>, transform_indices = @transform_5, window_bounds = array<i64: 1, 128>}, {transform_indices = @transform_6, window_bounds = array<i64: 8, 128>}, {transform_indices = @transform_7, window_bounds = array<i64: 8, 128>}, {transform_indices = @transform_8, window_bounds = array<i64: 1, 64, 128>}, {transform_indices = @transform_9, window_bounds = array<i64: 8, 128>}, {transform_indices = @transform_10, window_bounds = array<i64: 8, 128>}]} {
    %c0_i32 = arith.constant 0 : i32
    %0 = arith.cmpi eq, %arg1, %c0_i32 : i32
    %1 = arith.extui %0 : i1 to i32
    %c0_i32_0 = arith.constant 0 : i32
    %2 = arith.cmpi ne, %1, %c0_i32_0 : i32
    scf.if %2 {
      %c0_127 = arith.constant 0 : index
      %c0_128 = arith.constant 0 : index
      %278 = vector.load %arg8[%c0_127, %c0_128] : memref<8x128xf32, #tpu.memory_space<vmem>>, vector<8x128xf32>
      %c0_129 = arith.constant 0 : index
      %c0_130 = arith.constant 0 : index
      %279 = vector.load %arg15[%c0_129, %c0_130] : memref<8x128xf32, #tpu.memory_space<vmem>>, vector<8x128xf32>
      tpu.vector_store %arg15[%c0_129, %c0_130], %278 {strides = array<i32>} : memref<8x128xf32, #tpu.memory_space<vmem>>, vector<8x128xf32>,
      %c0_131 = arith.constant 0 : index
      %c0_132 = arith.constant 0 : index
      %280 = vector.load %arg9[%c0_131, %c0_132] : memref<8x128xf32, #tpu.memory_space<vmem>>, vector<8x128xf32>
      %c0_133 = arith.constant 0 : index
      %c0_134 = arith.constant 0 : index
      %281 = vector.load %arg16[%c0_133, %c0_134] : memref<8x128xf32, #tpu.memory_space<vmem>>, vector<8x128xf32>
      tpu.vector_store %arg16[%c0_133, %c0_134], %280 {strides = array<i32>} : memref<8x128xf32, #tpu.memory_space<vmem>>, vector<8x128xf32>,
    } else {
    }
    %c0 = arith.constant 0 : index
    %c0_1 = arith.constant 0 : index
    %c0_2 = arith.constant 0 : index
    %3 = vector.load %arg2[%c0, %c0_1, %c0_2] : memref<1x64x4xf32, #tpu.memory_space<vmem>>, vector<1x64x4xf32>
    %4 = vector.shape_cast %3 : vector<1x64x4xf32> to vector<64x4xf32>
    %c0_3 = arith.constant 0 : index
    %c0_4 = arith.constant 0 : index
    %5 = vector.load %arg3[%c0_3, %c0_4] : memref<4x512xf32, #tpu.memory_space<vmem>>, vector<4x512xf32>
    %cst = arith.constant dense<0.000000e+00> : vector<64x512xf32>
    %6 = tpu.matmul %4, %5, %cst {dimension_numbers = #tpu.dot_dimension_numbers<[1], [0], [0], [1], [0, 0, 1, 1], [], []>} : vector<64x4xf32>, vector<4x512xf32>, vector<64x512xf32> -> vector<64x512xf32>
    %c0_5 = arith.constant 0 : index
    %c0_6 = arith.constant 0 : index
    %7 = vector.load %arg5[%c0_5, %c0_6] : memref<1x512xf32, #tpu.memory_space<vmem>>, vector<1x512xf32>
    %8 = vector.broadcast %7 : vector<1x512xf32> to vector<64x512xf32>
    %9 = arith.addf %6, %8 : vector<64x512xf32>
    %c0_7 = arith.constant 0 : index
    %c0_8 = arith.constant 0 : index
    %10 = vector.load %arg13[%c0_7, %c0_8] : memref<64x512xf32, #tpu.memory_space<vmem>>, vector<64x512xf32>
    tpu.vector_store %arg13[%c0_7, %c0_8], %9 {strides = array<i32>} : memref<64x512xf32, #tpu.memory_space<vmem>>, vector<64x512xf32>,
    %c0_9 = arith.constant 0 : index
    %c0_10 = arith.constant 0 : index
    %11 = vector.load %arg15[%c0_9, %c0_10] : memref<8x128xf32, #tpu.memory_space<vmem>>, vector<8x128xf32>
    %c0_11 = arith.constant 0 : index
    %c0_12 = arith.constant 0 : index
    %12 = vector.load %arg16[%c0_11, %c0_12] : memref<8x128xf32, #tpu.memory_space<vmem>>, vector<8x128xf32>
    %c0_i32_13 = arith.constant 0 : i32
    %c8_i32 = arith.constant 8 : i32
    %13 = arith.muli %c0_i32_13, %c8_i32 : i32
    %14 = tpu.assume_multiple %13, 8 : i32
    %15 = arith.index_cast %14 : i32 to index
    %c0_14 = arith.constant 0 : index
    %16 = vector.load %arg13[%15, %c0_14] : memref<64x512xf32, #tpu.memory_space<vmem>>, vector<8x512xf32>
    %c0_15 = arith.constant 0 : index
    %c0_16 = arith.constant 0 : index
    %17 = vector.load %arg4[%c0_15, %c0_16] : memref<128x512xf32, #tpu.memory_space<vmem>>, vector<128x512xf32>
    %cst_17 = arith.constant dense<0.000000e+00> : vector<8x512xf32>
    %18 = tpu.matmul %11, %17, %cst_17 {dimension_numbers = #tpu.dot_dimension_numbers<[1], [0], [0], [1], [0, 0, 1, 1], [], []>} : vector<8x128xf32>, vector<128x512xf32>, vector<8x512xf32> -> vector<8x512xf32>
    %19 = arith.addf %16, %18 : vector<8x512xf32>
    %20 = math.tanh %19 : vector<8x512xf32>
    %21 = vector.extract_strided_slice %20 {offsets = [0, 0], sizes = [8, 128], strides = [1, 1]} : vector<8x512xf32> to vector<8x128xf32>
    %cst_18 = arith.constant 1.000000e+00 : f32
    %22 = vector.broadcast %cst_18 : f32 to vector<8x128xf32>
    %23 = arith.addf %21, %22 : vector<8x128xf32>
    %cst_19 = arith.constant 5.000000e-01 : f32
    %24 = vector.broadcast %cst_19 : f32 to vector<8x128xf32>
    %25 = arith.mulf %24, %23 : vector<8x128xf32>
    %26 = vector.extract_strided_slice %20 {offsets = [0, 128], sizes = [8, 128], strides = [1, 1]} : vector<8x512xf32> to vector<8x128xf32>
    %cst_20 = arith.constant 1.000000e+00 : f32
    %27 = vector.broadcast %cst_20 : f32 to vector<8x128xf32>
    %28 = arith.addf %26, %27 : vector<8x128xf32>
    %cst_21 = arith.constant 5.000000e-01 : f32
    %29 = vector.broadcast %cst_21 : f32 to vector<8x128xf32>
    %30 = arith.mulf %29, %28 : vector<8x128xf32>
    %31 = vector.extract_strided_slice %20 {offsets = [0, 256], sizes = [8, 128], strides = [1, 1]} : vector<8x512xf32> to vector<8x128xf32>
    %cst_22 = arith.constant 1.000000e+00 : f32
    %32 = vector.broadcast %cst_22 : f32 to vector<8x128xf32>
    %33 = arith.addf %31, %32 : vector<8x128xf32>
    %cst_23 = arith.constant 5.000000e-01 : f32
    %34 = vector.broadcast %cst_23 : f32 to vector<8x128xf32>
    %35 = arith.mulf %34, %33 : vector<8x128xf32>
    %36 = vector.extract_strided_slice %20 {offsets = [0, 384], sizes = [8, 128], strides = [1, 1]} : vector<8x512xf32> to vector<8x128xf32>
    %37 = arith.mulf %30, %12 : vector<8x128xf32>
    %38 = arith.mulf %25, %36 : vector<8x128xf32>
    %39 = arith.addf %37, %38 : vector<8x128xf32>
    %40 = math.tanh %39 : vector<8x128xf32>
    %41 = arith.mulf %35, %40 : vector<8x128xf32>
    %42 = arith.index_cast %14 : i32 to index
    %c0_24 = arith.constant 0 : index
    %43 = vector.load %arg14[%42, %c0_24] : memref<64x128xf32, #tpu.memory_space<vmem>>, vector<8x128xf32>
    tpu.vector_store %arg14[%42, %c0_24], %41 {strides = array<i32>} : memref<64x128xf32, #tpu.memory_space<vmem>>, vector<8x128xf32>,
    %c1_i32 = arith.constant 1 : i32
    %c8_i32_25 = arith.constant 8 : i32
    %44 = arith.muli %c1_i32, %c8_i32_25 : i32
    %45 = tpu.assume_multiple %44, 8 : i32
    %46 = arith.index_cast %45 : i32 to index
    %c0_26 = arith.constant 0 : index
    %47 = vector.load %arg13[%46, %c0_26] : memref<64x512xf32, #tpu.memory_space<vmem>>, vector<8x512xf32>
    %c0_27 = arith.constant 0 : index
    %c0_28 = arith.constant 0 : index
    %48 = vector.load %arg4[%c0_27, %c0_28] : memref<128x512xf32, #tpu.memory_space<vmem>>, vector<128x512xf32>
    %cst_29 = arith.constant dense<0.000000e+00> : vector<8x512xf32>
    %49 = tpu.matmul %41, %48, %cst_29 {dimension_numbers = #tpu.dot_dimension_numbers<[1], [0], [0], [1], [0, 0, 1, 1], [], []>} : vector<8x128xf32>, vector<128x512xf32>, vector<8x512xf32> -> vector<8x512xf32>
    %50 = arith.addf %47, %49 : vector<8x512xf32>
    %51 = math.tanh %50 : vector<8x512xf32>
    %52 = vector.extract_strided_slice %51 {offsets = [0, 0], sizes = [8, 128], strides = [1, 1]} : vector<8x512xf32> to vector<8x128xf32>
    %cst_30 = arith.constant 1.000000e+00 : f32
    %53 = vector.broadcast %cst_30 : f32 to vector<8x128xf32>
    %54 = arith.addf %52, %53 : vector<8x128xf32>
    %cst_31 = arith.constant 5.000000e-01 : f32
    %55 = vector.broadcast %cst_31 : f32 to vector<8x128xf32>
    %56 = arith.mulf %55, %54 : vector<8x128xf32>
    %57 = vector.extract_strided_slice %51 {offsets = [0, 128], sizes = [8, 128], strides = [1, 1]} : vector<8x512xf32> to vector<8x128xf32>
    %cst_32 = arith.constant 1.000000e+00 : f32
    %58 = vector.broadcast %cst_32 : f32 to vector<8x128xf32>
    %59 = arith.addf %57, %58 : vector<8x128xf32>
    %cst_33 = arith.constant 5.000000e-01 : f32
    %60 = vector.broadcast %cst_33 : f32 to vector<8x128xf32>
    %61 = arith.mulf %60, %59 : vector<8x128xf32>
    %62 = vector.extract_strided_slice %51 {offsets = [0, 256], sizes = [8, 128], strides = [1, 1]} : vector<8x512xf32> to vector<8x128xf32>
    %cst_34 = arith.constant 1.000000e+00 : f32
    %63 = vector.broadcast %cst_34 : f32 to vector<8x128xf32>
    %64 = arith.addf %62, %63 : vector<8x128xf32>
    %cst_35 = arith.constant 5.000000e-01 : f32
    %65 = vector.broadcast %cst_35 : f32 to vector<8x128xf32>
    %66 = arith.mulf %65, %64 : vector<8x128xf32>
    %67 = vector.extract_strided_slice %51 {offsets = [0, 384], sizes = [8, 128], strides = [1, 1]} : vector<8x512xf32> to vector<8x128xf32>
    %68 = arith.mulf %61, %39 : vector<8x128xf32>
    %69 = arith.mulf %56, %67 : vector<8x128xf32>
    %70 = arith.addf %68, %69 : vector<8x128xf32>
    %71 = math.tanh %70 : vector<8x128xf32>
    %72 = arith.mulf %66, %71 : vector<8x128xf32>
    %73 = arith.index_cast %45 : i32 to index
    %c0_36 = arith.constant 0 : index
    %74 = vector.load %arg14[%73, %c0_36] : memref<64x128xf32, #tpu.memory_space<vmem>>, vector<8x128xf32>
    tpu.vector_store %arg14[%73, %c0_36], %72 {strides = array<i32>} : memref<64x128xf32, #tpu.memory_space<vmem>>, vector<8x128xf32>,
    %c2_i32 = arith.constant 2 : i32
    %c8_i32_37 = arith.constant 8 : i32
    %75 = arith.muli %c2_i32, %c8_i32_37 : i32
    %76 = tpu.assume_multiple %75, 8 : i32
    %77 = arith.index_cast %76 : i32 to index
    %c0_38 = arith.constant 0 : index
    %78 = vector.load %arg13[%77, %c0_38] : memref<64x512xf32, #tpu.memory_space<vmem>>, vector<8x512xf32>
    %c0_39 = arith.constant 0 : index
    %c0_40 = arith.constant 0 : index
    %79 = vector.load %arg4[%c0_39, %c0_40] : memref<128x512xf32, #tpu.memory_space<vmem>>, vector<128x512xf32>
    %cst_41 = arith.constant dense<0.000000e+00> : vector<8x512xf32>
    %80 = tpu.matmul %72, %79, %cst_41 {dimension_numbers = #tpu.dot_dimension_numbers<[1], [0], [0], [1], [0, 0, 1, 1], [], []>} : vector<8x128xf32>, vector<128x512xf32>, vector<8x512xf32> -> vector<8x512xf32>
    %81 = arith.addf %78, %80 : vector<8x512xf32>
    %82 = math.tanh %81 : vector<8x512xf32>
    %83 = vector.extract_strided_slice %82 {offsets = [0, 0], sizes = [8, 128], strides = [1, 1]} : vector<8x512xf32> to vector<8x128xf32>
    %cst_42 = arith.constant 1.000000e+00 : f32
    %84 = vector.broadcast %cst_42 : f32 to vector<8x128xf32>
    %85 = arith.addf %83, %84 : vector<8x128xf32>
    %cst_43 = arith.constant 5.000000e-01 : f32
    %86 = vector.broadcast %cst_43 : f32 to vector<8x128xf32>
    %87 = arith.mulf %86, %85 : vector<8x128xf32>
    %88 = vector.extract_strided_slice %82 {offsets = [0, 128], sizes = [8, 128], strides = [1, 1]} : vector<8x512xf32> to vector<8x128xf32>
    %cst_44 = arith.constant 1.000000e+00 : f32
    %89 = vector.broadcast %cst_44 : f32 to vector<8x128xf32>
    %90 = arith.addf %88, %89 : vector<8x128xf32>
    %cst_45 = arith.constant 5.000000e-01 : f32
    %91 = vector.broadcast %cst_45 : f32 to vector<8x128xf32>
    %92 = arith.mulf %91, %90 : vector<8x128xf32>
    %93 = vector.extract_strided_slice %82 {offsets = [0, 256], sizes = [8, 128], strides = [1, 1]} : vector<8x512xf32> to vector<8x128xf32>
    %cst_46 = arith.constant 1.000000e+00 : f32
    %94 = vector.broadcast %cst_46 : f32 to vector<8x128xf32>
    %95 = arith.addf %93, %94 : vector<8x128xf32>
    %cst_47 = arith.constant 5.000000e-01 : f32
    %96 = vector.broadcast %cst_47 : f32 to vector<8x128xf32>
    %97 = arith.mulf %96, %95 : vector<8x128xf32>
    %98 = vector.extract_strided_slice %82 {offsets = [0, 384], sizes = [8, 128], strides = [1, 1]} : vector<8x512xf32> to vector<8x128xf32>
    %99 = arith.mulf %92, %70 : vector<8x128xf32>
    %100 = arith.mulf %87, %98 : vector<8x128xf32>
    %101 = arith.addf %99, %100 : vector<8x128xf32>
    %102 = math.tanh %101 : vector<8x128xf32>
    %103 = arith.mulf %97, %102 : vector<8x128xf32>
    %104 = arith.index_cast %76 : i32 to index
    %c0_48 = arith.constant 0 : index
    %105 = vector.load %arg14[%104, %c0_48] : memref<64x128xf32, #tpu.memory_space<vmem>>, vector<8x128xf32>
    tpu.vector_store %arg14[%104, %c0_48], %103 {strides = array<i32>} : memref<64x128xf32, #tpu.memory_space<vmem>>, vector<8x128xf32>,
    %c3_i32 = arith.constant 3 : i32
    %c8_i32_49 = arith.constant 8 : i32
    %106 = arith.muli %c3_i32, %c8_i32_49 : i32
    %107 = tpu.assume_multiple %106, 8 : i32
    %108 = arith.index_cast %107 : i32 to index
    %c0_50 = arith.constant 0 : index
    %109 = vector.load %arg13[%108, %c0_50] : memref<64x512xf32, #tpu.memory_space<vmem>>, vector<8x512xf32>
    %c0_51 = arith.constant 0 : index
    %c0_52 = arith.constant 0 : index
    %110 = vector.load %arg4[%c0_51, %c0_52] : memref<128x512xf32, #tpu.memory_space<vmem>>, vector<128x512xf32>
    %cst_53 = arith.constant dense<0.000000e+00> : vector<8x512xf32>
    %111 = tpu.matmul %103, %110, %cst_53 {dimension_numbers = #tpu.dot_dimension_numbers<[1], [0], [0], [1], [0, 0, 1, 1], [], []>} : vector<8x128xf32>, vector<128x512xf32>, vector<8x512xf32> -> vector<8x512xf32>
    %112 = arith.addf %109, %111 : vector<8x512xf32>
    %113 = math.tanh %112 : vector<8x512xf32>
    %114 = vector.extract_strided_slice %113 {offsets = [0, 0], sizes = [8, 128], strides = [1, 1]} : vector<8x512xf32> to vector<8x128xf32>
    %cst_54 = arith.constant 1.000000e+00 : f32
    %115 = vector.broadcast %cst_54 : f32 to vector<8x128xf32>
    %116 = arith.addf %114, %115 : vector<8x128xf32>
    %cst_55 = arith.constant 5.000000e-01 : f32
    %117 = vector.broadcast %cst_55 : f32 to vector<8x128xf32>
    %118 = arith.mulf %117, %116 : vector<8x128xf32>
    %119 = vector.extract_strided_slice %113 {offsets = [0, 128], sizes = [8, 128], strides = [1, 1]} : vector<8x512xf32> to vector<8x128xf32>
    %cst_56 = arith.constant 1.000000e+00 : f32
    %120 = vector.broadcast %cst_56 : f32 to vector<8x128xf32>
    %121 = arith.addf %119, %120 : vector<8x128xf32>
    %cst_57 = arith.constant 5.000000e-01 : f32
    %122 = vector.broadcast %cst_57 : f32 to vector<8x128xf32>
    %123 = arith.mulf %122, %121 : vector<8x128xf32>
    %124 = vector.extract_strided_slice %113 {offsets = [0, 256], sizes = [8, 128], strides = [1, 1]} : vector<8x512xf32> to vector<8x128xf32>
    %cst_58 = arith.constant 1.000000e+00 : f32
    %125 = vector.broadcast %cst_58 : f32 to vector<8x128xf32>
    %126 = arith.addf %124, %125 : vector<8x128xf32>
    %cst_59 = arith.constant 5.000000e-01 : f32
    %127 = vector.broadcast %cst_59 : f32 to vector<8x128xf32>
    %128 = arith.mulf %127, %126 : vector<8x128xf32>
    %129 = vector.extract_strided_slice %113 {offsets = [0, 384], sizes = [8, 128], strides = [1, 1]} : vector<8x512xf32> to vector<8x128xf32>
    %130 = arith.mulf %123, %101 : vector<8x128xf32>
    %131 = arith.mulf %118, %129 : vector<8x128xf32>
    %132 = arith.addf %130, %131 : vector<8x128xf32>
    %133 = math.tanh %132 : vector<8x128xf32>
    %134 = arith.mulf %128, %133 : vector<8x128xf32>
    %135 = arith.index_cast %107 : i32 to index
    %c0_60 = arith.constant 0 : index
    %136 = vector.load %arg14[%135, %c0_60] : memref<64x128xf32, #tpu.memory_space<vmem>>, vector<8x128xf32>
    tpu.vector_store %arg14[%135, %c0_60], %134 {strides = array<i32>} : memref<64x128xf32, #tpu.memory_space<vmem>>, vector<8x128xf32>,
    %c4_i32 = arith.constant 4 : i32
    %c8_i32_61 = arith.constant 8 : i32
    %137 = arith.muli %c4_i32, %c8_i32_61 : i32
    %138 = tpu.assume_multiple %137, 8 : i32
    %139 = arith.index_cast %138 : i32 to index
    %c0_62 = arith.constant 0 : index
    %140 = vector.load %arg13[%139, %c0_62] : memref<64x512xf32, #tpu.memory_space<vmem>>, vector<8x512xf32>
    %c0_63 = arith.constant 0 : index
    %c0_64 = arith.constant 0 : index
    %141 = vector.load %arg4[%c0_63, %c0_64] : memref<128x512xf32, #tpu.memory_space<vmem>>, vector<128x512xf32>
    %cst_65 = arith.constant dense<0.000000e+00> : vector<8x512xf32>
    %142 = tpu.matmul %134, %141, %cst_65 {dimension_numbers = #tpu.dot_dimension_numbers<[1], [0], [0], [1], [0, 0, 1, 1], [], []>} : vector<8x128xf32>, vector<128x512xf32>, vector<8x512xf32> -> vector<8x512xf32>
    %143 = arith.addf %140, %142 : vector<8x512xf32>
    %144 = math.tanh %143 : vector<8x512xf32>
    %145 = vector.extract_strided_slice %144 {offsets = [0, 0], sizes = [8, 128], strides = [1, 1]} : vector<8x512xf32> to vector<8x128xf32>
    %cst_66 = arith.constant 1.000000e+00 : f32
    %146 = vector.broadcast %cst_66 : f32 to vector<8x128xf32>
    %147 = arith.addf %145, %146 : vector<8x128xf32>
    %cst_67 = arith.constant 5.000000e-01 : f32
    %148 = vector.broadcast %cst_67 : f32 to vector<8x128xf32>
    %149 = arith.mulf %148, %147 : vector<8x128xf32>
    %150 = vector.extract_strided_slice %144 {offsets = [0, 128], sizes = [8, 128], strides = [1, 1]} : vector<8x512xf32> to vector<8x128xf32>
    %cst_68 = arith.constant 1.000000e+00 : f32
    %151 = vector.broadcast %cst_68 : f32 to vector<8x128xf32>
    %152 = arith.addf %150, %151 : vector<8x128xf32>
    %cst_69 = arith.constant 5.000000e-01 : f32
    %153 = vector.broadcast %cst_69 : f32 to vector<8x128xf32>
    %154 = arith.mulf %153, %152 : vector<8x128xf32>
    %155 = vector.extract_strided_slice %144 {offsets = [0, 256], sizes = [8, 128], strides = [1, 1]} : vector<8x512xf32> to vector<8x128xf32>
    %cst_70 = arith.constant 1.000000e+00 : f32
    %156 = vector.broadcast %cst_70 : f32 to vector<8x128xf32>
    %157 = arith.addf %155, %156 : vector<8x128xf32>
    %cst_71 = arith.constant 5.000000e-01 : f32
    %158 = vector.broadcast %cst_71 : f32 to vector<8x128xf32>
    %159 = arith.mulf %158, %157 : vector<8x128xf32>
    %160 = vector.extract_strided_slice %144 {offsets = [0, 384], sizes = [8, 128], strides = [1, 1]} : vector<8x512xf32> to vector<8x128xf32>
    %161 = arith.mulf %154, %132 : vector<8x128xf32>
    %162 = arith.mulf %149, %160 : vector<8x128xf32>
    %163 = arith.addf %161, %162 : vector<8x128xf32>
    %164 = math.tanh %163 : vector<8x128xf32>
    %165 = arith.mulf %159, %164 : vector<8x128xf32>
    %166 = arith.index_cast %138 : i32 to index
    %c0_72 = arith.constant 0 : index
    %167 = vector.load %arg14[%166, %c0_72] : memref<64x128xf32, #tpu.memory_space<vmem>>, vector<8x128xf32>
    tpu.vector_store %arg14[%166, %c0_72], %165 {strides = array<i32>} : memref<64x128xf32, #tpu.memory_space<vmem>>, vector<8x128xf32>,
    %c5_i32 = arith.constant 5 : i32
    %c8_i32_73 = arith.constant 8 : i32
    %168 = arith.muli %c5_i32, %c8_i32_73 : i32
    %169 = tpu.assume_multiple %168, 8 : i32
    %170 = arith.index_cast %169 : i32 to index
    %c0_74 = arith.constant 0 : index
    %171 = vector.load %arg13[%170, %c0_74] : memref<64x512xf32, #tpu.memory_space<vmem>>, vector<8x512xf32>
    %c0_75 = arith.constant 0 : index
    %c0_76 = arith.constant 0 : index
    %172 = vector.load %arg4[%c0_75, %c0_76] : memref<128x512xf32, #tpu.memory_space<vmem>>, vector<128x512xf32>
    %cst_77 = arith.constant dense<0.000000e+00> : vector<8x512xf32>
    %173 = tpu.matmul %165, %172, %cst_77 {dimension_numbers = #tpu.dot_dimension_numbers<[1], [0], [0], [1], [0, 0, 1, 1], [], []>} : vector<8x128xf32>, vector<128x512xf32>, vector<8x512xf32> -> vector<8x512xf32>
    %174 = arith.addf %171, %173 : vector<8x512xf32>
    %175 = math.tanh %174 : vector<8x512xf32>
    %176 = vector.extract_strided_slice %175 {offsets = [0, 0], sizes = [8, 128], strides = [1, 1]} : vector<8x512xf32> to vector<8x128xf32>
    %cst_78 = arith.constant 1.000000e+00 : f32
    %177 = vector.broadcast %cst_78 : f32 to vector<8x128xf32>
    %178 = arith.addf %176, %177 : vector<8x128xf32>
    %cst_79 = arith.constant 5.000000e-01 : f32
    %179 = vector.broadcast %cst_79 : f32 to vector<8x128xf32>
    %180 = arith.mulf %179, %178 : vector<8x128xf32>
    %181 = vector.extract_strided_slice %175 {offsets = [0, 128], sizes = [8, 128], strides = [1, 1]} : vector<8x512xf32> to vector<8x128xf32>
    %cst_80 = arith.constant 1.000000e+00 : f32
    %182 = vector.broadcast %cst_80 : f32 to vector<8x128xf32>
    %183 = arith.addf %181, %182 : vector<8x128xf32>
    %cst_81 = arith.constant 5.000000e-01 : f32
    %184 = vector.broadcast %cst_81 : f32 to vector<8x128xf32>
    %185 = arith.mulf %184, %183 : vector<8x128xf32>
    %186 = vector.extract_strided_slice %175 {offsets = [0, 256], sizes = [8, 128], strides = [1, 1]} : vector<8x512xf32> to vector<8x128xf32>
    %cst_82 = arith.constant 1.000000e+00 : f32
    %187 = vector.broadcast %cst_82 : f32 to vector<8x128xf32>
    %188 = arith.addf %186, %187 : vector<8x128xf32>
    %cst_83 = arith.constant 5.000000e-01 : f32
    %189 = vector.broadcast %cst_83 : f32 to vector<8x128xf32>
    %190 = arith.mulf %189, %188 : vector<8x128xf32>
    %191 = vector.extract_strided_slice %175 {offsets = [0, 384], sizes = [8, 128], strides = [1, 1]} : vector<8x512xf32> to vector<8x128xf32>
    %192 = arith.mulf %185, %163 : vector<8x128xf32>
    %193 = arith.mulf %180, %191 : vector<8x128xf32>
    %194 = arith.addf %192, %193 : vector<8x128xf32>
    %195 = math.tanh %194 : vector<8x128xf32>
    %196 = arith.mulf %190, %195 : vector<8x128xf32>
    %197 = arith.index_cast %169 : i32 to index
    %c0_84 = arith.constant 0 : index
    %198 = vector.load %arg14[%197, %c0_84] : memref<64x128xf32, #tpu.memory_space<vmem>>, vector<8x128xf32>
    tpu.vector_store %arg14[%197, %c0_84], %196 {strides = array<i32>} : memref<64x128xf32, #tpu.memory_space<vmem>>, vector<8x128xf32>,
    %c6_i32 = arith.constant 6 : i32
    %c8_i32_85 = arith.constant 8 : i32
    %199 = arith.muli %c6_i32, %c8_i32_85 : i32
    %200 = tpu.assume_multiple %199, 8 : i32
    %201 = arith.index_cast %200 : i32 to index
    %c0_86 = arith.constant 0 : index
    %202 = vector.load %arg13[%201, %c0_86] : memref<64x512xf32, #tpu.memory_space<vmem>>, vector<8x512xf32>
    %c0_87 = arith.constant 0 : index
    %c0_88 = arith.constant 0 : index
    %203 = vector.load %arg4[%c0_87, %c0_88] : memref<128x512xf32, #tpu.memory_space<vmem>>, vector<128x512xf32>
    %cst_89 = arith.constant dense<0.000000e+00> : vector<8x512xf32>
    %204 = tpu.matmul %196, %203, %cst_89 {dimension_numbers = #tpu.dot_dimension_numbers<[1], [0], [0], [1], [0, 0, 1, 1], [], []>} : vector<8x128xf32>, vector<128x512xf32>, vector<8x512xf32> -> vector<8x512xf32>
    %205 = arith.addf %202, %204 : vector<8x512xf32>
    %206 = math.tanh %205 : vector<8x512xf32>
    %207 = vector.extract_strided_slice %206 {offsets = [0, 0], sizes = [8, 128], strides = [1, 1]} : vector<8x512xf32> to vector<8x128xf32>
    %cst_90 = arith.constant 1.000000e+00 : f32
    %208 = vector.broadcast %cst_90 : f32 to vector<8x128xf32>
    %209 = arith.addf %207, %208 : vector<8x128xf32>
    %cst_91 = arith.constant 5.000000e-01 : f32
    %210 = vector.broadcast %cst_91 : f32 to vector<8x128xf32>
    %211 = arith.mulf %210, %209 : vector<8x128xf32>
    %212 = vector.extract_strided_slice %206 {offsets = [0, 128], sizes = [8, 128], strides = [1, 1]} : vector<8x512xf32> to vector<8x128xf32>
    %cst_92 = arith.constant 1.000000e+00 : f32
    %213 = vector.broadcast %cst_92 : f32 to vector<8x128xf32>
    %214 = arith.addf %212, %213 : vector<8x128xf32>
    %cst_93 = arith.constant 5.000000e-01 : f32
    %215 = vector.broadcast %cst_93 : f32 to vector<8x128xf32>
    %216 = arith.mulf %215, %214 : vector<8x128xf32>
    %217 = vector.extract_strided_slice %206 {offsets = [0, 256], sizes = [8, 128], strides = [1, 1]} : vector<8x512xf32> to vector<8x128xf32>
    %cst_94 = arith.constant 1.000000e+00 : f32
    %218 = vector.broadcast %cst_94 : f32 to vector<8x128xf32>
    %219 = arith.addf %217, %218 : vector<8x128xf32>
    %cst_95 = arith.constant 5.000000e-01 : f32
    %220 = vector.broadcast %cst_95 : f32 to vector<8x128xf32>
    %221 = arith.mulf %220, %219 : vector<8x128xf32>
    %222 = vector.extract_strided_slice %206 {offsets = [0, 384], sizes = [8, 128], strides = [1, 1]} : vector<8x512xf32> to vector<8x128xf32>
    %223 = arith.mulf %216, %194 : vector<8x128xf32>
    %224 = arith.mulf %211, %222 : vector<8x128xf32>
    %225 = arith.addf %223, %224 : vector<8x128xf32>
    %226 = math.tanh %225 : vector<8x128xf32>
    %227 = arith.mulf %221, %226 : vector<8x128xf32>
    %228 = arith.index_cast %200 : i32 to index
    %c0_96 = arith.constant 0 : index
    %229 = vector.load %arg14[%228, %c0_96] : memref<64x128xf32, #tpu.memory_space<vmem>>, vector<8x128xf32>
    tpu.vector_store %arg14[%228, %c0_96], %227 {strides = array<i32>} : memref<64x128xf32, #tpu.memory_space<vmem>>, vector<8x128xf32>,
    %c7_i32 = arith.constant 7 : i32
    %c8_i32_97 = arith.constant 8 : i32
    %230 = arith.muli %c7_i32, %c8_i32_97 : i32
    %231 = tpu.assume_multiple %230, 8 : i32
    %232 = arith.index_cast %231 : i32 to index
    %c0_98 = arith.constant 0 : index
    %233 = vector.load %arg13[%232, %c0_98] : memref<64x512xf32, #tpu.memory_space<vmem>>, vector<8x512xf32>
    %c0_99 = arith.constant 0 : index
    %c0_100 = arith.constant 0 : index
    %234 = vector.load %arg4[%c0_99, %c0_100] : memref<128x512xf32, #tpu.memory_space<vmem>>, vector<128x512xf32>
    %cst_101 = arith.constant dense<0.000000e+00> : vector<8x512xf32>
    %235 = tpu.matmul %227, %234, %cst_101 {dimension_numbers = #tpu.dot_dimension_numbers<[1], [0], [0], [1], [0, 0, 1, 1], [], []>} : vector<8x128xf32>, vector<128x512xf32>, vector<8x512xf32> -> vector<8x512xf32>
    %236 = arith.addf %233, %235 : vector<8x512xf32>
    %237 = math.tanh %236 : vector<8x512xf32>
    %238 = vector.extract_strided_slice %237 {offsets = [0, 0], sizes = [8, 128], strides = [1, 1]} : vector<8x512xf32> to vector<8x128xf32>
    %cst_102 = arith.constant 1.000000e+00 : f32
    %239 = vector.broadcast %cst_102 : f32 to vector<8x128xf32>
    %240 = arith.addf %238, %239 : vector<8x128xf32>
    %cst_103 = arith.constant 5.000000e-01 : f32
    %241 = vector.broadcast %cst_103 : f32 to vector<8x128xf32>
    %242 = arith.mulf %241, %240 : vector<8x128xf32>
    %243 = vector.extract_strided_slice %237 {offsets = [0, 128], sizes = [8, 128], strides = [1, 1]} : vector<8x512xf32> to vector<8x128xf32>
    %cst_104 = arith.constant 1.000000e+00 : f32
    %244 = vector.broadcast %cst_104 : f32 to vector<8x128xf32>
    %245 = arith.addf %243, %244 : vector<8x128xf32>
    %cst_105 = arith.constant 5.000000e-01 : f32
    %246 = vector.broadcast %cst_105 : f32 to vector<8x128xf32>
    %247 = arith.mulf %246, %245 : vector<8x128xf32>
    %248 = vector.extract_strided_slice %237 {offsets = [0, 256], sizes = [8, 128], strides = [1, 1]} : vector<8x512xf32> to vector<8x128xf32>
    %cst_106 = arith.constant 1.000000e+00 : f32
    %249 = vector.broadcast %cst_106 : f32 to vector<8x128xf32>
    %250 = arith.addf %248, %249 : vector<8x128xf32>
    %cst_107 = arith.constant 5.000000e-01 : f32
    %251 = vector.broadcast %cst_107 : f32 to vector<8x128xf32>
    %252 = arith.mulf %251, %250 : vector<8x128xf32>
    %253 = vector.extract_strided_slice %237 {offsets = [0, 384], sizes = [8, 128], strides = [1, 1]} : vector<8x512xf32> to vector<8x128xf32>
    %254 = arith.mulf %247, %225 : vector<8x128xf32>
    %255 = arith.mulf %242, %253 : vector<8x128xf32>
    %256 = arith.addf %254, %255 : vector<8x128xf32>
    %257 = math.tanh %256 : vector<8x128xf32>
    %258 = arith.mulf %252, %257 : vector<8x128xf32>
    %259 = arith.index_cast %231 : i32 to index
    %c0_108 = arith.constant 0 : index
    %260 = vector.load %arg14[%259, %c0_108] : memref<64x128xf32, #tpu.memory_space<vmem>>, vector<8x128xf32>
    tpu.vector_store %arg14[%259, %c0_108], %258 {strides = array<i32>} : memref<64x128xf32, #tpu.memory_space<vmem>>, vector<8x128xf32>,
    %c8_i32_109 = arith.constant 8 : i32
    %c0_110 = arith.constant 0 : index
    %c0_111 = arith.constant 0 : index
    %261 = vector.load %arg15[%c0_110, %c0_111] : memref<8x128xf32, #tpu.memory_space<vmem>>, vector<8x128xf32>
    tpu.vector_store %arg15[%c0_110, %c0_111], %258 {strides = array<i32>} : memref<8x128xf32, #tpu.memory_space<vmem>>, vector<8x128xf32>,
    %c0_112 = arith.constant 0 : index
    %c0_113 = arith.constant 0 : index
    %262 = vector.load %arg16[%c0_112, %c0_113] : memref<8x128xf32, #tpu.memory_space<vmem>>, vector<8x128xf32>
    tpu.vector_store %arg16[%c0_112, %c0_113], %256 {strides = array<i32>} : memref<8x128xf32, #tpu.memory_space<vmem>>, vector<8x128xf32>,
    %c0_i32_114 = arith.constant 0 : i32
    %263 = arith.cmpi eq, %arg1, %c0_i32_114 : i32
    %264 = arith.extui %263 : i1 to i32
    %c0_i32_115 = arith.constant 0 : i32
    %265 = arith.cmpi ne, %264, %c0_i32_115 : i32
    scf.if %265 {
      %c0_127 = arith.constant 0 : index
      %c0_128 = arith.constant 0 : index
      %278 = vector.load %arg11[%c0_127, %c0_128] : memref<8x128xf32, #tpu.memory_space<vmem>>, vector<8x128xf32>
      tpu.vector_store %arg11[%c0_127, %c0_128], %258 {strides = array<i32>} : memref<8x128xf32, #tpu.memory_space<vmem>>, vector<8x128xf32>,
      %c0_129 = arith.constant 0 : index
      %c0_130 = arith.constant 0 : index
      %279 = vector.load %arg12[%c0_129, %c0_130] : memref<8x128xf32, #tpu.memory_space<vmem>>, vector<8x128xf32>
      tpu.vector_store %arg12[%c0_129, %c0_130], %256 {strides = array<i32>} : memref<8x128xf32, #tpu.memory_space<vmem>>, vector<8x128xf32>,
    } else {
    }
    %c0_116 = arith.constant 0 : index
    %c0_117 = arith.constant 0 : index
    %266 = vector.load %arg14[%c0_116, %c0_117] : memref<64x128xf32, #tpu.memory_space<vmem>>, vector<64x128xf32>
    %c0_118 = arith.constant 0 : index
    %c0_119 = arith.constant 0 : index
    %267 = vector.load %arg6[%c0_118, %c0_119] : memref<128x128xf32, #tpu.memory_space<vmem>>, vector<128x128xf32>
    %cst_120 = arith.constant dense<0.000000e+00> : vector<64x128xf32>
    %268 = tpu.matmul %266, %267, %cst_120 {dimension_numbers = #tpu.dot_dimension_numbers<[1], [0], [0], [1], [0, 0, 1, 1], [], []>} : vector<64x128xf32>, vector<128x128xf32>, vector<64x128xf32> -> vector<64x128xf32>
    %c0_121 = arith.constant 0 : index
    %c0_122 = arith.constant 0 : index
    %269 = vector.load %arg7[%c0_121, %c0_122] : memref<1x128xf32, #tpu.memory_space<vmem>>, vector<1x128xf32>
    %270 = vector.broadcast %269 : vector<1x128xf32> to vector<64x128xf32>
    %271 = arith.addf %268, %270 : vector<64x128xf32>
    %272 = math.tanh %271 : vector<64x128xf32>
    %cst_123 = arith.constant 2.000000e+00 : f32
    %273 = vector.broadcast %cst_123 : f32 to vector<64x128xf32>
    %274 = arith.mulf %272, %273 : vector<64x128xf32>
    %c0_124 = arith.constant 0 : index
    %c0_125 = arith.constant 0 : index
    %c0_126 = arith.constant 0 : index
    %275 = vector.load %arg10[%c0_124, %c0_125, %c0_126] : memref<1x64x128xf32, #tpu.memory_space<vmem>>, vector<1x64x128xf32>
    %276 = vector.shape_cast %275 : vector<1x64x128xf32> to vector<64x128xf32>
    %277 = vector.shape_cast %274 : vector<64x128xf32> to vector<1x64x128xf32>
    tpu.vector_store %arg10[%c0_124, %c0_125, %c0_126], %277 {strides = array<i32>} : memref<1x64x128xf32, #tpu.memory_space<vmem>>, vector<1x64x128xf32>,
    return
  }
  func.func @transform_0(%arg0: i32, %arg1: i32) -> (i32, i32, i32) {
    %c0_i32 = arith.constant 0 : i32
    %c0_i32_0 = arith.constant 0 : i32
    return %arg0, %arg1, %c0_i32 : i32, i32, i32
  }
  func.func @transform_1(%arg0: i32, %arg1: i32) -> (i32, i32) {
    %c0_i32 = arith.constant 0 : i32
    %c0_i32_0 = arith.constant 0 : i32
    %c0_i32_1 = arith.constant 0 : i32
    return %c0_i32, %c0_i32_0 : i32, i32
  }
  func.func @transform_2(%arg0: i32, %arg1: i32) -> (i32, i32) {
    %c0_i32 = arith.constant 0 : i32
    %c0_i32_0 = arith.constant 0 : i32
    %c0_i32_1 = arith.constant 0 : i32
    return %c0_i32, %c0_i32_0 : i32, i32
  }
  func.func @transform_3(%arg0: i32, %arg1: i32) -> (i32, i32) {
    %c0_i32 = arith.constant 0 : i32
    %c0_i32_0 = arith.constant 0 : i32
    %c0_i32_1 = arith.constant 0 : i32
    return %c0_i32, %c0_i32_0 : i32, i32
  }
  func.func @transform_4(%arg0: i32, %arg1: i32) -> (i32, i32) {
    %c0_i32 = arith.constant 0 : i32
    %c0_i32_0 = arith.constant 0 : i32
    %c0_i32_1 = arith.constant 0 : i32
    return %c0_i32, %c0_i32_0 : i32, i32
  }
  func.func @transform_5(%arg0: i32, %arg1: i32) -> (i32, i32) {
    %c0_i32 = arith.constant 0 : i32
    %c0_i32_0 = arith.constant 0 : i32
    %c0_i32_1 = arith.constant 0 : i32
    return %c0_i32, %c0_i32_0 : i32, i32
  }
  func.func @transform_6(%arg0: i32, %arg1: i32) -> (i32, i32) {
    %c0_i32 = arith.constant 0 : i32
    %c0_i32_0 = arith.constant 0 : i32
    return %arg0, %c0_i32 : i32, i32
  }
  func.func @transform_7(%arg0: i32, %arg1: i32) -> (i32, i32) {
    %c0_i32 = arith.constant 0 : i32
    %c0_i32_0 = arith.constant 0 : i32
    return %arg0, %c0_i32 : i32, i32
  }
  func.func @transform_8(%arg0: i32, %arg1: i32) -> (i32, i32, i32) {
    %c0_i32 = arith.constant 0 : i32
    %c0_i32_0 = arith.constant 0 : i32
    return %arg0, %arg1, %c0_i32 : i32, i32, i32
  }
  func.func @transform_9(%arg0: i32, %arg1: i32) -> (i32, i32) {
    %c0_i32 = arith.constant 0 : i32
    %c0_i32_0 = arith.constant 0 : i32
    return %arg0, %c0_i32 : i32, i32
  }
  func.func @transform_10(%arg0: i32, %arg1: i32) -> (i32, i32) {
    %c0_i32 = arith.constant 0 : i32
    %c0_i32_0 = arith.constant 0 : i32
    return %arg0, %c0_i32 : i32, i32
  }
}

</mosaic_0001>

<llo_original>
// kernel: tpu_custom_call.1
$region0: #{tpu_custom_call.1}
  #allocation0 [shape = 'u32[]', space=smem, size = 0x4, offset = 0x4, fixed_abs, tag = 'smem constant byte address 0x4 - core index']
  #allocation1 [shape = 'u32[144,128]{1,0:T(1,128)}', space=vmem, size = 0x12000, scoped, tag = 'internal scratch']
  #allocation2 [shape = 'f32[64,512]{1,0:T(8,128)}', space=vmem, size = 0x20000, scoped, tag = 'scratch operand']
  #allocation3 [shape = 'f32[64,128]{1,0:T(8,128)}', space=vmem, size = 0x8000, scoped, tag = 'scratch operand']
  #allocation4 [shape = 'f32[8,128]{1,0:T(8,128)}', space=vmem, size = 0x1000, scoped, tag = 'scratch operand']
  #allocation5 [shape = 'f32[8,128]{1,0:T(8,128)}', space=vmem, size = 0x1000, scoped, tag = 'scratch operand']
  %s0 = inlined_call_operand.vmem [shape: f32[1,64,4], index: 0, kind: input, shape index: {}]
  %s1 = inlined_call_operand.vmem [shape: f32[4,512], index: 1, kind: input, shape index: {}]
  %s2 = inlined_call_operand.hbm [shape: f32[128,512], index: 2, kind: input, shape index: {}]
  %s3 = inlined_call_operand.vmem [shape: f32[1,512], index: 3, kind: input, shape index: {}]
  %s4 = inlined_call_operand.hbm [shape: f32[128,128], index: 4, kind: input, shape index: {}]
  %s5 = inlined_call_operand.vmem [shape: f32[1,128], index: 5, kind: input, shape index: {}]
  %s6 = inlined_call_operand.vmem [shape: f32[8,128], index: 6, kind: input, shape index: {}]
  %s7 = inlined_call_operand.vmem [shape: f32[8,128], index: 7, kind: input, shape index: {}]
  %s8 = inlined_call_operand.hbm [shape: f32[1,64,128], index: 8, kind: output, shape index: {0}]
  %s9 = inlined_call_operand.hbm [shape: f32[8,128], index: 9, kind: output, shape index: {1}]
  %s10 = inlined_call_operand.hbm [shape: f32[8,128], index: 10, kind: output, shape index: {2}]
  %11 = xla_tuple %s8, %s9, %s10
  %s12 = sld [smem:[#allocation0]]
  $region74: #{tpu_custom_call.1} parent=0
    _
  %s14 = ssub.s32 1, %s12
  %s15 = scalar_select 0, %s14, %s12
  $region1: #{tpu_custom_call.1} parent=0
    #allocation6 [shape = 'u8[262144]{0}', space=vmem, size = 0x40000, scoped, tag = 'input window, operand 2, single buffered']
    #allocation7 [shape = 's32[1]{0}', space=sflag, size = 0x4, scoped, tag = 'scoped memory for tpu_custom_call.1']
    #allocation8 [shape = 's32[1]{0}', space=sflag, size = 0x4, scoped, tag = 'scoped memory for tpu_custom_call.1']
    #allocation9 [shape = 'u8[65536]{0}', space=vmem, size = 0x10000, scoped, tag = 'input window, operand 4, single buffered']
    #allocation10 [shape = 's32[1]{0}', space=sflag, size = 0x4, scoped, tag = 'scoped memory for tpu_custom_call.1']
    #allocation11 [shape = 'u8[32768]{0}', space=vmem, size = 0x8000, scoped, tag = 'output window, operand 0, single buffered']
    #allocation12 [shape = 'u8[4096]{0}', space=vmem, size = 0x1000, scoped, tag = 'output window, operand 1, single buffered']
    #allocation13 [shape = 's32[1]{0}', space=sflag, size = 0x4, scoped, tag = 'scoped memory for tpu_custom_call.1']
    #allocation14 [shape = 'u8[4096]{0}', space=vmem, size = 0x1000, scoped, tag = 'output window, operand 2, single buffered']
    %16 = vsyncpa [#allocation7], 0
    %17 = vsyncpa [#allocation10], 0
    %18 = vsyncpa [#allocation8], 0
    %19 = vsyncpa [#allocation13], 0
    // Predicated region
    $region2: #{tpu_custom_call.1} parent=1 // pred_check
      _
    $region3: #{tpu_custom_call.1} parent=1 // pred_check_branch
      %21 = sbr.rel (0) target = $region5
    $region4: #{tpu_custom_call.1} parent=1 // pred_region
      _
    $region5: #{tpu_custom_call.1} parent=1 // pred_fallthru
      _
    // Predicated region
    $region6: #{tpu_custom_call.1} parent=1 // pred_check
      _
    $region7: #{tpu_custom_call.1} parent=1 // pred_check_branch
      %23 = sbr.rel (0) target = $region9
    $region8: #{tpu_custom_call.1} parent=1 // pred_region
      _
    $region9: #{tpu_custom_call.1} parent=1 // pred_fallthru
      _
    // Predicated region
    $region10: #{tpu_custom_call.1} parent=1 // pred_check
      _
    $region11: #{tpu_custom_call.1} parent=1 // pred_check_branch
      %25 = sbr.rel (0) target = $region13
    $region12: #{tpu_custom_call.1} parent=1 // pred_region
      %s27 = ssub.s32 8192, 8192
      %28 = vsyncadd [#allocation7], %s27
      %s29 = sshll.u32 [#allocation6], 4
      %s30 = int_to_ptr.vmem [resolvable:$true] %s29
      %35 = dma.hbm_to_vmem [thread:$0]  %s2, 8192, %s30, [#allocation7], 512, 512, 32
    $region13: #{tpu_custom_call.1} parent=1 // pred_fallthru
      _
    // Predicated region
    $region14: #{tpu_custom_call.1} parent=1 // pred_check
      _
    $region15: #{tpu_custom_call.1} parent=1 // pred_check_branch
      %37 = sbr.rel (0) target = $region17
    $region16: #{tpu_custom_call.1} parent=1 // pred_region
      _
    $region17: #{tpu_custom_call.1} parent=1 // pred_fallthru
      _
    // Predicated region
    $region18: #{tpu_custom_call.1} parent=1 // pred_check
      _
    $region19: #{tpu_custom_call.1} parent=1 // pred_check_branch
      %39 = sbr.rel (0) target = $region21
    $region20: #{tpu_custom_call.1} parent=1 // pred_region
      %s41 = ssub.s32 2048, 2048
      %42 = vsyncadd [#allocation10], %s41
      %s43 = sshll.u32 [#allocation9], 4
      %s44 = int_to_ptr.vmem [resolvable:$true] %s43
      %49 = dma.hbm_to_vmem [thread:$0]  %s4, 2048, %s44, [#allocation10], 128, 128, 8
    $region21: #{tpu_custom_call.1} parent=1 // pred_fallthru
      _
    // Predicated region
    $region22: #{tpu_custom_call.1} parent=1 // pred_check
      _
    $region23: #{tpu_custom_call.1} parent=1 // pred_check_branch
      %51 = sbr.rel (0) target = $region25
    $region24: #{tpu_custom_call.1} parent=1 // pred_region
      _
    $region25: #{tpu_custom_call.1} parent=1 // pred_fallthru
      _
    // Predicated region
    $region26: #{tpu_custom_call.1} parent=1 // pred_check
      _
    $region27: #{tpu_custom_call.1} parent=1 // pred_check_branch
      %53 = sbr.rel (0) target = $region29
    $region28: #{tpu_custom_call.1} parent=1 // pred_region
      _
    $region29: #{tpu_custom_call.1} parent=1 // pred_fallthru
      _
    // Predicated region
    $region30: #{tpu_custom_call.1} parent=1 // pred_check
      _
    $region31: #{tpu_custom_call.1} parent=1 // pred_check_branch
      %55 = sbr.rel (0) target = $region33
    $region32: #{tpu_custom_call.1} parent=1 // pred_region
      _
    $region33: #{tpu_custom_call.1} parent=1 // pred_fallthru
      _
    // Predicated region
    $region34: #{tpu_custom_call.1} parent=1 // pred_check
      _
    $region35: #{tpu_custom_call.1} parent=1 // pred_check_branch
      %57 = sbr.rel (0) target = $region37
    $region36: #{tpu_custom_call.1} parent=1 // pred_region
      %58 = dma.done [#allocation7], 8192
    $region37: #{tpu_custom_call.1} parent=1 // pred_fallthru
      _
    // Predicated region
    $region38: #{tpu_custom_call.1} parent=1 // pred_check
      _
    $region39: #{tpu_custom_call.1} parent=1 // pred_check_branch
      %60 = sbr.rel (0) target = $region41
    $region40: #{tpu_custom_call.1} parent=1 // pred_region
      %61 = dma.done [#allocation10], 2048
    $region41: #{tpu_custom_call.1} parent=1 // pred_fallthru
      _
    %p62 = scmp.eq.s32.totalorder 0, 0
    // Predicated region
    $region42: #{tpu_custom_call.1} parent=1 // pred_check
      %p63 = pneg %p62
    $region43: #{tpu_custom_call.1} parent=1 // pred_check_branch
      %65 = sbr.rel (%p63) target = $region45
    $region44: #{tpu_custom_call.1} parent=1 // pred_region
      %v66 = vld [vmem:[%s6] sm:$0xff]
      %67 = vst [vmem:[#allocation4] sm:$0xff] %v66
      %v68 = vld [vmem:[%s7] sm:$0xff]
      %69 = vst [vmem:[#allocation5] sm:$0xff] %v68
    $region45: #{tpu_custom_call.1} parent=1 // pred_fallthru
      _
    %v70 = vld [vmem:[%s0] sm:$0xff]
    %v71 = vld [vmem:[%s0 + $0x8] sm:$0xff]
    %v72 = vld [vmem:[%s0 + $0x10] sm:$0xff]
    %v73 = vld [vmem:[%s0 + $0x18] sm:$0xff]
    %v74 = vld [vmem:[%s0 + $0x20] sm:$0xff]
    %v75 = vld [vmem:[%s0 + $0x28] sm:$0xff]
    %v76 = vld [vmem:[%s0 + $0x30] sm:$0xff]
    %v77 = vld [vmem:[%s0 + $0x38] sm:$0xff]
    %v78 = vld [vmem:[%s1] sm:$0xff]
    %v79 = vld [vmem:[%s1 + $0x8] sm:$0xff]
    %v80 = vld [vmem:[%s3] sm:$0xf]
    %v82 = vlaneseq
    %v83 = vshrl.u32 %v82, 7
    %v84 = vsub.s32 0, %v83
    %v85 = vrot.slane %v80, %v84
    %v86 = vlaneseq
    %v87 = vshrl.u32 %v86, 7
    %v88 = vsub.s32 1, %v87
    %v89 = vrot.slane %v80, %v88
    %v90 = vlaneseq
    %v91 = vshrl.u32 %v90, 7
    %v92 = vsub.s32 2, %v91
    %v93 = vrot.slane %v80, %v92
    %v94 = vlaneseq
    %v95 = vshrl.u32 %v94, 7
    %v96 = vsub.s32 3, %v95
    %v97 = vrot.slane %v80, %v96
    %v104 = vcombine.high %v78, %v78
    %v105 = vcombine.high %v79, %v79
    %vm106 = vcmask 31744
    %v108 = vsel %vm106, %v70, 0
    %v111 = vsel %vm106, %v71, 0
    %v114 = vsel %vm106, %v72, 0
    %v117 = vsel %vm106, %v73, 0
    %v120 = vsel %vm106, %v74, 0
    %v123 = vsel %vm106, %v75, 0
    %v126 = vsel %vm106, %v76, 0
    %v129 = vsel %vm106, %v77, 0
    %vm131 = vcmask 1043456
    %v132 = vsel %vm131, %v78, 0
    %v134 = vsel %vm131, %v104, 0
    %v136 = vsel %vm131, %v79, 0
    %v138 = vsel %vm131, %v105, 0
    %140 = vmatprep.subr.mxu0 %v134
    %141 = vmatpush1.msra.mxu0 %v132
    %142 = vmatprep.subr.mxu0 0.0
    %143 = vmatpush1.msra.mxu0 0.0
    %144 = vmatprep.subr.mxu0 0.0
    %145 = vmatpush1.msra.mxu0 0.0
    %146 = vmatprep.subr.mxu0 0.0
    %147 = vmatpush1.msra.mxu0 0.0
    %148 = vmatprep.subr.mxu0 0.0
    %149 = vmatpush1.msra.mxu0 0.0
    %150 = vmatprep.subr.mxu0 0.0
    %151 = vmatpush1.msra.mxu0 0.0
    %152 = vmatprep.subr.mxu0 0.0
    %153 = vmatpush1.msra.mxu0 0.0
    %154 = vmatprep.subr.mxu0 0.0
    %155 = vmatpush1.msra.mxu0 0.0
    %156 = vmatprep.subr.mxu0 0.0
    %157 = vmatpush1.msra.mxu0 0.0
    %158 = vmatprep.subr.mxu0 0.0
    %159 = vmatpush1.msra.mxu0 0.0
    %160 = vmatprep.subr.mxu0 0.0
    %161 = vmatpush1.msra.mxu0 0.0
    %162 = vmatprep.subr.mxu0 0.0
    %163 = vmatpush1.msra.mxu0 0.0
    %164 = vmatprep.subr.mxu0 0.0
    %165 = vmatpush1.msra.mxu0 0.0
    %166 = vmatprep.subr.mxu0 0.0
    %167 = vmatpush1.msra.mxu0 0.0
    %168 = vmatprep.subr.mxu0 0.0
    %169 = vmatpush1.msra.mxu0 0.0
    %170 = vmatprep.subr.mxu0 0.0
    %171 = vmatpush1.msra.mxu0 0.0
    %172 = vmatprep.subr.mxu0 0.0
    %173 = vmatpush1.msra.mxu0 0.0
    %174 = vmatprep.subr.mxu0 0.0
    %175 = vmatpush1.msra.mxu0 0.0
    %176 = vmatprep.subr.mxu0 0.0
    %177 = vmatpush1.msra.mxu0 0.0
    %178 = vmatprep.subr.mxu0 0.0
    %179 = vmatpush1.msra.mxu0 0.0
    %180 = vmatprep.subr.mxu0 0.0
    %181 = vmatpush1.msra.mxu0 0.0
    %182 = vmatprep.subr.mxu0 0.0
    %183 = vmatpush1.msra.mxu0 0.0
    %184 = vmatprep.subr.mxu0 0.0
    %185 = vmatpush1.msra.mxu0 0.0
    %186 = vmatprep.subr.mxu0 0.0
    %187 = vmatpush1.msra.mxu0 0.0
    %188 = vmatprep.subr.mxu0 0.0
    %189 = vmatpush1.msra.mxu0 0.0
    %190 = vmatprep.subr.mxu0 0.0
    %191 = vmatpush1.msra.mxu0 0.0
    %192 = vmatprep.subr.mxu0 0.0
    %193 = vmatpush1.msra.mxu0 0.0
    %194 = vmatprep.subr.mxu0 0.0
    %195 = vmatpush1.msra.mxu0 0.0
    %196 = vmatprep.subr.mxu0 0.0
    %197 = vmatpush1.msra.mxu0 0.0
    %198 = vmatprep.subr.mxu0 0.0
    %199 = vmatpush1.msra.mxu0 0.0
    %200 = vmatprep.subr.mxu0 0.0
    %201 = vmatpush1.msra.mxu0 0.0
    %202 = vmatprep.subr.mxu0 0.0
    %203 = vmatpush1.msra.mxu0 0.0
    %204 = vmatprep.mubr.f32.mxu0 0.0
    %205 = vmatmul.mubr.f32.gmra.mrb[0].mxu0 %v108
    %v206 = vpop.f32.mrb[0].mxu0
    %v207 = vadd.f32 %v85, %v206
    %v208 = vpop.f32.mrb[0].mxu0
    %v209 = vadd.f32 %v89, %v208
    %210 = vmatprep.mubr.f32.mxu0 0.0
    %211 = vmatmul.mubr.f32.gmra.mrb[0].mxu0 %v111
    %v212 = vpop.f32.mrb[0].mxu0
    %v213 = vadd.f32 %v85, %v212
    %v214 = vpop.f32.mrb[0].mxu0
    %v215 = vadd.f32 %v89, %v214
    %216 = vmatprep.mubr.f32.mxu0 0.0
    %217 = vmatmul.mubr.f32.gmra.mrb[0].mxu0 %v114
    %v218 = vpop.f32.mrb[0].mxu0
    %v219 = vadd.f32 %v85, %v218
    %v220 = vpop.f32.mrb[0].mxu0
    %v221 = vadd.f32 %v89, %v220
    %222 = vmatprep.mubr.f32.mxu0 0.0
    %223 = vmatmul.mubr.f32.gmra.mrb[0].mxu0 %v117
    %v224 = vpop.f32.mrb[0].mxu0
    %v225 = vadd.f32 %v85, %v224
    %v226 = vpop.f32.mrb[0].mxu0
    %v227 = vadd.f32 %v89, %v226
    %228 = vmatprep.mubr.f32.mxu0 0.0
    %229 = vmatmul.mubr.f32.gmra.mrb[0].mxu0 %v120
    %v230 = vpop.f32.mrb[0].mxu0
    %v231 = vadd.f32 %v85, %v230
    %v232 = vpop.f32.mrb[0].mxu0
    %v233 = vadd.f32 %v89, %v232
    %234 = vmatprep.mubr.f32.mxu0 0.0
    %235 = vmatmul.mubr.f32.gmra.mrb[0].mxu0 %v123
    %v236 = vpop.f32.mrb[0].mxu0
    %v237 = vadd.f32 %v85, %v236
    %v238 = vpop.f32.mrb[0].mxu0
    %v239 = vadd.f32 %v89, %v238
    %240 = vmatprep.mubr.f32.mxu0 0.0
    %241 = vmatmul.mubr.f32.gmra.mrb[0].mxu0 %v126
    %v242 = vpop.f32.mrb[0].mxu0
    %v243 = vadd.f32 %v85, %v242
    %v244 = vpop.f32.mrb[0].mxu0
    %v245 = vadd.f32 %v89, %v244
    %246 = vmatprep.mubr.f32.mxu0 0.0
    %247 = vmatmul.mubr.f32.gmra.mrb[0].mxu0 %v129
    %v248 = vpop.f32.mrb[0].mxu0
    %v249 = vadd.f32 %v85, %v248
    %v250 = vpop.f32.mrb[0].mxu0
    %v251 = vadd.f32 %v89, %v250
    %252 = vdwg.mxu0
    %253 = vmatprep.subr.mxu0 %v138
    %254 = vmatpush1.msra.mxu0 %v136
    %255 = vmatprep.subr.mxu0 0.0
    %256 = vmatpush1.msra.mxu0 0.0
    %257 = vmatprep.subr.mxu0 0.0
    %258 = vmatpush1.msra.mxu0 0.0
    %259 = vmatprep.subr.mxu0 0.0
    %260 = vmatpush1.msra.mxu0 0.0
    %261 = vmatprep.subr.mxu0 0.0
    %262 = vmatpush1.msra.mxu0 0.0
    %263 = vmatprep.subr.mxu0 0.0
    %264 = vmatpush1.msra.mxu0 0.0
    %265 = vmatprep.subr.mxu0 0.0
    %266 = vmatpush1.msra.mxu0 0.0
    %267 = vmatprep.subr.mxu0 0.0
    %268 = vmatpush1.msra.mxu0 0.0
    %269 = vmatprep.subr.mxu0 0.0
    %270 = vmatpush1.msra.mxu0 0.0
    %271 = vmatprep.subr.mxu0 0.0
    %272 = vmatpush1.msra.mxu0 0.0
    %273 = vmatprep.subr.mxu0 0.0
    %274 = vmatpush1.msra.mxu0 0.0
    %275 = vmatprep.subr.mxu0 0.0
    %276 = vmatpush1.msra.mxu0 0.0
    %277 = vmatprep.subr.mxu0 0.0
    %278 = vmatpush1.msra.mxu0 0.0
    %279 = vmatprep.subr.mxu0 0.0
    %280 = vmatpush1.msra.mxu0 0.0
    %281 = vmatprep.subr.mxu0 0.0
    %282 = vmatpush1.msra.mxu0 0.0
    %283 = vmatprep.subr.mxu0 0.0
    %284 = vmatpush1.msra.mxu0 0.0
    %285 = vmatprep.subr.mxu0 0.0
    %286 = vmatpush1.msra.mxu0 0.0
    %287 = vmatprep.subr.mxu0 0.0
    %288 = vmatpush1.msra.mxu0 0.0
    %289 = vmatprep.subr.mxu0 0.0
    %290 = vmatpush1.msra.mxu0 0.0
    %291 = vmatprep.subr.mxu0 0.0
    %292 = vmatpush1.msra.mxu0 0.0
    %293 = vmatprep.subr.mxu0 0.0
    %294 = vmatpush1.msra.mxu0 0.0
    %295 = vmatprep.subr.mxu0 0.0
    %296 = vmatpush1.msra.mxu0 0.0
    %297 = vmatprep.subr.mxu0 0.0
    %298 = vmatpush1.msra.mxu0 0.0
    %299 = vmatprep.subr.mxu0 0.0
    %300 = vmatpush1.msra.mxu0 0.0
    %301 = vmatprep.subr.mxu0 0.0
    %302 = vmatpush1.msra.mxu0 0.0
    %303 = vmatprep.subr.mxu0 0.0
    %304 = vmatpush1.msra.mxu0 0.0
    %305 = vmatprep.subr.mxu0 0.0
    %306 = vmatpush1.msra.mxu0 0.0
    %307 = vmatprep.subr.mxu0 0.0
    %308 = vmatpush1.msra.mxu0 0.0
    %309 = vmatprep.subr.mxu0 0.0
    %310 = vmatpush1.msra.mxu0 0.0
    %311 = vmatprep.subr.mxu0 0.0
    %312 = vmatpush1.msra.mxu0 0.0
    %313 = vmatprep.subr.mxu0 0.0
    %314 = vmatpush1.msra.mxu0 0.0
    %315 = vmatprep.subr.mxu0 0.0
    %316 = vmatpush1.msra.mxu0 0.0
    %317 = vmatprep.mubr.f32.mxu0 0.0
    %318 = vmatmul.mubr.f32.gmra.mrb[0].mxu0 %v108
    %v319 = vpop.f32.mrb[0].mxu0
    %v320 = vadd.f32 %v93, %v319
    %v321 = vpop.f32.mrb[0].mxu0
    %v322 = vadd.f32 %v97, %v321
    %323 = vmatprep.mubr.f32.mxu0 0.0
    %324 = vmatmul.mubr.f32.gmra.mrb[0].mxu0 %v111
    %v325 = vpop.f32.mrb[0].mxu0
    %v326 = vadd.f32 %v93, %v325
    %v327 = vpop.f32.mrb[0].mxu0
    %v328 = vadd.f32 %v97, %v327
    %329 = vmatprep.mubr.f32.mxu0 0.0
    %330 = vmatmul.mubr.f32.gmra.mrb[0].mxu0 %v114
    %v331 = vpop.f32.mrb[0].mxu0
    %v332 = vadd.f32 %v93, %v331
    %v333 = vpop.f32.mrb[0].mxu0
    %v334 = vadd.f32 %v97, %v333
    %335 = vmatprep.mubr.f32.mxu0 0.0
    %336 = vmatmul.mubr.f32.gmra.mrb[0].mxu0 %v117
    %v337 = vpop.f32.mrb[0].mxu0
    %v338 = vadd.f32 %v93, %v337
    %v339 = vpop.f32.mrb[0].mxu0
    %v340 = vadd.f32 %v97, %v339
    %341 = vmatprep.mubr.f32.mxu0 0.0
    %342 = vmatmul.mubr.f32.gmra.mrb[0].mxu0 %v120
    %v343 = vpop.f32.mrb[0].mxu0
    %v344 = vadd.f32 %v93, %v343
    %v345 = vpop.f32.mrb[0].mxu0
    %v346 = vadd.f32 %v97, %v345
    %347 = vmatprep.mubr.f32.mxu0 0.0
    %348 = vmatmul.mubr.f32.gmra.mrb[0].mxu0 %v123
    %v349 = vpop.f32.mrb[0].mxu0
    %v350 = vadd.f32 %v93, %v349
    %v351 = vpop.f32.mrb[0].mxu0
    %v352 = vadd.f32 %v97, %v351
    %353 = vmatprep.mubr.f32.mxu0 0.0
    %354 = vmatmul.mubr.f32.gmra.mrb[0].mxu0 %v126
    %v355 = vpop.f32.mrb[0].mxu0
    %v356 = vadd.f32 %v93, %v355
    %v357 = vpop.f32.mrb[0].mxu0
    %v358 = vadd.f32 %v97, %v357
    %359 = vmatprep.mubr.f32.mxu0 0.0
    %360 = vmatmul.mubr.f32.gmra.mrb[0].mxu0 %v129
    %v361 = vpop.f32.mrb[0].mxu0
    %v362 = vadd.f32 %v93, %v361
    %v363 = vpop.f32.mrb[0].mxu0
    %v364 = vadd.f32 %v97, %v363
    %365 = vdwg.mxu0
    %366 = vst [vmem:[#allocation2] sm:$0xff] %v207
    %367 = vst [vmem:[#allocation2 + $0x8] sm:$0xff] %v209
    %368 = vst [vmem:[#allocation2 + $0x10] sm:$0xff] %v320
    %369 = vst [vmem:[#allocation2 + $0x18] sm:$0xff] %v322
    %370 = vst [vmem:[#allocation2 + $0x20] sm:$0xff] %v213
    %371 = vst [vmem:[#allocation2 + $0x28] sm:$0xff] %v215
    %372 = vst [vmem:[#allocation2 + $0x30] sm:$0xff] %v326
    %373 = vst [vmem:[#allocation2 + $0x38] sm:$0xff] %v328
    %374 = vst [vmem:[#allocation2 + $0x40] sm:$0xff] %v219
    %375 = vst [vmem:[#allocation2 + $0x48] sm:$0xff] %v221
    %376 = vst [vmem:[#allocation2 + $0x50] sm:$0xff] %v332
    %377 = vst [vmem:[#allocation2 + $0x58] sm:$0xff] %v334
    %378 = vst [vmem:[#allocation2 + $0x60] sm:$0xff] %v225
    %379 = vst [vmem:[#allocation2 + $0x68] sm:$0xff] %v227
    %380 = vst [vmem:[#allocation2 + $0x70] sm:$0xff] %v338
    %381 = vst [vmem:[#allocation2 + $0x78] sm:$0xff] %v340
    %382 = vst [vmem:[#allocation2 + $0x80] sm:$0xff] %v231
    %383 = vst [vmem:[#allocation2 + $0x88] sm:$0xff] %v233
    %384 = vst [vmem:[#allocation2 + $0x90] sm:$0xff] %v344
    %385 = vst [vmem:[#allocation2 + $0x98] sm:$0xff] %v346
    %386 = vst [vmem:[#allocation2 + $0xa0] sm:$0xff] %v237
    %387 = vst [vmem:[#allocation2 + $0xa8] sm:$0xff] %v239
    %388 = vst [vmem:[#allocation2 + $0xb0] sm:$0xff] %v350
    %389 = vst [vmem:[#allocation2 + $0xb8] sm:$0xff] %v352
    %390 = vst [vmem:[#allocation2 + $0xc0] sm:$0xff] %v243
    %391 = vst [vmem:[#allocation2 + $0xc8] sm:$0xff] %v245
    %392 = vst [vmem:[#allocation2 + $0xd0] sm:$0xff] %v356
    %393 = vst [vmem:[#allocation2 + $0xd8] sm:$0xff] %v358
    %394 = vst [vmem:[#allocation2 + $0xe0] sm:$0xff] %v249
    %395 = vst [vmem:[#allocation2 + $0xe8] sm:$0xff] %v251
    %396 = vst [vmem:[#allocation2 + $0xf0] sm:$0xff] %v362
    %397 = vst [vmem:[#allocation2 + $0xf8] sm:$0xff] %v364
    %v398 = vld [vmem:[#allocation4] sm:$0xff]
    %v399 = vld [vmem:[#allocation5] sm:$0xff]
    %s400 = smul.u32 0, 4
    %s401 = smul.addr %s400, 8
    %s402 = scalar_lea.vmem [#allocation2], %s401
    %v403 = vld [vmem:[%s402] sm:$0xff]
    %v404 = vld [vmem:[%s402 + $0x8] sm:$0xff]
    %v405 = vld [vmem:[%s402 + $0x10] sm:$0xff]
    %v406 = vld [vmem:[%s402 + $0x18] sm:$0xff]
    %v407 = vld [vmem:[#allocation6] sm:$0xff]
    %v408 = vld [vmem:[#allocation6 + $0x8] sm:$0xff]
    %v409 = vld [vmem:[#allocation6 + $0x10] sm:$0xff]
    %v410 = vld [vmem:[#allocation6 + $0x18] sm:$0xff]
    %v411 = vld [vmem:[#allocation6 + $0x20] sm:$0xff]
    %v412 = vld [vmem:[#allocation6 + $0x28] sm:$0xff]
    %v413 = vld [vmem:[#allocation6 + $0x30] sm:$0xff]
    %v414 = vld [vmem:[#allocation6 + $0x38] sm:$0xff]
    %v415 = vld [vmem:[#allocation6 + $0x40] sm:$0xff]
    %v416 = vld [vmem:[#allocation6 + $0x48] sm:$0xff]
    %v417 = vld [vmem:[#allocation6 + $0x50] sm:$0xff]
    %v418 = vld [vmem:[#allocation6 + $0x58] sm:$0xff]
    %v419 = vld [vmem:[#allocation6 + $0x60] sm:$0xff]
    %v420 = vld [vmem:[#allocation6 + $0x68] sm:$0xff]
    %v421 = vld [vmem:[#allocation6 + $0x70] sm:$0xff]
    %v422 = vld [vmem:[#allocation6 + $0x78] sm:$0xff]
    %v423 = vld [vmem:[#allocation6 + $0x80] sm:$0xff]
    %v424 = vld [vmem:[#allocation6 + $0x88] sm:$0xff]
    %v425 = vld [vmem:[#allocation6 + $0x90] sm:$0xff]
    %v426 = vld [vmem:[#allocation6 + $0x98] sm:$0xff]
    %v427 = vld [vmem:[#allocation6 + $0xa0] sm:$0xff]
    %v428 = vld [vmem:[#allocation6 + $0xa8] sm:$0xff]
    %v429 = vld [vmem:[#allocation6 + $0xb0] sm:$0xff]
    %v430 = vld [vmem:[#allocation6 + $0xb8] sm:$0xff]
    %v431 = vld [vmem:[#allocation6 + $0xc0] sm:$0xff]
    %v432 = vld [vmem:[#allocation6 + $0xc8] sm:$0xff]
    %v433 = vld [vmem:[#allocation6 + $0xd0] sm:$0xff]
    %v434 = vld [vmem:[#allocation6 + $0xd8] sm:$0xff]
    %v435 = vld [vmem:[#allocation6 + $0xe0] sm:$0xff]
    %v436 = vld [vmem:[#allocation6 + $0xe8] sm:$0xff]
    %v437 = vld [vmem:[#allocation6 + $0xf0] sm:$0xff]
    %v438 = vld [vmem:[#allocation6 + $0xf8] sm:$0xff]
    %v439 = vld [vmem:[#allocation6 + $0x100] sm:$0xff]
    %v440 = vld [vmem:[#allocation6 + $0x108] sm:$0xff]
    %v441 = vld [vmem:[#allocation6 + $0x110] sm:$0xff]
    %v442 = vld [vmem:[#allocation6 + $0x118] sm:$0xff]
    %v443 = vld [vmem:[#allocation6 + $0x120] sm:$0xff]
    %v444 = vld [vmem:[#allocation6 + $0x128] sm:$0xff]
    %v445 = vld [vmem:[#allocation6 + $0x130] sm:$0xff]
    %v446 = vld [vmem:[#allocation6 + $0x138] sm:$0xff]
    %v447 = vld [vmem:[#allocation6 + $0x140] sm:$0xff]
    %v448 = vld [vmem:[#allocation6 + $0x148] sm:$0xff]
    %v449 = vld [vmem:[#allocation6 + $0x150] sm:$0xff]
    %v450 = vld [vmem:[#allocation6 + $0x158] sm:$0xff]
    %v451 = vld [vmem:[#allocation6 + $0x160] sm:$0xff]
    %v452 = vld [vmem:[#allocation6 + $0x168] sm:$0xff]
    %v453 = vld [vmem:[#allocation6 + $0x170] sm:$0xff]
    %v454 = vld [vmem:[#allocation6 + $0x178] sm:$0xff]
    %v455 = vld [vmem:[#allocation6 + $0x180] sm:$0xff]
    %v456 = vld [vmem:[#allocation6 + $0x188] sm:$0xff]
    %v457 = vld [vmem:[#allocation6 + $0x190] sm:$0xff]
    %v458 = vld [vmem:[#allocation6 + $0x198] sm:$0xff]
    %v459 = vld [vmem:[#allocation6 + $0x1a0] sm:$0xff]
    %v460 = vld [vmem:[#allocation6 + $0x1a8] sm:$0xff]
    %v461 = vld [vmem:[#allocation6 + $0x1b0] sm:$0xff]
    %v462 = vld [vmem:[#allocation6 + $0x1b8] sm:$0xff]
    %v463 = vld [vmem:[#allocation6 + $0x1c0] sm:$0xff]
    %v464 = vld [vmem:[#allocation6 + $0x1c8] sm:$0xff]
    %v465 = vld [vmem:[#allocation6 + $0x1d0] sm:$0xff]
    %v466 = vld [vmem:[#allocation6 + $0x1d8] sm:$0xff]
    %v467 = vld [vmem:[#allocation6 + $0x1e0] sm:$0xff]
    %v468 = vld [vmem:[#allocation6 + $0x1e8] sm:$0xff]
    %v469 = vld [vmem:[#allocation6 + $0x1f0] sm:$0xff]
    %v470 = vld [vmem:[#allocation6 + $0x1f8] sm:$0xff]
    %471 = vmatprep.subr.mxu0 %v408
    %472 = vmatpush1.msra.mxu0 %v407
    %473 = vmatprep.subr.mxu0 %v412
    %474 = vmatpush1.msra.mxu0 %v411
    %475 = vmatprep.subr.mxu0 %v416
    %476 = vmatpush1.msra.mxu0 %v415
    %477 = vmatprep.subr.mxu0 %v420
    %478 = vmatpush1.msra.mxu0 %v419
    %479 = vmatprep.subr.mxu0 %v424
    %480 = vmatpush1.msra.mxu0 %v423
    %481 = vmatprep.subr.mxu0 %v428
    %482 = vmatpush1.msra.mxu0 %v427
    %483 = vmatprep.subr.mxu0 %v432
    %484 = vmatpush1.msra.mxu0 %v431
    %485 = vmatprep.subr.mxu0 %v436
    %486 = vmatpush1.msra.mxu0 %v435
    %487 = vmatprep.subr.mxu0 %v440
    %488 = vmatpush1.msra.mxu0 %v439
    %489 = vmatprep.subr.mxu0 %v444
    %490 = vmatpush1.msra.mxu0 %v443
    %491 = vmatprep.subr.mxu0 %v448
    %492 = vmatpush1.msra.mxu0 %v447
    %493 = vmatprep.subr.mxu0 %v452
    %494 = vmatpush1.msra.mxu0 %v451
    %495 = vmatprep.subr.mxu0 %v456
    %496 = vmatpush1.msra.mxu0 %v455
    %497 = vmatprep.subr.mxu0 %v460
    %498 = vmatpush1.msra.mxu0 %v459
    %499 = vmatprep.subr.mxu0 %v464
    %500 = vmatpush1.msra.mxu0 %v463
    %501 = vmatprep.subr.mxu0 %v468
    %502 = vmatpush1.msra.mxu0 %v467
    %503 = vmatprep.subr.mxu0 0.0
    %504 = vmatpush1.msra.mxu0 0.0
    %505 = vmatprep.subr.mxu0 0.0
    %506 = vmatpush1.msra.mxu0 0.0
    %507 = vmatprep.subr.mxu0 0.0
    %508 = vmatpush1.msra.mxu0 0.0
    %509 = vmatprep.subr.mxu0 0.0
    %510 = vmatpush1.msra.mxu0 0.0
    %511 = vmatprep.subr.mxu0 0.0
    %512 = vmatpush1.msra.mxu0 0.0
    %513 = vmatprep.subr.mxu0 0.0
    %514 = vmatpush1.msra.mxu0 0.0
    %515 = vmatprep.subr.mxu0 0.0
    %516 = vmatpush1.msra.mxu0 0.0
    %517 = vmatprep.subr.mxu0 0.0
    %518 = vmatpush1.msra.mxu0 0.0
    %519 = vmatprep.subr.mxu0 0.0
    %520 = vmatpush1.msra.mxu0 0.0
    %521 = vmatprep.subr.mxu0 0.0
    %522 = vmatpush1.msra.mxu0 0.0
    %523 = vmatprep.subr.mxu0 0.0
    %524 = vmatpush1.msra.mxu0 0.0
    %525 = vmatprep.subr.mxu0 0.0
    %526 = vmatpush1.msra.mxu0 0.0
    %527 = vmatprep.subr.mxu0 0.0
    %528 = vmatpush1.msra.mxu0 0.0
    %529 = vmatprep.subr.mxu0 0.0
    %530 = vmatpush1.msra.mxu0 0.0
    %531 = vmatprep.subr.mxu0 0.0
    %532 = vmatpush1.msra.mxu0 0.0
    %533 = vmatprep.subr.mxu0 0.0
    %534 = vmatpush1.msra.mxu0 0.0
    %535 = vmatprep.mubr.f32.mxu0 0.0
    %536 = vmatmul.mubr.f32.gmra.mrb[0].mxu0 %v398
    %v537 = vpop.f32.mrb[0].mxu0
    %v538 = vadd.f32 0.0, %v537
    %v539 = vpop.f32.mrb[0].mxu0
    %v540 = vadd.f32 0.0, %v539
    %541 = vdwg.mxu0
    %542 = vmatprep.subr.mxu0 %v410
    %543 = vmatpush1.msra.mxu0 %v409
    %544 = vmatprep.subr.mxu0 %v414
    %545 = vmatpush1.msra.mxu0 %v413
    %546 = vmatprep.subr.mxu0 %v418
    %547 = vmatpush1.msra.mxu0 %v417
    %548 = vmatprep.subr.mxu0 %v422
    %549 = vmatpush1.msra.mxu0 %v421
    %550 = vmatprep.subr.mxu0 %v426
    %551 = vmatpush1.msra.mxu0 %v425
    %552 = vmatprep.subr.mxu0 %v430
    %553 = vmatpush1.msra.mxu0 %v429
    %554 = vmatprep.subr.mxu0 %v434
    %555 = vmatpush1.msra.mxu0 %v433
    %556 = vmatprep.subr.mxu0 %v438
    %557 = vmatpush1.msra.mxu0 %v437
    %558 = vmatprep.subr.mxu0 %v442
    %559 = vmatpush1.msra.mxu0 %v441
    %560 = vmatprep.subr.mxu0 %v446
    %561 = vmatpush1.msra.mxu0 %v445
    %562 = vmatprep.subr.mxu0 %v450
    %563 = vmatpush1.msra.mxu0 %v449
    %564 = vmatprep.subr.mxu0 %v454
    %565 = vmatpush1.msra.mxu0 %v453
    %566 = vmatprep.subr.mxu0 %v458
    %567 = vmatpush1.msra.mxu0 %v457
    %568 = vmatprep.subr.mxu0 %v462
    %569 = vmatpush1.msra.mxu0 %v461
    %570 = vmatprep.subr.mxu0 %v466
    %571 = vmatpush1.msra.mxu0 %v465
    %572 = vmatprep.subr.mxu0 %v470
    %573 = vmatpush1.msra.mxu0 %v469
    %574 = vmatprep.subr.mxu0 0.0
    %575 = vmatpush1.msra.mxu0 0.0
    %576 = vmatprep.subr.mxu0 0.0
    %577 = vmatpush1.msra.mxu0 0.0
    %578 = vmatprep.subr.mxu0 0.0
    %579 = vmatpush1.msra.mxu0 0.0
    %580 = vmatprep.subr.mxu0 0.0
    %581 = vmatpush1.msra.mxu0 0.0
    %582 = vmatprep.subr.mxu0 0.0
    %583 = vmatpush1.msra.mxu0 0.0
    %584 = vmatprep.subr.mxu0 0.0
    %585 = vmatpush1.msra.mxu0 0.0
    %586 = vmatprep.subr.mxu0 0.0
    %587 = vmatpush1.msra.mxu0 0.0
    %588 = vmatprep.subr.mxu0 0.0
    %589 = vmatpush1.msra.mxu0 0.0
    %590 = vmatprep.subr.mxu0 0.0
    %591 = vmatpush1.msra.mxu0 0.0
    %592 = vmatprep.subr.mxu0 0.0
    %593 = vmatpush1.msra.mxu0 0.0
    %594 = vmatprep.subr.mxu0 0.0
    %595 = vmatpush1.msra.mxu0 0.0
    %596 = vmatprep.subr.mxu0 0.0
    %597 = vmatpush1.msra.mxu0 0.0
    %598 = vmatprep.subr.mxu0 0.0
    %599 = vmatpush1.msra.mxu0 0.0
    %600 = vmatprep.subr.mxu0 0.0
    %601 = vmatpush1.msra.mxu0 0.0
    %602 = vmatprep.subr.mxu0 0.0
    %603 = vmatpush1.msra.mxu0 0.0
    %604 = vmatprep.subr.mxu0 0.0
    %605 = vmatpush1.msra.mxu0 0.0
    %606 = vmatprep.mubr.f32.mxu0 0.0
    %607 = vmatmul.mubr.f32.gmra.mrb[0].mxu0 %v398
    %v608 = vpop.f32.mrb[0].mxu0
    %v609 = vadd.f32 0.0, %v608
    %v610 = vpop.f32.mrb[0].mxu0
    %v611 = vadd.f32 0.0, %v610
    %612 = vdwg.mxu0
    %v613 = vadd.f32 %v403, %v538
    %v614 = vadd.f32 %v404, %v540
    %v615 = vadd.f32 %v405, %v609
    %v616 = vadd.f32 %v406, %v611
    %v617 = vtanh.pop %v613
    %v618 = vtanh.pop %v614
    %v619 = vtanh.pop %v615
    %v620 = vtanh.pop %v616
    %v621 = vadd.f32 %v617, 1.0
    %v622 = vmul.f32 %v621, 0.5
    %v623 = vadd.f32 %v618, 1.0
    %v624 = vmul.f32 %v623, 0.5
    %v625 = vadd.f32 %v619, 1.0
    %v626 = vmul.f32 %v625, 0.5
    %v627 = vmul.f32 %v624, %v399
    %v628 = vmul.f32 %v622, %v620
    %v629 = vadd.f32 %v627, %v628
    %v630 = vtanh.pop %v629
    %v631 = vmul.f32 %v626, %v630
    %632 = vst [vmem:[#allocation3] sm:$0xff] %v631
    %s633 = smul.u32 1, 4
    %s634 = smul.addr %s633, 8
    %s635 = scalar_lea.vmem [#allocation2], %s634
    %v636 = vld [vmem:[%s635] sm:$0xff]
    %v637 = vld [vmem:[%s635 + $0x8] sm:$0xff]
    %v638 = vld [vmem:[%s635 + $0x10] sm:$0xff]
    %v639 = vld [vmem:[%s635 + $0x18] sm:$0xff]
    %v640 = vld [vmem:[#allocation6] sm:$0xff]
    %v641 = vld [vmem:[#allocation6 + $0x8] sm:$0xff]
    %v642 = vld [vmem:[#allocation6 + $0x10] sm:$0xff]
    %v643 = vld [vmem:[#allocation6 + $0x18] sm:$0xff]
    %v644 = vld [vmem:[#allocation6 + $0x20] sm:$0xff]
    %v645 = vld [vmem:[#allocation6 + $0x28] sm:$0xff]
    %v646 = vld [vmem:[#allocation6 + $0x30] sm:$0xff]
    %v647 = vld [vmem:[#allocation6 + $0x38] sm:$0xff]
    %v648 = vld [vmem:[#allocation6 + $0x40] sm:$0xff]
    %v649 = vld [vmem:[#allocation6 + $0x48] sm:$0xff]
    %v650 = vld [vmem:[#allocation6 + $0x50] sm:$0xff]
    %v651 = vld [vmem:[#allocation6 + $0x58] sm:$0xff]
    %v652 = vld [vmem:[#allocation6 + $0x60] sm:$0xff]
    %v653 = vld [vmem:[#allocation6 + $0x68] sm:$0xff]
    %v654 = vld [vmem:[#allocation6 + $0x70] sm:$0xff]
    %v655 = vld [vmem:[#allocation6 + $0x78] sm:$0xff]
    %v656 = vld [vmem:[#allocation6 + $0x80] sm:$0xff]
    %v657 = vld [vmem:[#allocation6 + $0x88] sm:$0xff]
    %v658 = vld [vmem:[#allocation6 + $0x90] sm:$0xff]
    %v659 = vld [vmem:[#allocation6 + $0x98] sm:$0xff]
    %v660 = vld [vmem:[#allocation6 + $0xa0] sm:$0xff]
    %v661 = vld [vmem:[#allocation6 + $0xa8] sm:$0xff]
    %v662 = vld [vmem:[#allocation6 + $0xb0] sm:$0xff]
    %v663 = vld [vmem:[#allocation6 + $0xb8] sm:$0xff]
    %v664 = vld [vmem:[#allocation6 + $0xc0] sm:$0xff]
    %v665 = vld [vmem:[#allocation6 + $0xc8] sm:$0xff]
    %v666 = vld [vmem:[#allocation6 + $0xd0] sm:$0xff]
    %v667 = vld [vmem:[#allocation6 + $0xd8] sm:$0xff]
    %v668 = vld [vmem:[#allocation6 + $0xe0] sm:$0xff]
    %v669 = vld [vmem:[#allocation6 + $0xe8] sm:$0xff]
    %v670 = vld [vmem:[#allocation6 + $0xf0] sm:$0xff]
    %v671 = vld [vmem:[#allocation6 + $0xf8] sm:$0xff]
    %v672 = vld [vmem:[#allocation6 + $0x100] sm:$0xff]
    %v673 = vld [vmem:[#allocation6 + $0x108] sm:$0xff]
    %v674 = vld [vmem:[#allocation6 + $0x110] sm:$0xff]
    %v675 = vld [vmem:[#allocation6 + $0x118] sm:$0xff]
    %v676 = vld [vmem:[#allocation6 + $0x120] sm:$0xff]
    %v677 = vld [vmem:[#allocation6 + $0x128] sm:$0xff]
    %v678 = vld [vmem:[#allocation6 + $0x130] sm:$0xff]
    %v679 = vld [vmem:[#allocation6 + $0x138] sm:$0xff]
    %v680 = vld [vmem:[#allocation6 + $0x140] sm:$0xff]
    %v681 = vld [vmem:[#allocation6 + $0x148] sm:$0xff]
    %v682 = vld [vmem:[#allocation6 + $0x150] sm:$0xff]
    %v683 = vld [vmem:[#allocation6 + $0x158] sm:$0xff]
    %v684 = vld [vmem:[#allocation6 + $0x160] sm:$0xff]
    %v685 = vld [vmem:[#allocation6 + $0x168] sm:$0xff]
    %v686 = vld [vmem:[#allocation6 + $0x170] sm:$0xff]
    %v687 = vld [vmem:[#allocation6 + $0x178] sm:$0xff]
    %v688 = vld [vmem:[#allocation6 + $0x180] sm:$0xff]
    %v689 = vld [vmem:[#allocation6 + $0x188] sm:$0xff]
    %v690 = vld [vmem:[#allocation6 + $0x190] sm:$0xff]
    %v691 = vld [vmem:[#allocation6 + $0x198] sm:$0xff]
    %v692 = vld [vmem:[#allocation6 + $0x1a0] sm:$0xff]
    %v693 = vld [vmem:[#allocation6 + $0x1a8] sm:$0xff]
    %v694 = vld [vmem:[#allocation6 + $0x1b0] sm:$0xff]
    %v695 = vld [vmem:[#allocation6 + $0x1b8] sm:$0xff]
    %v696 = vld [vmem:[#allocation6 + $0x1c0] sm:$0xff]
    %v697 = vld [vmem:[#allocation6 + $0x1c8] sm:$0xff]
    %v698 = vld [vmem:[#allocation6 + $0x1d0] sm:$0xff]
    %v699 = vld [vmem:[#allocation6 + $0x1d8] sm:$0xff]
    %v700 = vld [vmem:[#allocation6 + $0x1e0] sm:$0xff]
    %v701 = vld [vmem:[#allocation6 + $0x1e8] sm:$0xff]
    %v702 = vld [vmem:[#allocation6 + $0x1f0] sm:$0xff]
    %v703 = vld [vmem:[#allocation6 + $0x1f8] sm:$0xff]
    %704 = vmatprep.subr.mxu0 %v641
    %705 = vmatpush1.msra.mxu0 %v640
    %706 = vmatprep.subr.mxu0 %v645
    %707 = vmatpush1.msra.mxu0 %v644
    %708 = vmatprep.subr.mxu0 %v649
    %709 = vmatpush1.msra.mxu0 %v648
    %710 = vmatprep.subr.mxu0 %v653
    %711 = vmatpush1.msra.mxu0 %v652
    %712 = vmatprep.subr.mxu0 %v657
    %713 = vmatpush1.msra.mxu0 %v656
    %714 = vmatprep.subr.mxu0 %v661
    %715 = vmatpush1.msra.mxu0 %v660
    %716 = vmatprep.subr.mxu0 %v665
    %717 = vmatpush1.msra.mxu0 %v664
    %718 = vmatprep.subr.mxu0 %v669
    %719 = vmatpush1.msra.mxu0 %v668
    %720 = vmatprep.subr.mxu0 %v673
    %721 = vmatpush1.msra.mxu0 %v672
    %722 = vmatprep.subr.mxu0 %v677
    %723 = vmatpush1.msra.mxu0 %v676
    %724 = vmatprep.subr.mxu0 %v681
    %725 = vmatpush1.msra.mxu0 %v680
    %726 = vmatprep.subr.mxu0 %v685
    %727 = vmatpush1.msra.mxu0 %v684
    %728 = vmatprep.subr.mxu0 %v689
    %729 = vmatpush1.msra.mxu0 %v688
    %730 = vmatprep.subr.mxu0 %v693
    %731 = vmatpush1.msra.mxu0 %v692
    %732 = vmatprep.subr.mxu0 %v697
    %733 = vmatpush1.msra.mxu0 %v696
    %734 = vmatprep.subr.mxu0 %v701
    %735 = vmatpush1.msra.mxu0 %v700
    %736 = vmatprep.subr.mxu0 0.0
    %737 = vmatpush1.msra.mxu0 0.0
    %738 = vmatprep.subr.mxu0 0.0
    %739 = vmatpush1.msra.mxu0 0.0
    %740 = vmatprep.subr.mxu0 0.0
    %741 = vmatpush1.msra.mxu0 0.0
    %742 = vmatprep.subr.mxu0 0.0
    %743 = vmatpush1.msra.mxu0 0.0
    %744 = vmatprep.subr.mxu0 0.0
    %745 = vmatpush1.msra.mxu0 0.0
    %746 = vmatprep.subr.mxu0 0.0
    %747 = vmatpush1.msra.mxu0 0.0
    %748 = vmatprep.subr.mxu0 0.0
    %749 = vmatpush1.msra.mxu0 0.0
    %750 = vmatprep.subr.mxu0 0.0
    %751 = vmatpush1.msra.mxu0 0.0
    %752 = vmatprep.subr.mxu0 0.0
    %753 = vmatpush1.msra.mxu0 0.0
    %754 = vmatprep.subr.mxu0 0.0
    %755 = vmatpush1.msra.mxu0 0.0
    %756 = vmatprep.subr.mxu0 0.0
    %757 = vmatpush1.msra.mxu0 0.0
    %758 = vmatprep.subr.mxu0 0.0
    %759 = vmatpush1.msra.mxu0 0.0
    %760 = vmatprep.subr.mxu0 0.0
    %761 = vmatpush1.msra.mxu0 0.0
    %762 = vmatprep.subr.mxu0 0.0
    %763 = vmatpush1.msra.mxu0 0.0
    %764 = vmatprep.subr.mxu0 0.0
    %765 = vmatpush1.msra.mxu0 0.0
    %766 = vmatprep.subr.mxu0 0.0
    %767 = vmatpush1.msra.mxu0 0.0
    %768 = vmatprep.mubr.f32.mxu0 0.0
    %769 = vmatmul.mubr.f32.gmra.mrb[0].mxu0 %v631
    %v770 = vpop.f32.mrb[0].mxu0
    %v771 = vadd.f32 0.0, %v770
    %v772 = vpop.f32.mrb[0].mxu0
    %v773 = vadd.f32 0.0, %v772
    %774 = vdwg.mxu0
    %775 = vmatprep.subr.mxu0 %v643
    %776 = vmatpush1.msra.mxu0 %v642
    %777 = vmatprep.subr.mxu0 %v647
    %778 = vmatpush1.msra.mxu0 %v646
    %779 = vmatprep.subr.mxu0 %v651
    %780 = vmatpush1.msra.mxu0 %v650
    %781 = vmatprep.subr.mxu0 %v655
    %782 = vmatpush1.msra.mxu0 %v654
    %783 = vmatprep.subr.mxu0 %v659
    %784 = vmatpush1.msra.mxu0 %v658
    %785 = vmatprep.subr.mxu0 %v663
    %786 = vmatpush1.msra.mxu0 %v662
    %787 = vmatprep.subr.mxu0 %v667
    %788 = vmatpush1.msra.mxu0 %v666
    %789 = vmatprep.subr.mxu0 %v671
    %790 = vmatpush1.msra.mxu0 %v670
    %791 = vmatprep.subr.mxu0 %v675
    %792 = vmatpush1.msra.mxu0 %v674
    %793 = vmatprep.subr.mxu0 %v679
    %794 = vmatpush1.msra.mxu0 %v678
    %795 = vmatprep.subr.mxu0 %v683
    %796 = vmatpush1.msra.mxu0 %v682
    %797 = vmatprep.subr.mxu0 %v687
    %798 = vmatpush1.msra.mxu0 %v686
    %799 = vmatprep.subr.mxu0 %v691
    %800 = vmatpush1.msra.mxu0 %v690
    %801 = vmatprep.subr.mxu0 %v695
    %802 = vmatpush1.msra.mxu0 %v694
    %803 = vmatprep.subr.mxu0 %v699
    %804 = vmatpush1.msra.mxu0 %v698
    %805 = vmatprep.subr.mxu0 %v703
    %806 = vmatpush1.msra.mxu0 %v702
    %807 = vmatprep.subr.mxu0 0.0
    %808 = vmatpush1.msra.mxu0 0.0
    %809 = vmatprep.subr.mxu0 0.0
    %810 = vmatpush1.msra.mxu0 0.0
    %811 = vmatprep.subr.mxu0 0.0
    %812 = vmatpush1.msra.mxu0 0.0
    %813 = vmatprep.subr.mxu0 0.0
    %814 = vmatpush1.msra.mxu0 0.0
    %815 = vmatprep.subr.mxu0 0.0
    %816 = vmatpush1.msra.mxu0 0.0
    %817 = vmatprep.subr.mxu0 0.0
    %818 = vmatpush1.msra.mxu0 0.0
    %819 = vmatprep.subr.mxu0 0.0
    %820 = vmatpush1.msra.mxu0 0.0
    %821 = vmatprep.subr.mxu0 0.0
    %822 = vmatpush1.msra.mxu0 0.0
    %823 = vmatprep.subr.mxu0 0.0
    %824 = vmatpush1.msra.mxu0 0.0
    %825 = vmatprep.subr.mxu0 0.0
    %826 = vmatpush1.msra.mxu0 0.0
    %827 = vmatprep.subr.mxu0 0.0
    %828 = vmatpush1.msra.mxu0 0.0
    %829 = vmatprep.subr.mxu0 0.0
    %830 = vmatpush1.msra.mxu0 0.0
    %831 = vmatprep.subr.mxu0 0.0
    %832 = vmatpush1.msra.mxu0 0.0
    %833 = vmatprep.subr.mxu0 0.0
    %834 = vmatpush1.msra.mxu0 0.0
    %835 = vmatprep.subr.mxu0 0.0
    %836 = vmatpush1.msra.mxu0 0.0
    %837 = vmatprep.subr.mxu0 0.0
    %838 = vmatpush1.msra.mxu0 0.0
    %839 = vmatprep.mubr.f32.mxu0 0.0
    %840 = vmatmul.mubr.f32.gmra.mrb[0].mxu0 %v631
    %v841 = vpop.f32.mrb[0].mxu0
    %v842 = vadd.f32 0.0, %v841
    %v843 = vpop.f32.mrb[0].mxu0
    %v844 = vadd.f32 0.0, %v843
    %845 = vdwg.mxu0
    %v846 = vadd.f32 %v636, %v771
    %v847 = vadd.f32 %v637, %v773
    %v848 = vadd.f32 %v638, %v842
    %v849 = vadd.f32 %v639, %v844
    %v850 = vtanh.pop %v846
    %v851 = vtanh.pop %v847
    %v852 = vtanh.pop %v848
    %v853 = vtanh.pop %v849
    %v854 = vadd.f32 %v850, 1.0
    %v855 = vmul.f32 %v854, 0.5
    %v856 = vadd.f32 %v851, 1.0
    %v857 = vmul.f32 %v856, 0.5
    %v858 = vadd.f32 %v852, 1.0
    %v859 = vmul.f32 %v858, 0.5
    %v860 = vmul.f32 %v857, %v629
    %v861 = vmul.f32 %v855, %v853
    %v862 = vadd.f32 %v860, %v861
    %v863 = vtanh.pop %v862
    %v864 = vmul.f32 %v859, %v863
    %s865 = scalar_lea.vmem [#allocation3], 8
    %866 = vst [vmem:[%s865] sm:$0xff] %v864
    %s867 = smul.u32 2, 4
    %s868 = smul.addr %s867, 8
    %s869 = scalar_lea.vmem [#allocation2], %s868
    %v870 = vld [vmem:[%s869] sm:$0xff]
    %v871 = vld [vmem:[%s869 + $0x8] sm:$0xff]
    %v872 = vld [vmem:[%s869 + $0x10] sm:$0xff]
    %v873 = vld [vmem:[%s869 + $0x18] sm:$0xff]
    %v874 = vld [vmem:[#allocation6] sm:$0xff]
    %v875 = vld [vmem:[#allocation6 + $0x8] sm:$0xff]
    %v876 = vld [vmem:[#allocation6 + $0x10] sm:$0xff]
    %v877 = vld [vmem:[#allocation6 + $0x18] sm:$0xff]
    %v878 = vld [vmem:[#allocation6 + $0x20] sm:$0xff]
    %v879 = vld [vmem:[#allocation6 + $0x28] sm:$0xff]
    %v880 = vld [vmem:[#allocation6 + $0x30] sm:$0xff]
    %v881 = vld [vmem:[#allocation6 + $0x38] sm:$0xff]
    %v882 = vld [vmem:[#allocation6 + $0x40] sm:$0xff]
    %v883 = vld [vmem:[#allocation6 + $0x48] sm:$0xff]
    %v884 = vld [vmem:[#allocation6 + $0x50] sm:$0xff]
    %v885 = vld [vmem:[#allocation6 + $0x58] sm:$0xff]
    %v886 = vld [vmem:[#allocation6 + $0x60] sm:$0xff]
    %v887 = vld [vmem:[#allocation6 + $0x68] sm:$0xff]
    %v888 = vld [vmem:[#allocation6 + $0x70] sm:$0xff]
    %v889 = vld [vmem:[#allocation6 + $0x78] sm:$0xff]
    %v890 = vld [vmem:[#allocation6 + $0x80] sm:$0xff]
    %v891 = vld [vmem:[#allocation6 + $0x88] sm:$0xff]
    %v892 = vld [vmem:[#allocation6 + $0x90] sm:$0xff]
    %v893 = vld [vmem:[#allocation6 + $0x98] sm:$0xff]
    %v894 = vld [vmem:[#allocation6 + $0xa0] sm:$0xff]
    %v895 = vld [vmem:[#allocation6 + $0xa8] sm:$0xff]
    %v896 = vld [vmem:[#allocation6 + $0xb0] sm:$0xff]
    %v897 = vld [vmem:[#allocation6 + $0xb8] sm:$0xff]
    %v898 = vld [vmem:[#allocation6 + $0xc0] sm:$0xff]
    %v899 = vld [vmem:[#allocation6 + $0xc8] sm:$0xff]
    %v900 = vld [vmem:[#allocation6 + $0xd0] sm:$0xff]
    %v901 = vld [vmem:[#allocation6 + $0xd8] sm:$0xff]
    %v902 = vld [vmem:[#allocation6 + $0xe0] sm:$0xff]
    %v903 = vld [vmem:[#allocation6 + $0xe8] sm:$0xff]
    %v904 = vld [vmem:[#allocation6 + $0xf0] sm:$0xff]
    %v905 = vld [vmem:[#allocation6 + $0xf8] sm:$0xff]
    %v906 = vld [vmem:[#allocation6 + $0x100] sm:$0xff]
    %v907 = vld [vmem:[#allocation6 + $0x108] sm:$0xff]
    %v908 = vld [vmem:[#allocation6 + $0x110] sm:$0xff]
    %v909 = vld [vmem:[#allocation6 + $0x118] sm:$0xff]
    %v910 = vld [vmem:[#allocation6 + $0x120] sm:$0xff]
    %v911 = vld [vmem:[#allocation6 + $0x128] sm:$0xff]
    %v912 = vld [vmem:[#allocation6 + $0x130] sm:$0xff]
    %v913 = vld [vmem:[#allocation6 + $0x138] sm:$0xff]
    %v914 = vld [vmem:[#allocation6 + $0x140] sm:$0xff]
    %v915 = vld [vmem:[#allocation6 + $0x148] sm:$0xff]
    %v916 = vld [vmem:[#allocation6 + $0x150] sm:$0xff]
    %v917 = vld [vmem:[#allocation6 + $0x158] sm:$0xff]
    %v918 = vld [vmem:[#allocation6 + $0x160] sm:$0xff]
    %v919 = vld [vmem:[#allocation6 + $0x168] sm:$0xff]
    %v920 = vld [vmem:[#allocation6 + $0x170] sm:$0xff]
    %v921 = vld [vmem:[#allocation6 + $0x178] sm:$0xff]
    %v922 = vld [vmem:[#allocation6 + $0x180] sm:$0xff]
    %v923 = vld [vmem:[#allocation6 + $0x188] sm:$0xff]
    %v924 = vld [vmem:[#allocation6 + $0x190] sm:$0xff]
    %v925 = vld [vmem:[#allocation6 + $0x198] sm:$0xff]
    %v926 = vld [vmem:[#allocation6 + $0x1a0] sm:$0xff]
    %v927 = vld [vmem:[#allocation6 + $0x1a8] sm:$0xff]
    %v928 = vld [vmem:[#allocation6 + $0x1b0] sm:$0xff]
    %v929 = vld [vmem:[#allocation6 + $0x1b8] sm:$0xff]
    %v930 = vld [vmem:[#allocation6 + $0x1c0] sm:$0xff]
    %v931 = vld [vmem:[#allocation6 + $0x1c8] sm:$0xff]
    %v932 = vld [vmem:[#allocation6 + $0x1d0] sm:$0xff]
    %v933 = vld [vmem:[#allocation6 + $0x1d8] sm:$0xff]
    %v934 = vld [vmem:[#allocation6 + $0x1e0] sm:$0xff]
    %v935 = vld [vmem:[#allocation6 + $0x1e8] sm:$0xff]
    %v936 = vld [vmem:[#allocation6 + $0x1f0] sm:$0xff]
    %v937 = vld [vmem:[#allocation6 + $0x1f8] sm:$0xff]
    %938 = vmatprep.subr.mxu0 %v875
    %939 = vmatpush1.msra.mxu0 %v874
    %940 = vmatprep.subr.mxu0 %v879
    %941 = vmatpush1.msra.mxu0 %v878
    %942 = vmatprep.subr.mxu0 %v883
    %943 = vmatpush1.msra.mxu0 %v882
    %944 = vmatprep.subr.mxu0 %v887
    %945 = vmatpush1.msra.mxu0 %v886
    %946 = vmatprep.subr.mxu0 %v891
    %947 = vmatpush1.msra.mxu0 %v890
    %948 = vmatprep.subr.mxu0 %v895
    %949 = vmatpush1.msra.mxu0 %v894
    %950 = vmatprep.subr.mxu0 %v899
    %951 = vmatpush1.msra.mxu0 %v898
    %952 = vmatprep.subr.mxu0 %v903
    %953 = vmatpush1.msra.mxu0 %v902
    %954 = vmatprep.subr.mxu0 %v907
    %955 = vmatpush1.msra.mxu0 %v906
    %956 = vmatprep.subr.mxu0 %v911
    %957 = vmatpush1.msra.mxu0 %v910
    %958 = vmatprep.subr.mxu0 %v915
    %959 = vmatpush1.msra.mxu0 %v914
    %960 = vmatprep.subr.mxu0 %v919
    %961 = vmatpush1.msra.mxu0 %v918
    %962 = vmatprep.subr.mxu0 %v923
    %963 = vmatpush1.msra.mxu0 %v922
    %964 = vmatprep.subr.mxu0 %v927
    %965 = vmatpush1.msra.mxu0 %v926
    %966 = vmatprep.subr.mxu0 %v931
    %967 = vmatpush1.msra.mxu0 %v930
    %968 = vmatprep.subr.mxu0 %v935
    %969 = vmatpush1.msra.mxu0 %v934
    %970 = vmatprep.subr.mxu0 0.0
    %971 = vmatpush1.msra.mxu0 0.0
    %972 = vmatprep.subr.mxu0 0.0
    %973 = vmatpush1.msra.mxu0 0.0
    %974 = vmatprep.subr.mxu0 0.0
    %975 = vmatpush1.msra.mxu0 0.0
    %976 = vmatprep.subr.mxu0 0.0
    %977 = vmatpush1.msra.mxu0 0.0
    %978 = vmatprep.subr.mxu0 0.0
    %979 = vmatpush1.msra.mxu0 0.0
    %980 = vmatprep.subr.mxu0 0.0
    %981 = vmatpush1.msra.mxu0 0.0
    %982 = vmatprep.subr.mxu0 0.0
    %983 = vmatpush1.msra.mxu0 0.0
    %984 = vmatprep.subr.mxu0 0.0
    %985 = vmatpush1.msra.mxu0 0.0
    %986 = vmatprep.subr.mxu0 0.0
    %987 = vmatpush1.msra.mxu0 0.0
    %988 = vmatprep.subr.mxu0 0.0
    %989 = vmatpush1.msra.mxu0 0.0
    %990 = vmatprep.subr.mxu0 0.0
    %991 = vmatpush1.msra.mxu0 0.0
    %992 = vmatprep.subr.mxu0 0.0
    %993 = vmatpush1.msra.mxu0 0.0
    %994 = vmatprep.subr.mxu0 0.0
    %995 = vmatpush1.msra.mxu0 0.0
    %996 = vmatprep.subr.mxu0 0.0
    %997 = vmatpush1.msra.mxu0 0.0
    %998 = vmatprep.subr.mxu0 0.0
    %999 = vmatpush1.msra.mxu0 0.0
    %1000 = vmatprep.subr.mxu0 0.0
    %1001 = vmatpush1.msra.mxu0 0.0
    %1002 = vmatprep.mubr.f32.mxu0 0.0
    %1003 = vmatmul.mubr.f32.gmra.mrb[0].mxu0 %v864
    %v1004 = vpop.f32.mrb[0].mxu0
    %v1005 = vadd.f32 0.0, %v1004
    %v1006 = vpop.f32.mrb[0].mxu0
    %v1007 = vadd.f32 0.0, %v1006
    %1008 = vdwg.mxu0
    %1009 = vmatprep.subr.mxu0 %v877
    %1010 = vmatpush1.msra.mxu0 %v876
    %1011 = vmatprep.subr.mxu0 %v881
    %1012 = vmatpush1.msra.mxu0 %v880
    %1013 = vmatprep.subr.mxu0 %v885
    %1014 = vmatpush1.msra.mxu0 %v884
    %1015 = vmatprep.subr.mxu0 %v889
    %1016 = vmatpush1.msra.mxu0 %v888
    %1017 = vmatprep.subr.mxu0 %v893
    %1018 = vmatpush1.msra.mxu0 %v892
    %1019 = vmatprep.subr.mxu0 %v897
    %1020 = vmatpush1.msra.mxu0 %v896
    %1021 = vmatprep.subr.mxu0 %v901
    %1022 = vmatpush1.msra.mxu0 %v900
    %1023 = vmatprep.subr.mxu0 %v905
    %1024 = vmatpush1.msra.mxu0 %v904
    %1025 = vmatprep.subr.mxu0 %v909
    %1026 = vmatpush1.msra.mxu0 %v908
    %1027 = vmatprep.subr.mxu0 %v913
    %1028 = vmatpush1.msra.mxu0 %v912
    %1029 = vmatprep.subr.mxu0 %v917
    %1030 = vmatpush1.msra.mxu0 %v916
    %1031 = vmatprep.subr.mxu0 %v921
    %1032 = vmatpush1.msra.mxu0 %v920
    %1033 = vmatprep.subr.mxu0 %v925
    %1034 = vmatpush1.msra.mxu0 %v924
    %1035 = vmatprep.subr.mxu0 %v929
    %1036 = vmatpush1.msra.mxu0 %v928
    %1037 = vmatprep.subr.mxu0 %v933
    %1038 = vmatpush1.msra.mxu0 %v932
    %1039 = vmatprep.subr.mxu0 %v937
    %1040 = vmatpush1.msra.mxu0 %v936
    %1041 = vmatprep.subr.mxu0 0.0
    %1042 = vmatpush1.msra.mxu0 0.0
    %1043 = vmatprep.subr.mxu0 0.0
    %1044 = vmatpush1.msra.mxu0 0.0
    %1045 = vmatprep.subr.mxu0 0.0
    %1046 = vmatpush1.msra.mxu0 0.0
    %1047 = vmatprep.subr.mxu0 0.0
    %1048 = vmatpush1.msra.mxu0 0.0
    %1049 = vmatprep.subr.mxu0 0.0
    %1050 = vmatpush1.msra.mxu0 0.0
    %1051 = vmatprep.subr.mxu0 0.0
    %1052 = vmatpush1.msra.mxu0 0.0
    %1053 = vmatprep.subr.mxu0 0.0
    %1054 = vmatpush1.msra.mxu0 0.0
    %1055 = vmatprep.subr.mxu0 0.0
    %1056 = vmatpush1.msra.mxu0 0.0
    %1057 = vmatprep.subr.mxu0 0.0
    %1058 = vmatpush1.msra.mxu0 0.0
    %1059 = vmatprep.subr.mxu0 0.0
    %1060 = vmatpush1.msra.mxu0 0.0
    %1061 = vmatprep.subr.mxu0 0.0
    %1062 = vmatpush1.msra.mxu0 0.0
    %1063 = vmatprep.subr.mxu0 0.0
    %1064 = vmatpush1.msra.mxu0 0.0
    %1065 = vmatprep.subr.mxu0 0.0
    %1066 = vmatpush1.msra.mxu0 0.0
    %1067 = vmatprep.subr.mxu0 0.0
    %1068 = vmatpush1.msra.mxu0 0.0
    %1069 = vmatprep.subr.mxu0 0.0
    %1070 = vmatpush1.msra.mxu0 0.0
    %1071 = vmatprep.subr.mxu0 0.0
    %1072 = vmatpush1.msra.mxu0 0.0
    %1073 = vmatprep.mubr.f32.mxu0 0.0
    %1074 = vmatmul.mubr.f32.gmra.mrb[0].mxu0 %v864
    %v1075 = vpop.f32.mrb[0].mxu0
    %v1076 = vadd.f32 0.0, %v1075
    %v1077 = vpop.f32.mrb[0].mxu0
    %v1078 = vadd.f32 0.0, %v1077
    %1079 = vdwg.mxu0
    %v1080 = vadd.f32 %v870, %v1005
    %v1081 = vadd.f32 %v871, %v1007
    %v1082 = vadd.f32 %v872, %v1076
    %v1083 = vadd.f32 %v873, %v1078
    %v1084 = vtanh.pop %v1080
    %v1085 = vtanh.pop %v1081
    %v1086 = vtanh.pop %v1082
    %v1087 = vtanh.pop %v1083
    %v1088 = vadd.f32 %v1084, 1.0
    %v1089 = vmul.f32 %v1088, 0.5
    %v1090 = vadd.f32 %v1085, 1.0
    %v1091 = vmul.f32 %v1090, 0.5
    %v1092 = vadd.f32 %v1086, 1.0
    %v1093 = vmul.f32 %v1092, 0.5
    %v1094 = vmul.f32 %v1091, %v862
    %v1095 = vmul.f32 %v1089, %v1087
    %v1096 = vadd.f32 %v1094, %v1095
    %v1097 = vtanh.pop %v1096
    %v1098 = vmul.f32 %v1093, %v1097
    %s1099 = scalar_lea.vmem [#allocation3], 16
    %1100 = vst [vmem:[%s1099] sm:$0xff] %v1098
    %s1101 = smul.u32 3, 4
    %s1102 = smul.addr %s1101, 8
    %s1103 = scalar_lea.vmem [#allocation2], %s1102
    %v1104 = vld [vmem:[%s1103] sm:$0xff]
    %v1105 = vld [vmem:[%s1103 + $0x8] sm:$0xff]
    %v1106 = vld [vmem:[%s1103 + $0x10] sm:$0xff]
    %v1107 = vld [vmem:[%s1103 + $0x18] sm:$0xff]
    %v1108 = vld [vmem:[#allocation6] sm:$0xff]
    %v1109 = vld [vmem:[#allocation6 + $0x8] sm:$0xff]
    %v1110 = vld [vmem:[#allocation6 + $0x10] sm:$0xff]
    %v1111 = vld [vmem:[#allocation6 + $0x18] sm:$0xff]
    %v1112 = vld [vmem:[#allocation6 + $0x20] sm:$0xff]
    %v1113 = vld [vmem:[#allocation6 + $0x28] sm:$0xff]
    %v1114 = vld [vmem:[#allocation6 + $0x30] sm:$0xff]
    %v1115 = vld [vmem:[#allocation6 + $0x38] sm:$0xff]
    %v1116 = vld [vmem:[#allocation6 + $0x40] sm:$0xff]
    %v1117 = vld [vmem:[#allocation6 + $0x48] sm:$0xff]
    %v1118 = vld [vmem:[#allocation6 + $0x50] sm:$0xff]
    %v1119 = vld [vmem:[#allocation6 + $0x58] sm:$0xff]
    %v1120 = vld [vmem:[#allocation6 + $0x60] sm:$0xff]
    %v1121 = vld [vmem:[#allocation6 + $0x68] sm:$0xff]
    %v1122 = vld [vmem:[#allocation6 + $0x70] sm:$0xff]
    %v1123 = vld [vmem:[#allocation6 + $0x78] sm:$0xff]
    %v1124 = vld [vmem:[#allocation6 + $0x80] sm:$0xff]
    %v1125 = vld [vmem:[#allocation6 + $0x88] sm:$0xff]
    %v1126 = vld [vmem:[#allocation6 + $0x90] sm:$0xff]
    %v1127 = vld [vmem:[#allocation6 + $0x98] sm:$0xff]
    %v1128 = vld [vmem:[#allocation6 + $0xa0] sm:$0xff]
    %v1129 = vld [vmem:[#allocation6 + $0xa8] sm:$0xff]
    %v1130 = vld [vmem:[#allocation6 + $0xb0] sm:$0xff]
    %v1131 = vld [vmem:[#allocation6 + $0xb8] sm:$0xff]
    %v1132 = vld [vmem:[#allocation6 + $0xc0] sm:$0xff]
    %v1133 = vld [vmem:[#allocation6 + $0xc8] sm:$0xff]
    %v1134 = vld [vmem:[#allocation6 + $0xd0] sm:$0xff]
    %v1135 = vld [vmem:[#allocation6 + $0xd8] sm:$0xff]
    %v1136 = vld [vmem:[#allocation6 + $0xe0] sm:$0xff]
    %v1137 = vld [vmem:[#allocation6 + $0xe8] sm:$0xff]
    %v1138 = vld [vmem:[#allocation6 + $0xf0] sm:$0xff]
    %v1139 = vld [vmem:[#allocation6 + $0xf8] sm:$0xff]
    %v1140 = vld [vmem:[#allocation6 + $0x100] sm:$0xff]
    %v1141 = vld [vmem:[#allocation6 + $0x108] sm:$0xff]
    %v1142 = vld [vmem:[#allocation6 + $0x110] sm:$0xff]
    %v1143 = vld [vmem:[#allocation6 + $0x118] sm:$0xff]
    %v1144 = vld [vmem:[#allocation6 + $0x120] sm:$0xff]
    %v1145 = vld [vmem:[#allocation6 + $0x128] sm:$0xff]
    %v1146 = vld [vmem:[#allocation6 + $0x130] sm:$0xff]
    %v1147 = vld [vmem:[#allocation6 + $0x138] sm:$0xff]
    %v1148 = vld [vmem:[#allocation6 + $0x140] sm:$0xff]
    %v1149 = vld [vmem:[#allocation6 + $0x148] sm:$0xff]
    %v1150 = vld [vmem:[#allocation6 + $0x150] sm:$0xff]
    %v1151 = vld [vmem:[#allocation6 + $0x158] sm:$0xff]
    %v1152 = vld [vmem:[#allocation6 + $0x160] sm:$0xff]
    %v1153 = vld [vmem:[#allocation6 + $0x168] sm:$0xff]
    %v1154 = vld [vmem:[#allocation6 + $0x170] sm:$0xff]
    %v1155 = vld [vmem:[#allocation6 + $0x178] sm:$0xff]
    %v1156 = vld [vmem:[#allocation6 + $0x180] sm:$0xff]
    %v1157 = vld [vmem:[#allocation6 + $0x188] sm:$0xff]
    %v1158 = vld [vmem:[#allocation6 + $0x190] sm:$0xff]
    %v1159 = vld [vmem:[#allocation6 + $0x198] sm:$0xff]
    %v1160 = vld [vmem:[#allocation6 + $0x1a0] sm:$0xff]
    %v1161 = vld [vmem:[#allocation6 + $0x1a8] sm:$0xff]
    %v1162 = vld [vmem:[#allocation6 + $0x1b0] sm:$0xff]
    %v1163 = vld [vmem:[#allocation6 + $0x1b8] sm:$0xff]
    %v1164 = vld [vmem:[#allocation6 + $0x1c0] sm:$0xff]
    %v1165 = vld [vmem:[#allocation6 + $0x1c8] sm:$0xff]
    %v1166 = vld [vmem:[#allocation6 + $0x1d0] sm:$0xff]
    %v1167 = vld [vmem:[#allocation6 + $0x1d8] sm:$0xff]
    %v1168 = vld [vmem:[#allocation6 + $0x1e0] sm:$0xff]
    %v1169 = vld [vmem:[#allocation6 + $0x1e8] sm:$0xff]
    %v1170 = vld [vmem:[#allocation6 + $0x1f0] sm:$0xff]
    %v1171 = vld [vmem:[#allocation6 + $0x1f8] sm:$0xff]
    %1172 = vmatprep.subr.mxu0 %v1109
    %1173 = vmatpush1.msra.mxu0 %v1108
    %1174 = vmatprep.subr.mxu0 %v1113
    %1175 = vmatpush1.msra.mxu0 %v1112
    %1176 = vmatprep.subr.mxu0 %v1117
    %1177 = vmatpush1.msra.mxu0 %v1116
    %1178 = vmatprep.subr.mxu0 %v1121
    %1179 = vmatpush1.msra.mxu0 %v1120
    %1180 = vmatprep.subr.mxu0 %v1125
    %1181 = vmatpush1.msra.mxu0 %v1124
    %1182 = vmatprep.subr.mxu0 %v1129
    %1183 = vmatpush1.msra.mxu0 %v1128
    %1184 = vmatprep.subr.mxu0 %v1133
    %1185 = vmatpush1.msra.mxu0 %v1132
    %1186 = vmatprep.subr.mxu0 %v1137
    %1187 = vmatpush1.msra.mxu0 %v1136
    %1188 = vmatprep.subr.mxu0 %v1141
    %1189 = vmatpush1.msra.mxu0 %v1140
    %1190 = vmatprep.subr.mxu0 %v1145
    %1191 = vmatpush1.msra.mxu0 %v1144
    %1192 = vmatprep.subr.mxu0 %v1149
    %1193 = vmatpush1.msra.mxu0 %v1148
    %1194 = vmatprep.subr.mxu0 %v1153
    %1195 = vmatpush1.msra.mxu0 %v1152
    %1196 = vmatprep.subr.mxu0 %v1157
    %1197 = vmatpush1.msra.mxu0 %v1156
    %1198 = vmatprep.subr.mxu0 %v1161
    %1199 = vmatpush1.msra.mxu0 %v1160
    %1200 = vmatprep.subr.mxu0 %v1165
    %1201 = vmatpush1.msra.mxu0 %v1164
    %1202 = vmatprep.subr.mxu0 %v1169
    %1203 = vmatpush1.msra.mxu0 %v1168
    %1204 = vmatprep.subr.mxu0 0.0
    %1205 = vmatpush1.msra.mxu0 0.0
    %1206 = vmatprep.subr.mxu0 0.0
    %1207 = vmatpush1.msra.mxu0 0.0
    %1208 = vmatprep.subr.mxu0 0.0
    %1209 = vmatpush1.msra.mxu0 0.0
    %1210 = vmatprep.subr.mxu0 0.0
    %1211 = vmatpush1.msra.mxu0 0.0
    %1212 = vmatprep.subr.mxu0 0.0
    %1213 = vmatpush1.msra.mxu0 0.0
    %1214 = vmatprep.subr.mxu0 0.0
    %1215 = vmatpush1.msra.mxu0 0.0
    %1216 = vmatprep.subr.mxu0 0.0
    %1217 = vmatpush1.msra.mxu0 0.0
    %1218 = vmatprep.subr.mxu0 0.0
    %1219 = vmatpush1.msra.mxu0 0.0
    %1220 = vmatprep.subr.mxu0 0.0
    %1221 = vmatpush1.msra.mxu0 0.0
    %1222 = vmatprep.subr.mxu0 0.0
    %1223 = vmatpush1.msra.mxu0 0.0
    %1224 = vmatprep.subr.mxu0 0.0
    %1225 = vmatpush1.msra.mxu0 0.0
    %1226 = vmatprep.subr.mxu0 0.0
    %1227 = vmatpush1.msra.mxu0 0.0
    %1228 = vmatprep.subr.mxu0 0.0
    %1229 = vmatpush1.msra.mxu0 0.0
    %1230 = vmatprep.subr.mxu0 0.0
    %1231 = vmatpush1.msra.mxu0 0.0
    %1232 = vmatprep.subr.mxu0 0.0
    %1233 = vmatpush1.msra.mxu0 0.0
    %1234 = vmatprep.subr.mxu0 0.0
    %1235 = vmatpush1.msra.mxu0 0.0
    %1236 = vmatprep.mubr.f32.mxu0 0.0
    %1237 = vmatmul.mubr.f32.gmra.mrb[0].mxu0 %v1098
    %v1238 = vpop.f32.mrb[0].mxu0
    %v1239 = vadd.f32 0.0, %v1238
    %v1240 = vpop.f32.mrb[0].mxu0
    %v1241 = vadd.f32 0.0, %v1240
    %1242 = vdwg.mxu0
    %1243 = vmatprep.subr.mxu0 %v1111
    %1244 = vmatpush1.msra.mxu0 %v1110
    %1245 = vmatprep.subr.mxu0 %v1115
    %1246 = vmatpush1.msra.mxu0 %v1114
    %1247 = vmatprep.subr.mxu0 %v1119
    %1248 = vmatpush1.msra.mxu0 %v1118
    %1249 = vmatprep.subr.mxu0 %v1123
    %1250 = vmatpush1.msra.mxu0 %v1122
    %1251 = vmatprep.subr.mxu0 %v1127
    %1252 = vmatpush1.msra.mxu0 %v1126
    %1253 = vmatprep.subr.mxu0 %v1131
    %1254 = vmatpush1.msra.mxu0 %v1130
    %1255 = vmatprep.subr.mxu0 %v1135
    %1256 = vmatpush1.msra.mxu0 %v1134
    %1257 = vmatprep.subr.mxu0 %v1139
    %1258 = vmatpush1.msra.mxu0 %v1138
    %1259 = vmatprep.subr.mxu0 %v1143
    %1260 = vmatpush1.msra.mxu0 %v1142
    %1261 = vmatprep.subr.mxu0 %v1147
    %1262 = vmatpush1.msra.mxu0 %v1146
    %1263 = vmatprep.subr.mxu0 %v1151
    %1264 = vmatpush1.msra.mxu0 %v1150
    %1265 = vmatprep.subr.mxu0 %v1155
    %1266 = vmatpush1.msra.mxu0 %v1154
    %1267 = vmatprep.subr.mxu0 %v1159
    %1268 = vmatpush1.msra.mxu0 %v1158
    %1269 = vmatprep.subr.mxu0 %v1163
    %1270 = vmatpush1.msra.mxu0 %v1162
    %1271 = vmatprep.subr.mxu0 %v1167
    %1272 = vmatpush1.msra.mxu0 %v1166
    %1273 = vmatprep.subr.mxu0 %v1171
    %1274 = vmatpush1.msra.mxu0 %v1170
    %1275 = vmatprep.subr.mxu0 0.0
    %1276 = vmatpush1.msra.mxu0 0.0
    %1277 = vmatprep.subr.mxu0 0.0
    %1278 = vmatpush1.msra.mxu0 0.0
    %1279 = vmatprep.subr.mxu0 0.0
    %1280 = vmatpush1.msra.mxu0 0.0
    %1281 = vmatprep.subr.mxu0 0.0
    %1282 = vmatpush1.msra.mxu0 0.0
    %1283 = vmatprep.subr.mxu0 0.0
    %1284 = vmatpush1.msra.mxu0 0.0
    %1285 = vmatprep.subr.mxu0 0.0
    %1286 = vmatpush1.msra.mxu0 0.0
    %1287 = vmatprep.subr.mxu0 0.0
    %1288 = vmatpush1.msra.mxu0 0.0
    %1289 = vmatprep.subr.mxu0 0.0
    %1290 = vmatpush1.msra.mxu0 0.0
    %1291 = vmatprep.subr.mxu0 0.0
    %1292 = vmatpush1.msra.mxu0 0.0
    %1293 = vmatprep.subr.mxu0 0.0
    %1294 = vmatpush1.msra.mxu0 0.0
    %1295 = vmatprep.subr.mxu0 0.0
    %1296 = vmatpush1.msra.mxu0 0.0
    %1297 = vmatprep.subr.mxu0 0.0
    %1298 = vmatpush1.msra.mxu0 0.0
    %1299 = vmatprep.subr.mxu0 0.0
    %1300 = vmatpush1.msra.mxu0 0.0
    %1301 = vmatprep.subr.mxu0 0.0
    %1302 = vmatpush1.msra.mxu0 0.0
    %1303 = vmatprep.subr.mxu0 0.0
    %1304 = vmatpush1.msra.mxu0 0.0
    %1305 = vmatprep.subr.mxu0 0.0
    %1306 = vmatpush1.msra.mxu0 0.0
    %1307 = vmatprep.mubr.f32.mxu0 0.0
    %1308 = vmatmul.mubr.f32.gmra.mrb[0].mxu0 %v1098
    %v1309 = vpop.f32.mrb[0].mxu0
    %v1310 = vadd.f32 0.0, %v1309
    %v1311 = vpop.f32.mrb[0].mxu0
    %v1312 = vadd.f32 0.0, %v1311
    %1313 = vdwg.mxu0
    %v1314 = vadd.f32 %v1104, %v1239
    %v1315 = vadd.f32 %v1105, %v1241
    %v1316 = vadd.f32 %v1106, %v1310
    %v1317 = vadd.f32 %v1107, %v1312
    %v1318 = vtanh.pop %v1314
    %v1319 = vtanh.pop %v1315
    %v1320 = vtanh.pop %v1316
    %v1321 = vtanh.pop %v1317
    %v1322 = vadd.f32 %v1318, 1.0
    %v1323 = vmul.f32 %v1322, 0.5
    %v1324 = vadd.f32 %v1319, 1.0
    %v1325 = vmul.f32 %v1324, 0.5
    %v1326 = vadd.f32 %v1320, 1.0
    %v1327 = vmul.f32 %v1326, 0.5
    %v1328 = vmul.f32 %v1325, %v1096
    %v1329 = vmul.f32 %v1323, %v1321
    %v1330 = vadd.f32 %v1328, %v1329
    %v1331 = vtanh.pop %v1330
    %v1332 = vmul.f32 %v1327, %v1331
    %s1333 = scalar_lea.vmem [#allocation3], 24
    %1334 = vst [vmem:[%s1333] sm:$0xff] %v1332
    %s1335 = smul.u32 4, 4
    %s1336 = smul.addr %s1335, 8
    %s1337 = scalar_lea.vmem [#allocation2], %s1336
    %v1338 = vld [vmem:[%s1337] sm:$0xff]
    %v1339 = vld [vmem:[%s1337 + $0x8] sm:$0xff]
    %v1340 = vld [vmem:[%s1337 + $0x10] sm:$0xff]
    %v1341 = vld [vmem:[%s1337 + $0x18] sm:$0xff]
    %v1342 = vld [vmem:[#allocation6] sm:$0xff]
    %v1343 = vld [vmem:[#allocation6 + $0x8] sm:$0xff]
    %v1344 = vld [vmem:[#allocation6 + $0x10] sm:$0xff]
    %v1345 = vld [vmem:[#allocation6 + $0x18] sm:$0xff]
    %v1346 = vld [vmem:[#allocation6 + $0x20] sm:$0xff]
    %v1347 = vld [vmem:[#allocation6 + $0x28] sm:$0xff]
    %v1348 = vld [vmem:[#allocation6 + $0x30] sm:$0xff]
    %v1349 = vld [vmem:[#allocation6 + $0x38] sm:$0xff]
    %v1350 = vld [vmem:[#allocation6 + $0x40] sm:$0xff]
    %v1351 = vld [vmem:[#allocation6 + $0x48] sm:$0xff]
    %v1352 = vld [vmem:[#allocation6 + $0x50] sm:$0xff]
    %v1353 = vld [vmem:[#allocation6 + $0x58] sm:$0xff]
    %v1354 = vld [vmem:[#allocation6 + $0x60] sm:$0xff]
    %v1355 = vld [vmem:[#allocation6 + $0x68] sm:$0xff]
    %v1356 = vld [vmem:[#allocation6 + $0x70] sm:$0xff]
    %v1357 = vld [vmem:[#allocation6 + $0x78] sm:$0xff]
    %v1358 = vld [vmem:[#allocation6 + $0x80] sm:$0xff]
    %v1359 = vld [vmem:[#allocation6 + $0x88] sm:$0xff]
    %v1360 = vld [vmem:[#allocation6 + $0x90] sm:$0xff]
    %v1361 = vld [vmem:[#allocation6 + $0x98] sm:$0xff]
    %v1362 = vld [vmem:[#allocation6 + $0xa0] sm:$0xff]
    %v1363 = vld [vmem:[#allocation6 + $0xa8] sm:$0xff]
    %v1364 = vld [vmem:[#allocation6 + $0xb0] sm:$0xff]
    %v1365 = vld [vmem:[#allocation6 + $0xb8] sm:$0xff]
    %v1366 = vld [vmem:[#allocation6 + $0xc0] sm:$0xff]
    %v1367 = vld [vmem:[#allocation6 + $0xc8] sm:$0xff]
    %v1368 = vld [vmem:[#allocation6 + $0xd0] sm:$0xff]
    %v1369 = vld [vmem:[#allocation6 + $0xd8] sm:$0xff]
    %v1370 = vld [vmem:[#allocation6 + $0xe0] sm:$0xff]
    %v1371 = vld [vmem:[#allocation6 + $0xe8] sm:$0xff]
    %v1372 = vld [vmem:[#allocation6 + $0xf0] sm:$0xff]
    %v1373 = vld [vmem:[#allocation6 + $0xf8] sm:$0xff]
    %v1374 = vld [vmem:[#allocation6 + $0x100] sm:$0xff]
    %v1375 = vld [vmem:[#allocation6 + $0x108] sm:$0xff]
    %v1376 = vld [vmem:[#allocation6 + $0x110] sm:$0xff]
    %v1377 = vld [vmem:[#allocation6 + $0x118] sm:$0xff]
    %v1378 = vld [vmem:[#allocation6 + $0x120] sm:$0xff]
    %v1379 = vld [vmem:[#allocation6 + $0x128] sm:$0xff]
    %v1380 = vld [vmem:[#allocation6 + $0x130] sm:$0xff]
    %v1381 = vld [vmem:[#allocation6 + $0x138] sm:$0xff]
    %v1382 = vld [vmem:[#allocation6 + $0x140] sm:$0xff]
    %v1383 = vld [vmem:[#allocation6 + $0x148] sm:$0xff]
    %v1384 = vld [vmem:[#allocation6 + $0x150] sm:$0xff]
    %v1385 = vld [vmem:[#allocation6 + $0x158] sm:$0xff]
    %v1386 = vld [vmem:[#allocation6 + $0x160] sm:$0xff]
    %v1387 = vld [vmem:[#allocation6 + $0x168] sm:$0xff]
    %v1388 = vld [vmem:[#allocation6 + $0x170] sm:$0xff]
    %v1389 = vld [vmem:[#allocation6 + $0x178] sm:$0xff]
    %v1390 = vld [vmem:[#allocation6 + $0x180] sm:$0xff]
    %v1391 = vld [vmem:[#allocation6 + $0x188] sm:$0xff]
    %v1392 = vld [vmem:[#allocation6 + $0x190] sm:$0xff]
    %v1393 = vld [vmem:[#allocation6 + $0x198] sm:$0xff]
    %v1394 = vld [vmem:[#allocation6 + $0x1a0] sm:$0xff]
    %v1395 = vld [vmem:[#allocation6 + $0x1a8] sm:$0xff]
    %v1396 = vld [vmem:[#allocation6 + $0x1b0] sm:$0xff]
    %v1397 = vld [vmem:[#allocation6 + $0x1b8] sm:$0xff]
    %v1398 = vld [vmem:[#allocation6 + $0x1c0] sm:$0xff]
    %v1399 = vld [vmem:[#allocation6 + $0x1c8] sm:$0xff]
    %v1400 = vld [vmem:[#allocation6 + $0x1d0] sm:$0xff]
    %v1401 = vld [vmem:[#allocation6 + $0x1d8] sm:$0xff]
    %v1402 = vld [vmem:[#allocation6 + $0x1e0] sm:$0xff]
    %v1403 = vld [vmem:[#allocation6 + $0x1e8] sm:$0xff]
    %v1404 = vld [vmem:[#allocation6 + $0x1f0] sm:$0xff]
    %v1405 = vld [vmem:[#allocation6 + $0x1f8] sm:$0xff]
    %1406 = vmatprep.subr.mxu0 %v1343
    %1407 = vmatpush1.msra.mxu0 %v1342
    %1408 = vmatprep.subr.mxu0 %v1347
    %1409 = vmatpush1.msra.mxu0 %v1346
    %1410 = vmatprep.subr.mxu0 %v1351
    %1411 = vmatpush1.msra.mxu0 %v1350
    %1412 = vmatprep.subr.mxu0 %v1355
    %1413 = vmatpush1.msra.mxu0 %v1354
    %1414 = vmatprep.subr.mxu0 %v1359
    %1415 = vmatpush1.msra.mxu0 %v1358
    %1416 = vmatprep.subr.mxu0 %v1363
    %1417 = vmatpush1.msra.mxu0 %v1362
    %1418 = vmatprep.subr.mxu0 %v1367
    %1419 = vmatpush1.msra.mxu0 %v1366
    %1420 = vmatprep.subr.mxu0 %v1371
    %1421 = vmatpush1.msra.mxu0 %v1370
    %1422 = vmatprep.subr.mxu0 %v1375
    %1423 = vmatpush1.msra.mxu0 %v1374
    %1424 = vmatprep.subr.mxu0 %v1379
    %1425 = vmatpush1.msra.mxu0 %v1378
    %1426 = vmatprep.subr.mxu0 %v1383
    %1427 = vmatpush1.msra.mxu0 %v1382
    %1428 = vmatprep.subr.mxu0 %v1387
    %1429 = vmatpush1.msra.mxu0 %v1386
    %1430 = vmatprep.subr.mxu0 %v1391
    %1431 = vmatpush1.msra.mxu0 %v1390
    %1432 = vmatprep.subr.mxu0 %v1395
    %1433 = vmatpush1.msra.mxu0 %v1394
    %1434 = vmatprep.subr.mxu0 %v1399
    %1435 = vmatpush1.msra.mxu0 %v1398
    %1436 = vmatprep.subr.mxu0 %v1403
    %1437 = vmatpush1.msra.mxu0 %v1402
    %1438 = vmatprep.subr.mxu0 0.0
    %1439 = vmatpush1.msra.mxu0 0.0
    %1440 = vmatprep.subr.mxu0 0.0
    %1441 = vmatpush1.msra.mxu0 0.0
    %1442 = vmatprep.subr.mxu0 0.0
    %1443 = vmatpush1.msra.mxu0 0.0
    %1444 = vmatprep.subr.mxu0 0.0
    %1445 = vmatpush1.msra.mxu0 0.0
    %1446 = vmatprep.subr.mxu0 0.0
    %1447 = vmatpush1.msra.mxu0 0.0
    %1448 = vmatprep.subr.mxu0 0.0
    %1449 = vmatpush1.msra.mxu0 0.0
    %1450 = vmatprep.subr.mxu0 0.0
    %1451 = vmatpush1.msra.mxu0 0.0
    %1452 = vmatprep.subr.mxu0 0.0
    %1453 = vmatpush1.msra.mxu0 0.0
    %1454 = vmatprep.subr.mxu0 0.0
    %1455 = vmatpush1.msra.mxu0 0.0
    %1456 = vmatprep.subr.mxu0 0.0
    %1457 = vmatpush1.msra.mxu0 0.0
    %1458 = vmatprep.subr.mxu0 0.0
    %1459 = vmatpush1.msra.mxu0 0.0
    %1460 = vmatprep.subr.mxu0 0.0
    %1461 = vmatpush1.msra.mxu0 0.0
    %1462 = vmatprep.subr.mxu0 0.0
    %1463 = vmatpush1.msra.mxu0 0.0
    %1464 = vmatprep.subr.mxu0 0.0
    %1465 = vmatpush1.msra.mxu0 0.0
    %1466 = vmatprep.subr.mxu0 0.0
    %1467 = vmatpush1.msra.mxu0 0.0
    %1468 = vmatprep.subr.mxu0 0.0
    %1469 = vmatpush1.msra.mxu0 0.0
    %1470 = vmatprep.mubr.f32.mxu0 0.0
    %1471 = vmatmul.mubr.f32.gmra.mrb[0].mxu0 %v1332
    %v1472 = vpop.f32.mrb[0].mxu0
    %v1473 = vadd.f32 0.0, %v1472
    %v1474 = vpop.f32.mrb[0].mxu0
    %v1475 = vadd.f32 0.0, %v1474
    %1476 = vdwg.mxu0
    %1477 = vmatprep.subr.mxu0 %v1345
    %1478 = vmatpush1.msra.mxu0 %v1344
    %1479 = vmatprep.subr.mxu0 %v1349
    %1480 = vmatpush1.msra.mxu0 %v1348
    %1481 = vmatprep.subr.mxu0 %v1353
    %1482 = vmatpush1.msra.mxu0 %v1352
    %1483 = vmatprep.subr.mxu0 %v1357
    %1484 = vmatpush1.msra.mxu0 %v1356
    %1485 = vmatprep.subr.mxu0 %v1361
    %1486 = vmatpush1.msra.mxu0 %v1360
    %1487 = vmatprep.subr.mxu0 %v1365
    %1488 = vmatpush1.msra.mxu0 %v1364
    %1489 = vmatprep.subr.mxu0 %v1369
    %1490 = vmatpush1.msra.mxu0 %v1368
    %1491 = vmatprep.subr.mxu0 %v1373
    %1492 = vmatpush1.msra.mxu0 %v1372
    %1493 = vmatprep.subr.mxu0 %v1377
    %1494 = vmatpush1.msra.mxu0 %v1376
    %1495 = vmatprep.subr.mxu0 %v1381
    %1496 = vmatpush1.msra.mxu0 %v1380
    %1497 = vmatprep.subr.mxu0 %v1385
    %1498 = vmatpush1.msra.mxu0 %v1384
    %1499 = vmatprep.subr.mxu0 %v1389
    %1500 = vmatpush1.msra.mxu0 %v1388
    %1501 = vmatprep.subr.mxu0 %v1393
    %1502 = vmatpush1.msra.mxu0 %v1392
    %1503 = vmatprep.subr.mxu0 %v1397
    %1504 = vmatpush1.msra.mxu0 %v1396
    %1505 = vmatprep.subr.mxu0 %v1401
    %1506 = vmatpush1.msra.mxu0 %v1400
    %1507 = vmatprep.subr.mxu0 %v1405
    %1508 = vmatpush1.msra.mxu0 %v1404
    %1509 = vmatprep.subr.mxu0 0.0
    %1510 = vmatpush1.msra.mxu0 0.0
    %1511 = vmatprep.subr.mxu0 0.0
    %1512 = vmatpush1.msra.mxu0 0.0
    %1513 = vmatprep.subr.mxu0 0.0
    %1514 = vmatpush1.msra.mxu0 0.0
    %1515 = vmatprep.subr.mxu0 0.0
    %1516 = vmatpush1.msra.mxu0 0.0
    %1517 = vmatprep.subr.mxu0 0.0
    %1518 = vmatpush1.msra.mxu0 0.0
    %1519 = vmatprep.subr.mxu0 0.0
    %1520 = vmatpush1.msra.mxu0 0.0
    %1521 = vmatprep.subr.mxu0 0.0
    %1522 = vmatpush1.msra.mxu0 0.0
    %1523 = vmatprep.subr.mxu0 0.0
    %1524 = vmatpush1.msra.mxu0 0.0
    %1525 = vmatprep.subr.mxu0 0.0
    %1526 = vmatpush1.msra.mxu0 0.0
    %1527 = vmatprep.subr.mxu0 0.0
    %1528 = vmatpush1.msra.mxu0 0.0
    %1529 = vmatprep.subr.mxu0 0.0
    %1530 = vmatpush1.msra.mxu0 0.0
    %1531 = vmatprep.subr.mxu0 0.0
    %1532 = vmatpush1.msra.mxu0 0.0
    %1533 = vmatprep.subr.mxu0 0.0
    %1534 = vmatpush1.msra.mxu0 0.0
    %1535 = vmatprep.subr.mxu0 0.0
    %1536 = vmatpush1.msra.mxu0 0.0
    %1537 = vmatprep.subr.mxu0 0.0
    %1538 = vmatpush1.msra.mxu0 0.0
    %1539 = vmatprep.subr.mxu0 0.0
    %1540 = vmatpush1.msra.mxu0 0.0
    %1541 = vmatprep.mubr.f32.mxu0 0.0
    %1542 = vmatmul.mubr.f32.gmra.mrb[0].mxu0 %v1332
    %v1543 = vpop.f32.mrb[0].mxu0
    %v1544 = vadd.f32 0.0, %v1543
    %v1545 = vpop.f32.mrb[0].mxu0
    %v1546 = vadd.f32 0.0, %v1545
    %1547 = vdwg.mxu0
    %v1548 = vadd.f32 %v1338, %v1473
    %v1549 = vadd.f32 %v1339, %v1475
    %v1550 = vadd.f32 %v1340, %v1544
    %v1551 = vadd.f32 %v1341, %v1546
    %v1552 = vtanh.pop %v1548
    %v1553 = vtanh.pop %v1549
    %v1554 = vtanh.pop %v1550
    %v1555 = vtanh.pop %v1551
    %v1556 = vadd.f32 %v1552, 1.0
    %v1557 = vmul.f32 %v1556, 0.5
    %v1558 = vadd.f32 %v1553, 1.0
    %v1559 = vmul.f32 %v1558, 0.5
    %v1560 = vadd.f32 %v1554, 1.0
    %v1561 = vmul.f32 %v1560, 0.5
    %v1562 = vmul.f32 %v1559, %v1330
    %v1563 = vmul.f32 %v1557, %v1555
    %v1564 = vadd.f32 %v1562, %v1563
    %v1565 = vtanh.pop %v1564
    %v1566 = vmul.f32 %v1561, %v1565
    %s1567 = scalar_lea.vmem [#allocation3], 32
    %1568 = vst [vmem:[%s1567] sm:$0xff] %v1566
    %s1569 = smul.u32 5, 4
    %s1570 = smul.addr %s1569, 8
    %s1571 = scalar_lea.vmem [#allocation2], %s1570
    %v1572 = vld [vmem:[%s1571] sm:$0xff]
    %v1573 = vld [vmem:[%s1571 + $0x8] sm:$0xff]
    %v1574 = vld [vmem:[%s1571 + $0x10] sm:$0xff]
    %v1575 = vld [vmem:[%s1571 + $0x18] sm:$0xff]
    %v1576 = vld [vmem:[#allocation6] sm:$0xff]
    %v1577 = vld [vmem:[#allocation6 + $0x8] sm:$0xff]
    %v1578 = vld [vmem:[#allocation6 + $0x10] sm:$0xff]
    %v1579 = vld [vmem:[#allocation6 + $0x18] sm:$0xff]
    %v1580 = vld [vmem:[#allocation6 + $0x20] sm:$0xff]
    %v1581 = vld [vmem:[#allocation6 + $0x28] sm:$0xff]
    %v1582 = vld [vmem:[#allocation6 + $0x30] sm:$0xff]
    %v1583 = vld [vmem:[#allocation6 + $0x38] sm:$0xff]
    %v1584 = vld [vmem:[#allocation6 + $0x40] sm:$0xff]
    %v1585 = vld [vmem:[#allocation6 + $0x48] sm:$0xff]
    %v1586 = vld [vmem:[#allocation6 + $0x50] sm:$0xff]
    %v1587 = vld [vmem:[#allocation6 + $0x58] sm:$0xff]
    %v1588 = vld [vmem:[#allocation6 + $0x60] sm:$0xff]
    %v1589 = vld [vmem:[#allocation6 + $0x68] sm:$0xff]
    %v1590 = vld [vmem:[#allocation6 + $0x70] sm:$0xff]
    %v1591 = vld [vmem:[#allocation6 + $0x78] sm:$0xff]
    %v1592 = vld [vmem:[#allocation6 + $0x80] sm:$0xff]
    %v1593 = vld [vmem:[#allocation6 + $0x88] sm:$0xff]
    %v1594 = vld [vmem:[#allocation6 + $0x90] sm:$0xff]
    %v1595 = vld [vmem:[#allocation6 + $0x98] sm:$0xff]
    %v1596 = vld [vmem:[#allocation6 + $0xa0] sm:$0xff]
    %v1597 = vld [vmem:[#allocation6 + $0xa8] sm:$0xff]
    %v1598 = vld [vmem:[#allocation6 + $0xb0] sm:$0xff]
    %v1599 = vld [vmem:[#allocation6 + $0xb8] sm:$0xff]
    %v1600 = vld [vmem:[#allocation6 + $0xc0] sm:$0xff]
    %v1601 = vld [vmem:[#allocation6 + $0xc8] sm:$0xff]
    %v1602 = vld [vmem:[#allocation6 + $0xd0] sm:$0xff]
    %v1603 = vld [vmem:[#allocation6 + $0xd8] sm:$0xff]
    %v1604 = vld [vmem:[#allocation6 + $0xe0] sm:$0xff]
    %v1605 = vld [vmem:[#allocation6 + $0xe8] sm:$0xff]
    %v1606 = vld [vmem:[#allocation6 + $0xf0] sm:$0xff]
    %v1607 = vld [vmem:[#allocation6 + $0xf8] sm:$0xff]
    %v1608 = vld [vmem:[#allocation6 + $0x100] sm:$0xff]
    %v1609 = vld [vmem:[#allocation6 + $0x108] sm:$0xff]
    %v1610 = vld [vmem:[#allocation6 + $0x110] sm:$0xff]
    %v1611 = vld [vmem:[#allocation6 + $0x118] sm:$0xff]
    %v1612 = vld [vmem:[#allocation6 + $0x120] sm:$0xff]
    %v1613 = vld [vmem:[#allocation6 + $0x128] sm:$0xff]
    %v1614 = vld [vmem:[#allocation6 + $0x130] sm:$0xff]
    %v1615 = vld [vmem:[#allocation6 + $0x138] sm:$0xff]
    %v1616 = vld [vmem:[#allocation6 + $0x140] sm:$0xff]
    %v1617 = vld [vmem:[#allocation6 + $0x148] sm:$0xff]
    %v1618 = vld [vmem:[#allocation6 + $0x150] sm:$0xff]
    %v1619 = vld [vmem:[#allocation6 + $0x158] sm:$0xff]
    %v1620 = vld [vmem:[#allocation6 + $0x160] sm:$0xff]
    %v1621 = vld [vmem:[#allocation6 + $0x168] sm:$0xff]
    %v1622 = vld [vmem:[#allocation6 + $0x170] sm:$0xff]
    %v1623 = vld [vmem:[#allocation6 + $0x178] sm:$0xff]
    %v1624 = vld [vmem:[#allocation6 + $0x180] sm:$0xff]
    %v1625 = vld [vmem:[#allocation6 + $0x188] sm:$0xff]
    %v1626 = vld [vmem:[#allocation6 + $0x190] sm:$0xff]
    %v1627 = vld [vmem:[#allocation6 + $0x198] sm:$0xff]
    %v1628 = vld [vmem:[#allocation6 + $0x1a0] sm:$0xff]
    %v1629 = vld [vmem:[#allocation6 + $0x1a8] sm:$0xff]
    %v1630 = vld [vmem:[#allocation6 + $0x1b0] sm:$0xff]
    %v1631 = vld [vmem:[#allocation6 + $0x1b8] sm:$0xff]
    %v1632 = vld [vmem:[#allocation6 + $0x1c0] sm:$0xff]
    %v1633 = vld [vmem:[#allocation6 + $0x1c8] sm:$0xff]
    %v1634 = vld [vmem:[#allocation6 + $0x1d0] sm:$0xff]
    %v1635 = vld [vmem:[#allocation6 + $0x1d8] sm:$0xff]
    %v1636 = vld [vmem:[#allocation6 + $0x1e0] sm:$0xff]
    %v1637 = vld [vmem:[#allocation6 + $0x1e8] sm:$0xff]
    %v1638 = vld [vmem:[#allocation6 + $0x1f0] sm:$0xff]
    %v1639 = vld [vmem:[#allocation6 + $0x1f8] sm:$0xff]
    %1640 = vmatprep.subr.mxu0 %v1577
    %1641 = vmatpush1.msra.mxu0 %v1576
    %1642 = vmatprep.subr.mxu0 %v1581
    %1643 = vmatpush1.msra.mxu0 %v1580
    %1644 = vmatprep.subr.mxu0 %v1585
    %1645 = vmatpush1.msra.mxu0 %v1584
    %1646 = vmatprep.subr.mxu0 %v1589
    %1647 = vmatpush1.msra.mxu0 %v1588
    %1648 = vmatprep.subr.mxu0 %v1593
    %1649 = vmatpush1.msra.mxu0 %v1592
    %1650 = vmatprep.subr.mxu0 %v1597
    %1651 = vmatpush1.msra.mxu0 %v1596
    %1652 = vmatprep.subr.mxu0 %v1601
    %1653 = vmatpush1.msra.mxu0 %v1600
    %1654 = vmatprep.subr.mxu0 %v1605
    %1655 = vmatpush1.msra.mxu0 %v1604
    %1656 = vmatprep.subr.mxu0 %v1609
    %1657 = vmatpush1.msra.mxu0 %v1608
    %1658 = vmatprep.subr.mxu0 %v1613
    %1659 = vmatpush1.msra.mxu0 %v1612
    %1660 = vmatprep.subr.mxu0 %v1617
    %1661 = vmatpush1.msra.mxu0 %v1616
    %1662 = vmatprep.subr.mxu0 %v1621
    %1663 = vmatpush1.msra.mxu0 %v1620
    %1664 = vmatprep.subr.mxu0 %v1625
    %1665 = vmatpush1.msra.mxu0 %v1624
    %1666 = vmatprep.subr.mxu0 %v1629
    %1667 = vmatpush1.msra.mxu0 %v1628
    %1668 = vmatprep.subr.mxu0 %v1633
    %1669 = vmatpush1.msra.mxu0 %v1632
    %1670 = vmatprep.subr.mxu0 %v1637
    %1671 = vmatpush1.msra.mxu0 %v1636
    %1672 = vmatprep.subr.mxu0 0.0
    %1673 = vmatpush1.msra.mxu0 0.0
    %1674 = vmatprep.subr.mxu0 0.0
    %1675 = vmatpush1.msra.mxu0 0.0
    %1676 = vmatprep.subr.mxu0 0.0
    %1677 = vmatpush1.msra.mxu0 0.0
    %1678 = vmatprep.subr.mxu0 0.0
    %1679 = vmatpush1.msra.mxu0 0.0
    %1680 = vmatprep.subr.mxu0 0.0
    %1681 = vmatpush1.msra.mxu0 0.0
    %1682 = vmatprep.subr.mxu0 0.0
    %1683 = vmatpush1.msra.mxu0 0.0
    %1684 = vmatprep.subr.mxu0 0.0
    %1685 = vmatpush1.msra.mxu0 0.0
    %1686 = vmatprep.subr.mxu0 0.0
    %1687 = vmatpush1.msra.mxu0 0.0
    %1688 = vmatprep.subr.mxu0 0.0
    %1689 = vmatpush1.msra.mxu0 0.0
    %1690 = vmatprep.subr.mxu0 0.0
    %1691 = vmatpush1.msra.mxu0 0.0
    %1692 = vmatprep.subr.mxu0 0.0
    %1693 = vmatpush1.msra.mxu0 0.0
    %1694 = vmatprep.subr.mxu0 0.0
    %1695 = vmatpush1.msra.mxu0 0.0
    %1696 = vmatprep.subr.mxu0 0.0
    %1697 = vmatpush1.msra.mxu0 0.0
    %1698 = vmatprep.subr.mxu0 0.0
    %1699 = vmatpush1.msra.mxu0 0.0
    %1700 = vmatprep.subr.mxu0 0.0
    %1701 = vmatpush1.msra.mxu0 0.0
    %1702 = vmatprep.subr.mxu0 0.0
    %1703 = vmatpush1.msra.mxu0 0.0
    %1704 = vmatprep.mubr.f32.mxu0 0.0
    %1705 = vmatmul.mubr.f32.gmra.mrb[0].mxu0 %v1566
    %v1706 = vpop.f32.mrb[0].mxu0
    %v1707 = vadd.f32 0.0, %v1706
    %v1708 = vpop.f32.mrb[0].mxu0
    %v1709 = vadd.f32 0.0, %v1708
    %1710 = vdwg.mxu0
    %1711 = vmatprep.subr.mxu0 %v1579
    %1712 = vmatpush1.msra.mxu0 %v1578
    %1713 = vmatprep.subr.mxu0 %v1583
    %1714 = vmatpush1.msra.mxu0 %v1582
    %1715 = vmatprep.subr.mxu0 %v1587
    %1716 = vmatpush1.msra.mxu0 %v1586
    %1717 = vmatprep.subr.mxu0 %v1591
    %1718 = vmatpush1.msra.mxu0 %v1590
    %1719 = vmatprep.subr.mxu0 %v1595
    %1720 = vmatpush1.msra.mxu0 %v1594
    %1721 = vmatprep.subr.mxu0 %v1599
    %1722 = vmatpush1.msra.mxu0 %v1598
    %1723 = vmatprep.subr.mxu0 %v1603
    %1724 = vmatpush1.msra.mxu0 %v1602
    %1725 = vmatprep.subr.mxu0 %v1607
    %1726 = vmatpush1.msra.mxu0 %v1606
    %1727 = vmatprep.subr.mxu0 %v1611
    %1728 = vmatpush1.msra.mxu0 %v1610
    %1729 = vmatprep.subr.mxu0 %v1615
    %1730 = vmatpush1.msra.mxu0 %v1614
    %1731 = vmatprep.subr.mxu0 %v1619
    %1732 = vmatpush1.msra.mxu0 %v1618
    %1733 = vmatprep.subr.mxu0 %v1623
    %1734 = vmatpush1.msra.mxu0 %v1622
    %1735 = vmatprep.subr.mxu0 %v1627
    %1736 = vmatpush1.msra.mxu0 %v1626
    %1737 = vmatprep.subr.mxu0 %v1631
    %1738 = vmatpush1.msra.mxu0 %v1630
    %1739 = vmatprep.subr.mxu0 %v1635
    %1740 = vmatpush1.msra.mxu0 %v1634
    %1741 = vmatprep.subr.mxu0 %v1639
    %1742 = vmatpush1.msra.mxu0 %v1638
    %1743 = vmatprep.subr.mxu0 0.0
    %1744 = vmatpush1.msra.mxu0 0.0
    %1745 = vmatprep.subr.mxu0 0.0
    %1746 = vmatpush1.msra.mxu0 0.0
    %1747 = vmatprep.subr.mxu0 0.0
    %1748 = vmatpush1.msra.mxu0 0.0
    %1749 = vmatprep.subr.mxu0 0.0
    %1750 = vmatpush1.msra.mxu0 0.0
    %1751 = vmatprep.subr.mxu0 0.0
    %1752 = vmatpush1.msra.mxu0 0.0
    %1753 = vmatprep.subr.mxu0 0.0
    %1754 = vmatpush1.msra.mxu0 0.0
    %1755 = vmatprep.subr.mxu0 0.0
    %1756 = vmatpush1.msra.mxu0 0.0
    %1757 = vmatprep.subr.mxu0 0.0
    %1758 = vmatpush1.msra.mxu0 0.0
    %1759 = vmatprep.subr.mxu0 0.0
    %1760 = vmatpush1.msra.mxu0 0.0
    %1761 = vmatprep.subr.mxu0 0.0
    %1762 = vmatpush1.msra.mxu0 0.0
    %1763 = vmatprep.subr.mxu0 0.0
    %1764 = vmatpush1.msra.mxu0 0.0
    %1765 = vmatprep.subr.mxu0 0.0
    %1766 = vmatpush1.msra.mxu0 0.0
    %1767 = vmatprep.subr.mxu0 0.0
    %1768 = vmatpush1.msra.mxu0 0.0
    %1769 = vmatprep.subr.mxu0 0.0
    %1770 = vmatpush1.msra.mxu0 0.0
    %1771 = vmatprep.subr.mxu0 0.0
    %1772 = vmatpush1.msra.mxu0 0.0
    %1773 = vmatprep.subr.mxu0 0.0
    %1774 = vmatpush1.msra.mxu0 0.0
    %1775 = vmatprep.mubr.f32.mxu0 0.0
    %1776 = vmatmul.mubr.f32.gmra.mrb[0].mxu0 %v1566
    %v1777 = vpop.f32.mrb[0].mxu0
    %v1778 = vadd.f32 0.0, %v1777
    %v1779 = vpop.f32.mrb[0].mxu0
    %v1780 = vadd.f32 0.0, %v1779
    %1781 = vdwg.mxu0
    %v1782 = vadd.f32 %v1572, %v1707
    %v1783 = vadd.f32 %v1573, %v1709
    %v1784 = vadd.f32 %v1574, %v1778
    %v1785 = vadd.f32 %v1575, %v1780
    %v1786 = vtanh.pop %v1782
    %v1787 = vtanh.pop %v1783
    %v1788 = vtanh.pop %v1784
    %v1789 = vtanh.pop %v1785
    %v1790 = vadd.f32 %v1786, 1.0
    %v1791 = vmul.f32 %v1790, 0.5
    %v1792 = vadd.f32 %v1787, 1.0
    %v1793 = vmul.f32 %v1792, 0.5
    %v1794 = vadd.f32 %v1788, 1.0
    %v1795 = vmul.f32 %v1794, 0.5
    %v1796 = vmul.f32 %v1793, %v1564
    %v1797 = vmul.f32 %v1791, %v1789
    %v1798 = vadd.f32 %v1796, %v1797
    %v1799 = vtanh.pop %v1798
    %v1800 = vmul.f32 %v1795, %v1799
    %s1801 = scalar_lea.vmem [#allocation3], 40
    %1802 = vst [vmem:[%s1801] sm:$0xff] %v1800
    %s1803 = smul.u32 6, 4
    %s1804 = smul.addr %s1803, 8
    %s1805 = scalar_lea.vmem [#allocation2], %s1804
    %v1806 = vld [vmem:[%s1805] sm:$0xff]
    %v1807 = vld [vmem:[%s1805 + $0x8] sm:$0xff]
    %v1808 = vld [vmem:[%s1805 + $0x10] sm:$0xff]
    %v1809 = vld [vmem:[%s1805 + $0x18] sm:$0xff]
    %v1810 = vld [vmem:[#allocation6] sm:$0xff]
    %v1811 = vld [vmem:[#allocation6 + $0x8] sm:$0xff]
    %v1812 = vld [vmem:[#allocation6 + $0x10] sm:$0xff]
    %v1813 = vld [vmem:[#allocation6 + $0x18] sm:$0xff]
    %v1814 = vld [vmem:[#allocation6 + $0x20] sm:$0xff]
    %v1815 = vld [vmem:[#allocation6 + $0x28] sm:$0xff]
    %v1816 = vld [vmem:[#allocation6 + $0x30] sm:$0xff]
    %v1817 = vld [vmem:[#allocation6 + $0x38] sm:$0xff]
    %v1818 = vld [vmem:[#allocation6 + $0x40] sm:$0xff]
    %v1819 = vld [vmem:[#allocation6 + $0x48] sm:$0xff]
    %v1820 = vld [vmem:[#allocation6 + $0x50] sm:$0xff]
    %v1821 = vld [vmem:[#allocation6 + $0x58] sm:$0xff]
    %v1822 = vld [vmem:[#allocation6 + $0x60] sm:$0xff]
    %v1823 = vld [vmem:[#allocation6 + $0x68] sm:$0xff]
    %v1824 = vld [vmem:[#allocation6 + $0x70] sm:$0xff]
    %v1825 = vld [vmem:[#allocation6 + $0x78] sm:$0xff]
    %v1826 = vld [vmem:[#allocation6 + $0x80] sm:$0xff]
    %v1827 = vld [vmem:[#allocation6 + $0x88] sm:$0xff]
    %v1828 = vld [vmem:[#allocation6 + $0x90] sm:$0xff]
    %v1829 = vld [vmem:[#allocation6 + $0x98] sm:$0xff]
    %v1830 = vld [vmem:[#allocation6 + $0xa0] sm:$0xff]
    %v1831 = vld [vmem:[#allocation6 + $0xa8] sm:$0xff]
    %v1832 = vld [vmem:[#allocation6 + $0xb0] sm:$0xff]
    %v1833 = vld [vmem:[#allocation6 + $0xb8] sm:$0xff]
    %v1834 = vld [vmem:[#allocation6 + $0xc0] sm:$0xff]
    %v1835 = vld [vmem:[#allocation6 + $0xc8] sm:$0xff]
    %v1836 = vld [vmem:[#allocation6 + $0xd0] sm:$0xff]
    %v1837 = vld [vmem:[#allocation6 + $0xd8] sm:$0xff]
    %v1838 = vld [vmem:[#allocation6 + $0xe0] sm:$0xff]
    %v1839 = vld [vmem:[#allocation6 + $0xe8] sm:$0xff]
    %v1840 = vld [vmem:[#allocation6 + $0xf0] sm:$0xff]
    %v1841 = vld [vmem:[#allocation6 + $0xf8] sm:$0xff]
    %v1842 = vld [vmem:[#allocation6 + $0x100] sm:$0xff]
    %v1843 = vld [vmem:[#allocation6 + $0x108] sm:$0xff]
    %v1844 = vld [vmem:[#allocation6 + $0x110] sm:$0xff]
    %v1845 = vld [vmem:[#allocation6 + $0x118] sm:$0xff]
    %v1846 = vld [vmem:[#allocation6 + $0x120] sm:$0xff]
    %v1847 = vld [vmem:[#allocation6 + $0x128] sm:$0xff]
    %v1848 = vld [vmem:[#allocation6 + $0x130] sm:$0xff]
    %v1849 = vld [vmem:[#allocation6 + $0x138] sm:$0xff]
    %v1850 = vld [vmem:[#allocation6 + $0x140] sm:$0xff]
    %v1851 = vld [vmem:[#allocation6 + $0x148] sm:$0xff]
    %v1852 = vld [vmem:[#allocation6 + $0x150] sm:$0xff]
    %v1853 = vld [vmem:[#allocation6 + $0x158] sm:$0xff]
    %v1854 = vld [vmem:[#allocation6 + $0x160] sm:$0xff]
    %v1855 = vld [vmem:[#allocation6 + $0x168] sm:$0xff]
    %v1856 = vld [vmem:[#allocation6 + $0x170] sm:$0xff]
    %v1857 = vld [vmem:[#allocation6 + $0x178] sm:$0xff]
    %v1858 = vld [vmem:[#allocation6 + $0x180] sm:$0xff]
    %v1859 = vld [vmem:[#allocation6 + $0x188] sm:$0xff]
    %v1860 = vld [vmem:[#allocation6 + $0x190] sm:$0xff]
    %v1861 = vld [vmem:[#allocation6 + $0x198] sm:$0xff]
    %v1862 = vld [vmem:[#allocation6 + $0x1a0] sm:$0xff]
    %v1863 = vld [vmem:[#allocation6 + $0x1a8] sm:$0xff]
    %v1864 = vld [vmem:[#allocation6 + $0x1b0] sm:$0xff]
    %v1865 = vld [vmem:[#allocation6 + $0x1b8] sm:$0xff]
    %v1866 = vld [vmem:[#allocation6 + $0x1c0] sm:$0xff]
    %v1867 = vld [vmem:[#allocation6 + $0x1c8] sm:$0xff]
    %v1868 = vld [vmem:[#allocation6 + $0x1d0] sm:$0xff]
    %v1869 = vld [vmem:[#allocation6 + $0x1d8] sm:$0xff]
    %v1870 = vld [vmem:[#allocation6 + $0x1e0] sm:$0xff]
    %v1871 = vld [vmem:[#allocation6 + $0x1e8] sm:$0xff]
    %v1872 = vld [vmem:[#allocation6 + $0x1f0] sm:$0xff]
    %v1873 = vld [vmem:[#allocation6 + $0x1f8] sm:$0xff]
    %1874 = vmatprep.subr.mxu0 %v1811
    %1875 = vmatpush1.msra.mxu0 %v1810
    %1876 = vmatprep.subr.mxu0 %v1815
    %1877 = vmatpush1.msra.mxu0 %v1814
    %1878 = vmatprep.subr.mxu0 %v1819
    %1879 = vmatpush1.msra.mxu0 %v1818
    %1880 = vmatprep.subr.mxu0 %v1823
    %1881 = vmatpush1.msra.mxu0 %v1822
    %1882 = vmatprep.subr.mxu0 %v1827
    %1883 = vmatpush1.msra.mxu0 %v1826
    %1884 = vmatprep.subr.mxu0 %v1831
    %1885 = vmatpush1.msra.mxu0 %v1830
    %1886 = vmatprep.subr.mxu0 %v1835
    %1887 = vmatpush1.msra.mxu0 %v1834
    %1888 = vmatprep.subr.mxu0 %v1839
    %1889 = vmatpush1.msra.mxu0 %v1838
    %1890 = vmatprep.subr.mxu0 %v1843
    %1891 = vmatpush1.msra.mxu0 %v1842
    %1892 = vmatprep.subr.mxu0 %v1847
    %1893 = vmatpush1.msra.mxu0 %v1846
    %1894 = vmatprep.subr.mxu0 %v1851
    %1895 = vmatpush1.msra.mxu0 %v1850
    %1896 = vmatprep.subr.mxu0 %v1855
    %1897 = vmatpush1.msra.mxu0 %v1854
    %1898 = vmatprep.subr.mxu0 %v1859
    %1899 = vmatpush1.msra.mxu0 %v1858
    %1900 = vmatprep.subr.mxu0 %v1863
    %1901 = vmatpush1.msra.mxu0 %v1862
    %1902 = vmatprep.subr.mxu0 %v1867
    %1903 = vmatpush1.msra.mxu0 %v1866
    %1904 = vmatprep.subr.mxu0 %v1871
    %1905 = vmatpush1.msra.mxu0 %v1870
    %1906 = vmatprep.subr.mxu0 0.0
    %1907 = vmatpush1.msra.mxu0 0.0
    %1908 = vmatprep.subr.mxu0 0.0
    %1909 = vmatpush1.msra.mxu0 0.0
    %1910 = vmatprep.subr.mxu0 0.0
    %1911 = vmatpush1.msra.mxu0 0.0
    %1912 = vmatprep.subr.mxu0 0.0
    %1913 = vmatpush1.msra.mxu0 0.0
    %1914 = vmatprep.subr.mxu0 0.0
    %1915 = vmatpush1.msra.mxu0 0.0
    %1916 = vmatprep.subr.mxu0 0.0
    %1917 = vmatpush1.msra.mxu0 0.0
    %1918 = vmatprep.subr.mxu0 0.0
    %1919 = vmatpush1.msra.mxu0 0.0
    %1920 = vmatprep.subr.mxu0 0.0
    %1921 = vmatpush1.msra.mxu0 0.0
    %1922 = vmatprep.subr.mxu0 0.0
    %1923 = vmatpush1.msra.mxu0 0.0
    %1924 = vmatprep.subr.mxu0 0.0
    %1925 = vmatpush1.msra.mxu0 0.0
    %1926 = vmatprep.subr.mxu0 0.0
    %1927 = vmatpush1.msra.mxu0 0.0
    %1928 = vmatprep.subr.mxu0 0.0
    %1929 = vmatpush1.msra.mxu0 0.0
    %1930 = vmatprep.subr.mxu0 0.0
    %1931 = vmatpush1.msra.mxu0 0.0
    %1932 = vmatprep.subr.mxu0 0.0
    %1933 = vmatpush1.msra.mxu0 0.0
    %1934 = vmatprep.subr.mxu0 0.0
    %1935 = vmatpush1.msra.mxu0 0.0
    %1936 = vmatprep.subr.mxu0 0.0
    %1937 = vmatpush1.msra.mxu0 0.0
    %1938 = vmatprep.mubr.f32.mxu0 0.0
    %1939 = vmatmul.mubr.f32.gmra.mrb[0].mxu0 %v1800
    %v1940 = vpop.f32.mrb[0].mxu0
    %v1941 = vadd.f32 0.0, %v1940
    %v1942 = vpop.f32.mrb[0].mxu0
    %v1943 = vadd.f32 0.0, %v1942
    %1944 = vdwg.mxu0
    %1945 = vmatprep.subr.mxu0 %v1813
    %1946 = vmatpush1.msra.mxu0 %v1812
    %1947 = vmatprep.subr.mxu0 %v1817
    %1948 = vmatpush1.msra.mxu0 %v1816
    %1949 = vmatprep.subr.mxu0 %v1821
    %1950 = vmatpush1.msra.mxu0 %v1820
    %1951 = vmatprep.subr.mxu0 %v1825
    %1952 = vmatpush1.msra.mxu0 %v1824
    %1953 = vmatprep.subr.mxu0 %v1829
    %1954 = vmatpush1.msra.mxu0 %v1828
    %1955 = vmatprep.subr.mxu0 %v1833
    %1956 = vmatpush1.msra.mxu0 %v1832
    %1957 = vmatprep.subr.mxu0 %v1837
    %1958 = vmatpush1.msra.mxu0 %v1836
    %1959 = vmatprep.subr.mxu0 %v1841
    %1960 = vmatpush1.msra.mxu0 %v1840
    %1961 = vmatprep.subr.mxu0 %v1845
    %1962 = vmatpush1.msra.mxu0 %v1844
    %1963 = vmatprep.subr.mxu0 %v1849
    %1964 = vmatpush1.msra.mxu0 %v1848
    %1965 = vmatprep.subr.mxu0 %v1853
    %1966 = vmatpush1.msra.mxu0 %v1852
    %1967 = vmatprep.subr.mxu0 %v1857
    %1968 = vmatpush1.msra.mxu0 %v1856
    %1969 = vmatprep.subr.mxu0 %v1861
    %1970 = vmatpush1.msra.mxu0 %v1860
    %1971 = vmatprep.subr.mxu0 %v1865
    %1972 = vmatpush1.msra.mxu0 %v1864
    %1973 = vmatprep.subr.mxu0 %v1869
    %1974 = vmatpush1.msra.mxu0 %v1868
    %1975 = vmatprep.subr.mxu0 %v1873
    %1976 = vmatpush1.msra.mxu0 %v1872
    %1977 = vmatprep.subr.mxu0 0.0
    %1978 = vmatpush1.msra.mxu0 0.0
    %1979 = vmatprep.subr.mxu0 0.0
    %1980 = vmatpush1.msra.mxu0 0.0
    %1981 = vmatprep.subr.mxu0 0.0
    %1982 = vmatpush1.msra.mxu0 0.0
    %1983 = vmatprep.subr.mxu0 0.0
    %1984 = vmatpush1.msra.mxu0 0.0
    %1985 = vmatprep.subr.mxu0 0.0
    %1986 = vmatpush1.msra.mxu0 0.0
    %1987 = vmatprep.subr.mxu0 0.0
    %1988 = vmatpush1.msra.mxu0 0.0
    %1989 = vmatprep.subr.mxu0 0.0
    %1990 = vmatpush1.msra.mxu0 0.0
    %1991 = vmatprep.subr.mxu0 0.0
    %1992 = vmatpush1.msra.mxu0 0.0
    %1993 = vmatprep.subr.mxu0 0.0
    %1994 = vmatpush1.msra.mxu0 0.0
    %1995 = vmatprep.subr.mxu0 0.0
    %1996 = vmatpush1.msra.mxu0 0.0
    %1997 = vmatprep.subr.mxu0 0.0
    %1998 = vmatpush1.msra.mxu0 0.0
    %1999 = vmatprep.subr.mxu0 0.0
    %2000 = vmatpush1.msra.mxu0 0.0
    %2001 = vmatprep.subr.mxu0 0.0
    %2002 = vmatpush1.msra.mxu0 0.0
    %2003 = vmatprep.subr.mxu0 0.0
    %2004 = vmatpush1.msra.mxu0 0.0
    %2005 = vmatprep.subr.mxu0 0.0
    %2006 = vmatpush1.msra.mxu0 0.0
    %2007 = vmatprep.subr.mxu0 0.0
    %2008 = vmatpush1.msra.mxu0 0.0
    %2009 = vmatprep.mubr.f32.mxu0 0.0
    %2010 = vmatmul.mubr.f32.gmra.mrb[0].mxu0 %v1800
    %v2011 = vpop.f32.mrb[0].mxu0
    %v2012 = vadd.f32 0.0, %v2011
    %v2013 = vpop.f32.mrb[0].mxu0
    %v2014 = vadd.f32 0.0, %v2013
    %2015 = vdwg.mxu0
    %v2016 = vadd.f32 %v1806, %v1941
    %v2017 = vadd.f32 %v1807, %v1943
    %v2018 = vadd.f32 %v1808, %v2012
    %v2019 = vadd.f32 %v1809, %v2014
    %v2020 = vtanh.pop %v2016
    %v2021 = vtanh.pop %v2017
    %v2022 = vtanh.pop %v2018
    %v2023 = vtanh.pop %v2019
    %v2024 = vadd.f32 %v2020, 1.0
    %v2025 = vmul.f32 %v2024, 0.5
    %v2026 = vadd.f32 %v2021, 1.0
    %v2027 = vmul.f32 %v2026, 0.5
    %v2028 = vadd.f32 %v2022, 1.0
    %v2029 = vmul.f32 %v2028, 0.5
    %v2030 = vmul.f32 %v2027, %v1798
    %v2031 = vmul.f32 %v2025, %v2023
    %v2032 = vadd.f32 %v2030, %v2031
    %v2033 = vtanh.pop %v2032
    %v2034 = vmul.f32 %v2029, %v2033
    %s2035 = scalar_lea.vmem [#allocation3], 48
    %2036 = vst [vmem:[%s2035] sm:$0xff] %v2034
    %s2037 = smul.u32 7, 4
    %s2038 = smul.addr %s2037, 8
    %s2039 = scalar_lea.vmem [#allocation2], %s2038
    %v2040 = vld [vmem:[%s2039] sm:$0xff]
    %v2041 = vld [vmem:[%s2039 + $0x8] sm:$0xff]
    %v2042 = vld [vmem:[%s2039 + $0x10] sm:$0xff]
    %v2043 = vld [vmem:[%s2039 + $0x18] sm:$0xff]
    %v2044 = vld [vmem:[#allocation6] sm:$0xff]
    %v2045 = vld [vmem:[#allocation6 + $0x8] sm:$0xff]
    %v2046 = vld [vmem:[#allocation6 + $0x10] sm:$0xff]
    %v2047 = vld [vmem:[#allocation6 + $0x18] sm:$0xff]
    %v2048 = vld [vmem:[#allocation6 + $0x20] sm:$0xff]
    %v2049 = vld [vmem:[#allocation6 + $0x28] sm:$0xff]
    %v2050 = vld [vmem:[#allocation6 + $0x30] sm:$0xff]
    %v2051 = vld [vmem:[#allocation6 + $0x38] sm:$0xff]
    %v2052 = vld [vmem:[#allocation6 + $0x40] sm:$0xff]
    %v2053 = vld [vmem:[#allocation6 + $0x48] sm:$0xff]
    %v2054 = vld [vmem:[#allocation6 + $0x50] sm:$0xff]
    %v2055 = vld [vmem:[#allocation6 + $0x58] sm:$0xff]
    %v2056 = vld [vmem:[#allocation6 + $0x60] sm:$0xff]
    %v2057 = vld [vmem:[#allocation6 + $0x68] sm:$0xff]
    %v2058 = vld [vmem:[#allocation6 + $0x70] sm:$0xff]
    %v2059 = vld [vmem:[#allocation6 + $0x78] sm:$0xff]
    %v2060 = vld [vmem:[#allocation6 + $0x80] sm:$0xff]
    %v2061 = vld [vmem:[#allocation6 + $0x88] sm:$0xff]
    %v2062 = vld [vmem:[#allocation6 + $0x90] sm:$0xff]
    %v2063 = vld [vmem:[#allocation6 + $0x98] sm:$0xff]
    %v2064 = vld [vmem:[#allocation6 + $0xa0] sm:$0xff]
    %v2065 = vld [vmem:[#allocation6 + $0xa8] sm:$0xff]
    %v2066 = vld [vmem:[#allocation6 + $0xb0] sm:$0xff]
    %v2067 = vld [vmem:[#allocation6 + $0xb8] sm:$0xff]
    %v2068 = vld [vmem:[#allocation6 + $0xc0] sm:$0xff]
    %v2069 = vld [vmem:[#allocation6 + $0xc8] sm:$0xff]
    %v2070 = vld [vmem:[#allocation6 + $0xd0] sm:$0xff]
    %v2071 = vld [vmem:[#allocation6 + $0xd8] sm:$0xff]
    %v2072 = vld [vmem:[#allocation6 + $0xe0] sm:$0xff]
    %v2073 = vld [vmem:[#allocation6 + $0xe8] sm:$0xff]
    %v2074 = vld [vmem:[#allocation6 + $0xf0] sm:$0xff]
    %v2075 = vld [vmem:[#allocation6 + $0xf8] sm:$0xff]
    %v2076 = vld [vmem:[#allocation6 + $0x100] sm:$0xff]
    %v2077 = vld [vmem:[#allocation6 + $0x108] sm:$0xff]
    %v2078 = vld [vmem:[#allocation6 + $0x110] sm:$0xff]
    %v2079 = vld [vmem:[#allocation6 + $0x118] sm:$0xff]
    %v2080 = vld [vmem:[#allocation6 + $0x120] sm:$0xff]
    %v2081 = vld [vmem:[#allocation6 + $0x128] sm:$0xff]
    %v2082 = vld [vmem:[#allocation6 + $0x130] sm:$0xff]
    %v2083 = vld [vmem:[#allocation6 + $0x138] sm:$0xff]
    %v2084 = vld [vmem:[#allocation6 + $0x140] sm:$0xff]
    %v2085 = vld [vmem:[#allocation6 + $0x148] sm:$0xff]
    %v2086 = vld [vmem:[#allocation6 + $0x150] sm:$0xff]
    %v2087 = vld [vmem:[#allocation6 + $0x158] sm:$0xff]
    %v2088 = vld [vmem:[#allocation6 + $0x160] sm:$0xff]
    %v2089 = vld [vmem:[#allocation6 + $0x168] sm:$0xff]
    %v2090 = vld [vmem:[#allocation6 + $0x170] sm:$0xff]
    %v2091 = vld [vmem:[#allocation6 + $0x178] sm:$0xff]
    %v2092 = vld [vmem:[#allocation6 + $0x180] sm:$0xff]
    %v2093 = vld [vmem:[#allocation6 + $0x188] sm:$0xff]
    %v2094 = vld [vmem:[#allocation6 + $0x190] sm:$0xff]
    %v2095 = vld [vmem:[#allocation6 + $0x198] sm:$0xff]
    %v2096 = vld [vmem:[#allocation6 + $0x1a0] sm:$0xff]
    %v2097 = vld [vmem:[#allocation6 + $0x1a8] sm:$0xff]
    %v2098 = vld [vmem:[#allocation6 + $0x1b0] sm:$0xff]
    %v2099 = vld [vmem:[#allocation6 + $0x1b8] sm:$0xff]
    %v2100 = vld [vmem:[#allocation6 + $0x1c0] sm:$0xff]
    %v2101 = vld [vmem:[#allocation6 + $0x1c8] sm:$0xff]
    %v2102 = vld [vmem:[#allocation6 + $0x1d0] sm:$0xff]
    %v2103 = vld [vmem:[#allocation6 + $0x1d8] sm:$0xff]
    %v2104 = vld [vmem:[#allocation6 + $0x1e0] sm:$0xff]
    %v2105 = vld [vmem:[#allocation6 + $0x1e8] sm:$0xff]
    %v2106 = vld [vmem:[#allocation6 + $0x1f0] sm:$0xff]
    %v2107 = vld [vmem:[#allocation6 + $0x1f8] sm:$0xff]
    %2108 = vmatprep.subr.mxu0 %v2045
    %2109 = vmatpush1.msra.mxu0 %v2044
    %2110 = vmatprep.subr.mxu0 %v2049
    %2111 = vmatpush1.msra.mxu0 %v2048
    %2112 = vmatprep.subr.mxu0 %v2053
    %2113 = vmatpush1.msra.mxu0 %v2052
    %2114 = vmatprep.subr.mxu0 %v2057
    %2115 = vmatpush1.msra.mxu0 %v2056
    %2116 = vmatprep.subr.mxu0 %v2061
    %2117 = vmatpush1.msra.mxu0 %v2060
    %2118 = vmatprep.subr.mxu0 %v2065
    %2119 = vmatpush1.msra.mxu0 %v2064
    %2120 = vmatprep.subr.mxu0 %v2069
    %2121 = vmatpush1.msra.mxu0 %v2068
    %2122 = vmatprep.subr.mxu0 %v2073
    %2123 = vmatpush1.msra.mxu0 %v2072
    %2124 = vmatprep.subr.mxu0 %v2077
    %2125 = vmatpush1.msra.mxu0 %v2076
    %2126 = vmatprep.subr.mxu0 %v2081
    %2127 = vmatpush1.msra.mxu0 %v2080
    %2128 = vmatprep.subr.mxu0 %v2085
    %2129 = vmatpush1.msra.mxu0 %v2084
    %2130 = vmatprep.subr.mxu0 %v2089
    %2131 = vmatpush1.msra.mxu0 %v2088
    %2132 = vmatprep.subr.mxu0 %v2093
    %2133 = vmatpush1.msra.mxu0 %v2092
    %2134 = vmatprep.subr.mxu0 %v2097
    %2135 = vmatpush1.msra.mxu0 %v2096
    %2136 = vmatprep.subr.mxu0 %v2101
    %2137 = vmatpush1.msra.mxu0 %v2100
    %2138 = vmatprep.subr.mxu0 %v2105
    %2139 = vmatpush1.msra.mxu0 %v2104
    %2140 = vmatprep.subr.mxu0 0.0
    %2141 = vmatpush1.msra.mxu0 0.0
    %2142 = vmatprep.subr.mxu0 0.0
    %2143 = vmatpush1.msra.mxu0 0.0
    %2144 = vmatprep.subr.mxu0 0.0
    %2145 = vmatpush1.msra.mxu0 0.0
    %2146 = vmatprep.subr.mxu0 0.0
    %2147 = vmatpush1.msra.mxu0 0.0
    %2148 = vmatprep.subr.mxu0 0.0
    %2149 = vmatpush1.msra.mxu0 0.0
    %2150 = vmatprep.subr.mxu0 0.0
    %2151 = vmatpush1.msra.mxu0 0.0
    %2152 = vmatprep.subr.mxu0 0.0
    %2153 = vmatpush1.msra.mxu0 0.0
    %2154 = vmatprep.subr.mxu0 0.0
    %2155 = vmatpush1.msra.mxu0 0.0
    %2156 = vmatprep.subr.mxu0 0.0
    %2157 = vmatpush1.msra.mxu0 0.0
    %2158 = vmatprep.subr.mxu0 0.0
    %2159 = vmatpush1.msra.mxu0 0.0
    %2160 = vmatprep.subr.mxu0 0.0
    %2161 = vmatpush1.msra.mxu0 0.0
    %2162 = vmatprep.subr.mxu0 0.0
    %2163 = vmatpush1.msra.mxu0 0.0
    %2164 = vmatprep.subr.mxu0 0.0
    %2165 = vmatpush1.msra.mxu0 0.0
    %2166 = vmatprep.subr.mxu0 0.0
    %2167 = vmatpush1.msra.mxu0 0.0
    %2168 = vmatprep.subr.mxu0 0.0
    %2169 = vmatpush1.msra.mxu0 0.0
    %2170 = vmatprep.subr.mxu0 0.0
    %2171 = vmatpush1.msra.mxu0 0.0
    %2172 = vmatprep.mubr.f32.mxu0 0.0
    %2173 = vmatmul.mubr.f32.gmra.mrb[0].mxu0 %v2034
    %v2174 = vpop.f32.mrb[0].mxu0
    %v2175 = vadd.f32 0.0, %v2174
    %v2176 = vpop.f32.mrb[0].mxu0
    %v2177 = vadd.f32 0.0, %v2176
    %2178 = vdwg.mxu0
    %2179 = vmatprep.subr.mxu0 %v2047
    %2180 = vmatpush1.msra.mxu0 %v2046
    %2181 = vmatprep.subr.mxu0 %v2051
    %2182 = vmatpush1.msra.mxu0 %v2050
    %2183 = vmatprep.subr.mxu0 %v2055
    %2184 = vmatpush1.msra.mxu0 %v2054
    %2185 = vmatprep.subr.mxu0 %v2059
    %2186 = vmatpush1.msra.mxu0 %v2058
    %2187 = vmatprep.subr.mxu0 %v2063
    %2188 = vmatpush1.msra.mxu0 %v2062
    %2189 = vmatprep.subr.mxu0 %v2067
    %2190 = vmatpush1.msra.mxu0 %v2066
    %2191 = vmatprep.subr.mxu0 %v2071
    %2192 = vmatpush1.msra.mxu0 %v2070
    %2193 = vmatprep.subr.mxu0 %v2075
    %2194 = vmatpush1.msra.mxu0 %v2074
    %2195 = vmatprep.subr.mxu0 %v2079
    %2196 = vmatpush1.msra.mxu0 %v2078
    %2197 = vmatprep.subr.mxu0 %v2083
    %2198 = vmatpush1.msra.mxu0 %v2082
    %2199 = vmatprep.subr.mxu0 %v2087
    %2200 = vmatpush1.msra.mxu0 %v2086
    %2201 = vmatprep.subr.mxu0 %v2091
    %2202 = vmatpush1.msra.mxu0 %v2090
    %2203 = vmatprep.subr.mxu0 %v2095
    %2204 = vmatpush1.msra.mxu0 %v2094
    %2205 = vmatprep.subr.mxu0 %v2099
    %2206 = vmatpush1.msra.mxu0 %v2098
    %2207 = vmatprep.subr.mxu0 %v2103
    %2208 = vmatpush1.msra.mxu0 %v2102
    %2209 = vmatprep.subr.mxu0 %v2107
    %2210 = vmatpush1.msra.mxu0 %v2106
    %2211 = vmatprep.subr.mxu0 0.0
    %2212 = vmatpush1.msra.mxu0 0.0
    %2213 = vmatprep.subr.mxu0 0.0
    %2214 = vmatpush1.msra.mxu0 0.0
    %2215 = vmatprep.subr.mxu0 0.0
    %2216 = vmatpush1.msra.mxu0 0.0
    %2217 = vmatprep.subr.mxu0 0.0
    %2218 = vmatpush1.msra.mxu0 0.0
    %2219 = vmatprep.subr.mxu0 0.0
    %2220 = vmatpush1.msra.mxu0 0.0
    %2221 = vmatprep.subr.mxu0 0.0
    %2222 = vmatpush1.msra.mxu0 0.0
    %2223 = vmatprep.subr.mxu0 0.0
    %2224 = vmatpush1.msra.mxu0 0.0
    %2225 = vmatprep.subr.mxu0 0.0
    %2226 = vmatpush1.msra.mxu0 0.0
    %2227 = vmatprep.subr.mxu0 0.0
    %2228 = vmatpush1.msra.mxu0 0.0
    %2229 = vmatprep.subr.mxu0 0.0
    %2230 = vmatpush1.msra.mxu0 0.0
    %2231 = vmatprep.subr.mxu0 0.0
    %2232 = vmatpush1.msra.mxu0 0.0
    %2233 = vmatprep.subr.mxu0 0.0
    %2234 = vmatpush1.msra.mxu0 0.0
    %2235 = vmatprep.subr.mxu0 0.0
    %2236 = vmatpush1.msra.mxu0 0.0
    %2237 = vmatprep.subr.mxu0 0.0
    %2238 = vmatpush1.msra.mxu0 0.0
    %2239 = vmatprep.subr.mxu0 0.0
    %2240 = vmatpush1.msra.mxu0 0.0
    %2241 = vmatprep.subr.mxu0 0.0
    %2242 = vmatpush1.msra.mxu0 0.0
    %2243 = vmatprep.mubr.f32.mxu0 0.0
    %2244 = vmatmul.mubr.f32.gmra.mrb[0].mxu0 %v2034
    %v2245 = vpop.f32.mrb[0].mxu0
    %v2246 = vadd.f32 0.0, %v2245
    %v2247 = vpop.f32.mrb[0].mxu0
    %v2248 = vadd.f32 0.0, %v2247
    %2249 = vdwg.mxu0
    %v2250 = vadd.f32 %v2040, %v2175
    %v2251 = vadd.f32 %v2041, %v2177
    %v2252 = vadd.f32 %v2042, %v2246
    %v2253 = vadd.f32 %v2043, %v2248
    %v2254 = vtanh.pop %v2250
    %v2255 = vtanh.pop %v2251
    %v2256 = vtanh.pop %v2252
    %v2257 = vtanh.pop %v2253
    %v2258 = vadd.f32 %v2254, 1.0
    %v2259 = vmul.f32 %v2258, 0.5
    %v2260 = vadd.f32 %v2255, 1.0
    %v2261 = vmul.f32 %v2260, 0.5
    %v2262 = vadd.f32 %v2256, 1.0
    %v2263 = vmul.f32 %v2262, 0.5
    %v2264 = vmul.f32 %v2261, %v2032
    %v2265 = vmul.f32 %v2259, %v2257
    %v2266 = vadd.f32 %v2264, %v2265
    %v2267 = vtanh.pop %v2266
    %v2268 = vmul.f32 %v2263, %v2267
    %s2269 = scalar_lea.vmem [#allocation3], 56
    %2270 = vst [vmem:[%s2269] sm:$0xff] %v2268
    %2271 = vst [vmem:[#allocation4] sm:$0xff] %v2268
    %2272 = vst [vmem:[#allocation5] sm:$0xff] %v2266
    // Predicated region
    $region46: #{tpu_custom_call.1} parent=1 // pred_check
      %p2273 = pneg %p62
    $region47: #{tpu_custom_call.1} parent=1 // pred_check_branch
      %2275 = sbr.rel (%p2273) target = $region49
    $region48: #{tpu_custom_call.1} parent=1 // pred_region
      %2276 = vst [vmem:[#allocation12] sm:$0xff] %v2268
      %2277 = vst [vmem:[#allocation14] sm:$0xff] %v2266
    $region49: #{tpu_custom_call.1} parent=1 // pred_fallthru
      _
    %v2278 = vld [vmem:[#allocation3] sm:$0xff]
    %v2279 = vld [vmem:[#allocation3 + $0x8] sm:$0xff]
    %v2280 = vld [vmem:[#allocation3 + $0x10] sm:$0xff]
    %v2281 = vld [vmem:[#allocation3 + $0x18] sm:$0xff]
    %v2282 = vld [vmem:[#allocation3 + $0x20] sm:$0xff]
    %v2283 = vld [vmem:[#allocation3 + $0x28] sm:$0xff]
    %v2284 = vld [vmem:[#allocation3 + $0x30] sm:$0xff]
    %v2285 = vld [vmem:[#allocation3 + $0x38] sm:$0xff]
    %v2286 = vld [vmem:[#allocation9] sm:$0xff]
    %v2287 = vld [vmem:[#allocation9 + $0x8] sm:$0xff]
    %v2288 = vld [vmem:[#allocation9 + $0x10] sm:$0xff]
    %v2289 = vld [vmem:[#allocation9 + $0x18] sm:$0xff]
    %v2290 = vld [vmem:[#allocation9 + $0x20] sm:$0xff]
    %v2291 = vld [vmem:[#allocation9 + $0x28] sm:$0xff]
    %v2292 = vld [vmem:[#allocation9 + $0x30] sm:$0xff]
    %v2293 = vld [vmem:[#allocation9 + $0x38] sm:$0xff]
    %v2294 = vld [vmem:[#allocation9 + $0x40] sm:$0xff]
    %v2295 = vld [vmem:[#allocation9 + $0x48] sm:$0xff]
    %v2296 = vld [vmem:[#allocation9 + $0x50] sm:$0xff]
    %v2297 = vld [vmem:[#allocation9 + $0x58] sm:$0xff]
    %v2298 = vld [vmem:[#allocation9 + $0x60] sm:$0xff]
    %v2299 = vld [vmem:[#allocation9 + $0x68] sm:$0xff]
    %v2300 = vld [vmem:[#allocation9 + $0x70] sm:$0xff]
    %v2301 = vld [vmem:[#allocation9 + $0x78] sm:$0xff]
    %v2302 = vld [vmem:[%s5] sm:$0x1]
    %v2304 = vlaneseq
    %v2305 = vshrl.u32 %v2304, 7
    %v2306 = vsub.s32 0, %v2305
    %v2307 = vrot.slane %v2302, %v2306
    %2309 = vmatprep.subr.mxu0 0.0
    %2310 = vmatpush1.msra.mxu0 %v2286
    %2311 = vmatprep.subr.mxu0 0.0
    %2312 = vmatpush1.msra.mxu0 %v2287
    %2313 = vmatprep.subr.mxu0 0.0
    %2314 = vmatpush1.msra.mxu0 %v2288
    %2315 = vmatprep.subr.mxu0 0.0
    %2316 = vmatpush1.msra.mxu0 %v2289
    %2317 = vmatprep.subr.mxu0 0.0
    %2318 = vmatpush1.msra.mxu0 %v2290
    %2319 = vmatprep.subr.mxu0 0.0
    %2320 = vmatpush1.msra.mxu0 %v2291
    %2321 = vmatprep.subr.mxu0 0.0
    %2322 = vmatpush1.msra.mxu0 %v2292
    %2323 = vmatprep.subr.mxu0 0.0
    %2324 = vmatpush1.msra.mxu0 %v2293
    %2325 = vmatprep.subr.mxu0 0.0
    %2326 = vmatpush1.msra.mxu0 %v2294
    %2327 = vmatprep.subr.mxu0 0.0
    %2328 = vmatpush1.msra.mxu0 %v2295
    %2329 = vmatprep.subr.mxu0 0.0
    %2330 = vmatpush1.msra.mxu0 %v2296
    %2331 = vmatprep.subr.mxu0 0.0
    %2332 = vmatpush1.msra.mxu0 %v2297
    %2333 = vmatprep.subr.mxu0 0.0
    %2334 = vmatpush1.msra.mxu0 %v2298
    %2335 = vmatprep.subr.mxu0 0.0
    %2336 = vmatpush1.msra.mxu0 %v2299
    %2337 = vmatprep.subr.mxu0 0.0
    %2338 = vmatpush1.msra.mxu0 %v2300
    %2339 = vmatprep.subr.mxu0 0.0
    %2340 = vmatpush1.msra.mxu0 %v2301
    %2341 = vmatprep.subr.mxu0 0.0
    %2342 = vmatpush1.msra.mxu0 0.0
    %2343 = vmatprep.subr.mxu0 0.0
    %2344 = vmatpush1.msra.mxu0 0.0
    %2345 = vmatprep.subr.mxu0 0.0
    %2346 = vmatpush1.msra.mxu0 0.0
    %2347 = vmatprep.subr.mxu0 0.0
    %2348 = vmatpush1.msra.mxu0 0.0
    %2349 = vmatprep.subr.mxu0 0.0
    %2350 = vmatpush1.msra.mxu0 0.0
    %2351 = vmatprep.subr.mxu0 0.0
    %2352 = vmatpush1.msra.mxu0 0.0
    %2353 = vmatprep.subr.mxu0 0.0
    %2354 = vmatpush1.msra.mxu0 0.0
    %2355 = vmatprep.subr.mxu0 0.0
    %2356 = vmatpush1.msra.mxu0 0.0
    %2357 = vmatprep.subr.mxu0 0.0
    %2358 = vmatpush1.msra.mxu0 0.0
    %2359 = vmatprep.subr.mxu0 0.0
    %2360 = vmatpush1.msra.mxu0 0.0
    %2361 = vmatprep.subr.mxu0 0.0
    %2362 = vmatpush1.msra.mxu0 0.0
    %2363 = vmatprep.subr.mxu0 0.0
    %2364 = vmatpush1.msra.mxu0 0.0
    %2365 = vmatprep.subr.mxu0 0.0
    %2366 = vmatpush1.msra.mxu0 0.0
    %2367 = vmatprep.subr.mxu0 0.0
    %2368 = vmatpush1.msra.mxu0 0.0
    %2369 = vmatprep.subr.mxu0 0.0
    %2370 = vmatpush1.msra.mxu0 0.0
    %2371 = vmatprep.subr.mxu0 0.0
    %2372 = vmatpush1.msra.mxu0 0.0
    %2373 = vmatprep.mubr.f32.mxu0 0.0
    %2374 = vmatmul.mubr.f32.gmra.mrb[0].mxu0 %v2278
    %v2375 = vpop.f32.mrb[0].mxu0
    %v2376 = vadd.f32 %v2307, %v2375
    %v2377 = vpop.f32.mrb[0].mxu0
    %2378 = vmatprep.mubr.f32.mxu0 0.0
    %2379 = vmatmul.mubr.f32.gmra.mrb[0].mxu0 %v2279
    %v2380 = vpop.f32.mrb[0].mxu0
    %v2381 = vadd.f32 %v2307, %v2380
    %v2382 = vpop.f32.mrb[0].mxu0
    %2383 = vmatprep.mubr.f32.mxu0 0.0
    %2384 = vmatmul.mubr.f32.gmra.mrb[0].mxu0 %v2280
    %v2385 = vpop.f32.mrb[0].mxu0
    %v2386 = vadd.f32 %v2307, %v2385
    %v2387 = vpop.f32.mrb[0].mxu0
    %2388 = vmatprep.mubr.f32.mxu0 0.0
    %2389 = vmatmul.mubr.f32.gmra.mrb[0].mxu0 %v2281
    %v2390 = vpop.f32.mrb[0].mxu0
    %v2391 = vadd.f32 %v2307, %v2390
    %v2392 = vpop.f32.mrb[0].mxu0
    %2393 = vmatprep.mubr.f32.mxu0 0.0
    %2394 = vmatmul.mubr.f32.gmra.mrb[0].mxu0 %v2282
    %v2395 = vpop.f32.mrb[0].mxu0
    %v2396 = vadd.f32 %v2307, %v2395
    %v2397 = vpop.f32.mrb[0].mxu0
    %2398 = vmatprep.mubr.f32.mxu0 0.0
    %2399 = vmatmul.mubr.f32.gmra.mrb[0].mxu0 %v2283
    %v2400 = vpop.f32.mrb[0].mxu0
    %v2401 = vadd.f32 %v2307, %v2400
    %v2402 = vpop.f32.mrb[0].mxu0
    %2403 = vmatprep.mubr.f32.mxu0 0.0
    %2404 = vmatmul.mubr.f32.gmra.mrb[0].mxu0 %v2284
    %v2405 = vpop.f32.mrb[0].mxu0
    %v2406 = vadd.f32 %v2307, %v2405
    %v2407 = vpop.f32.mrb[0].mxu0
    %2408 = vmatprep.mubr.f32.mxu0 0.0
    %2409 = vmatmul.mubr.f32.gmra.mrb[0].mxu0 %v2285
    %v2410 = vpop.f32.mrb[0].mxu0
    %v2411 = vadd.f32 %v2307, %v2410
    %v2412 = vpop.f32.mrb[0].mxu0
    %2413 = vdwg.mxu0
    %v2414 = vtanh.pop %v2376
    %v2415 = vtanh.pop %v2381
    %v2416 = vtanh.pop %v2386
    %v2417 = vtanh.pop %v2391
    %v2418 = vtanh.pop %v2396
    %v2419 = vtanh.pop %v2401
    %v2420 = vtanh.pop %v2406
    %v2421 = vtanh.pop %v2411
    %v2422 = vmul.f32 %v2414, 2.0
    %v2423 = vmul.f32 %v2415, 2.0
    %v2424 = vmul.f32 %v2416, 2.0
    %v2425 = vmul.f32 %v2417, 2.0
    %v2426 = vmul.f32 %v2418, 2.0
    %v2427 = vmul.f32 %v2419, 2.0
    %v2428 = vmul.f32 %v2420, 2.0
    %v2429 = vmul.f32 %v2421, 2.0
    %2430 = vst [vmem:[#allocation11] sm:$0xff] %v2422
    %2431 = vst [vmem:[#allocation11 + $0x8] sm:$0xff] %v2423
    %2432 = vst [vmem:[#allocation11 + $0x10] sm:$0xff] %v2424
    %2433 = vst [vmem:[#allocation11 + $0x18] sm:$0xff] %v2425
    %2434 = vst [vmem:[#allocation11 + $0x20] sm:$0xff] %v2426
    %2435 = vst [vmem:[#allocation11 + $0x28] sm:$0xff] %v2427
    %2436 = vst [vmem:[#allocation11 + $0x30] sm:$0xff] %v2428
    %2437 = vst [vmem:[#allocation11 + $0x38] sm:$0xff] %v2429
    // Predicated region
    $region50: #{tpu_custom_call.1} parent=1 // pred_check
      _
    $region51: #{tpu_custom_call.1} parent=1 // pred_check_branch
      %2439 = sbr.rel (0) target = $region53
    $region52: #{tpu_custom_call.1} parent=1 // pred_region
      %s2441 = ssub.s32 1024, 1024
      %2442 = vsyncadd [#allocation8], %s2441
      %s2443 = sshll.u32 [#allocation11], 4
      %s2444 = int_to_ptr.vmem [resolvable:$true] %s2443
      %2449 = dma.vmem_to_hbm [thread:$0]  %s2444, 1024, %s8, [#allocation8], 128, 128, 8
    $region53: #{tpu_custom_call.1} parent=1 // pred_fallthru
      _
    // Predicated region
    $region54: #{tpu_custom_call.1} parent=1 // pred_check
      _
    $region55: #{tpu_custom_call.1} parent=1 // pred_check_branch
      %2451 = sbr.rel (0) target = $region57
    $region56: #{tpu_custom_call.1} parent=1 // pred_region
      %s2453 = ssub.s32 128, 128
      %2454 = vsyncadd [#allocation13], %s2453
      %s2456 = sshll.u32 [#allocation12], 4
      %s2457 = int_to_ptr.vmem [resolvable:$true] %s2456
      %2459 = dma.vmem_to_hbm [thread:$0]  %s2457, 128, %s9, [#allocation13]
    $region57: #{tpu_custom_call.1} parent=1 // pred_fallthru
      _
    // Predicated region
    $region58: #{tpu_custom_call.1} parent=1 // pred_check
      _
    $region59: #{tpu_custom_call.1} parent=1 // pred_check_branch
      %2461 = sbr.rel (0) target = $region61
    $region60: #{tpu_custom_call.1} parent=1 // pred_region
      %s2463 = ssub.s32 128, 128
      %2464 = vsyncadd [#allocation13], %s2463
      %s2466 = sshll.u32 [#allocation14], 4
      %s2467 = int_to_ptr.vmem [resolvable:$true] %s2466
      %2469 = dma.vmem_to_hbm [thread:$0]  %s2467, 128, %s10, [#allocation13]
    $region61: #{tpu_custom_call.1} parent=1 // pred_fallthru
      _
    // Predicated region
    $region62: #{tpu_custom_call.1} parent=1 // pred_check
      _
    $region63: #{tpu_custom_call.1} parent=1 // pred_check_branch
      %2471 = sbr.rel (0) target = $region65
    $region64: #{tpu_custom_call.1} parent=1 // pred_region
      %2472 = dma.done [#allocation8], 1024
    $region65: #{tpu_custom_call.1} parent=1 // pred_fallthru
      _
    // Predicated region
    $region66: #{tpu_custom_call.1} parent=1 // pred_check
      _
    $region67: #{tpu_custom_call.1} parent=1 // pred_check_branch
      %2474 = sbr.rel (0) target = $region69
    $region68: #{tpu_custom_call.1} parent=1 // pred_region
      %2475 = dma.done [#allocation13], 128
    $region69: #{tpu_custom_call.1} parent=1 // pred_fallthru
      _
    // Predicated region
    $region70: #{tpu_custom_call.1} parent=1 // pred_check
      _
    $region71: #{tpu_custom_call.1} parent=1 // pred_check_branch
      %2477 = sbr.rel (0) target = $region73
    $region72: #{tpu_custom_call.1} parent=1 // pred_region
      %2478 = dma.done [#allocation13], 128
    $region73: #{tpu_custom_call.1} parent=1 // pred_fallthru
      _
    %2479 = vsyncpa [#allocation7], 1
    %2480 = vsyncpa [#allocation10], 1
    %2481 = vsyncpa [#allocation8], 1
    %2482 = vsyncpa [#allocation13], 1

</llo_original>
